<compile_context>
chip_gen: v5e
topology: v5e:2x2
jax: 0.10.0
libtpu: 0.0.40
codegen_flags: <defaults>
</compile_context>

<pallas_src>
import math

import jax
import jax.numpy as jnp
import numpy as np
from jax.experimental import pallas as pl
from jax.experimental.pallas import tpu as pltpu

M = 121          # H*W, must equal conv1 in_channels
MID = 11         # conv1 out_channels / conv2 in_channels
BN_EPS = 1e-5
NORM_EPS = 1e-12
TEMP_INV = 40.0  # 1 / 0.025
BN_SCALE = 1.0 / math.sqrt(1.0 + BN_EPS)


def cam_kernel(f1_ref, f1t_ref, f2_ref, f2t_ref, w1_ref, b1_ref, w2t_ref, b2_ref,
               out1_ref, out2_ref):
    # f1_ref : (C, M)       f1[i], channel-major (used for the output re-weight)
    # f1t_ref: (M, C)       f1[i] transposed (channels on lanes, for the matmul)
    # f2_ref : (N2, C, M)   all of f2
    # f2t_ref: (N2, M, C)   all of f2, transposed per image
    # w1_ref : (MID, M)     conv1 weight, lane-dense
    # b1_ref : (1, MID)
    # w2t_ref: (MID, M)     conv2 weight, transposed (lane-dense)
    # b2_ref : (1, M)
    # out1_ref / out2_ref : (N2, 1, C, M)
    f1 = f1_ref[...]
    f1t = f1t_ref[...]
    f2 = f2_ref[...]
    f2t = f2t_ref[...]
    w1 = w1_ref[...]
    b1 = b1_ref[...]
    w2t = w2t_ref[...]
    b2 = b2_ref[...]

    n2 = f2.shape[0]
    c = f1.shape[0]
    m = f1.shape[1]

    # F.normalize(p=2, dim=channel): x / max(||x||_2, 1e-12); channel is the
    # last (lane) axis in the transposed layout.
    f1n = f1t / jnp.maximum(
        jnp.sqrt(jnp.sum(f1t * f1t, axis=-1, keepdims=True)), NORM_EPS)    # (M, C)
    f2n = f2t / jnp.maximum(
        jnp.sqrt(jnp.sum(f2t * f2t, axis=-1, keepdims=True)), NORM_EPS)    # (N2, M, C)

    # a[j, p, q] = sum_c f1n[p, c] * f2n[j, q, c]  — all n2 cosine-similarity
    # maps in one batched MXU matmul (contract over the last axis of both).
    f1nb = jnp.broadcast_to(f1n[None, :, :], (n2, m, c))
    a = jnp.einsum('jpc,jqc->jpq', f1nb, f2n,
                   preferred_element_type=jnp.float32)                     # (N2, M, M)

    def attention(amean, reduce_axis):
        # amean: (N2, M) mean of the similarity map over the "other" axis.
        # conv1 (1x1) + eval-mode BN + ReLU, then conv2 (1x1).
        t = jax.lax.dot_general(amean, w1, (((1,), (1,)), ((), ())),
                                preferred_element_type=jnp.float32) + b1    # (N2, MID)
        t = jnp.maximum(t * BN_SCALE, 0.0)
        s = jnp.dot(t, w2t, preferred_element_type=jnp.float32) + b2        # (N2, M)
        if reduce_axis == 2:
            # v[j, p] = mean_q a[j, p, q] * s[j, q]
            v = jnp.sum(a * s[:, None, :], axis=2)
        else:
            # v[j, p] = mean_r a[j, r, p] * s[j, r]   (a2 = a.T branch)
            v = jnp.sum(a * s[:, :, None], axis=1)
        v = v * (TEMP_INV / m)
        v = v - jnp.max(v, axis=-1, keepdims=True)
        e = jnp.exp(v)
        return e / jnp.sum(e, axis=-1, keepdims=True) + 1.0                 # (N2, M)

    # Branch 1: attention over a1 = a.
    att1 = attention(jnp.mean(a, axis=1), reduce_axis=2)
    # Branch 2: attention over a2 = a1.T — no transpose, just swapped reductions.
    att2 = attention(jnp.mean(a, axis=2), reduce_axis=1)

    out1 = f1[None, :, :] * att1[:, None, :]    # (N2, C, M)
    out2 = f2 * att2[:, None, :]                # (N2, C, M)
    out1_ref[...] = out1[:, None, :, :]
    out2_ref[...] = out2[:, None, :, :]


def cam_forward(f1, f2, w1, b1, w2t, b2):
    n1, c, h, w = f1.shape
    n2 = f2.shape[0]
    m = h * w
    assert m == M, "CAM requires H*W == 121 (conv1 has 121 input channels)"

    f1r = f1.reshape(n1, c, m).astype(jnp.float32)
    f2r = f2.reshape(n2, c, m).astype(jnp.float32)
    # Tiny host-side transposes of the INPUTS (not the big outputs) so the
    # kernel can use the MXU-native contract-over-last-axis batched matmul.
    f1t = jnp.transpose(f1r, (0, 2, 1))     # (n1, m, c)
    f2t = jnp.transpose(f2r, (0, 2, 1))     # (n2, m, c)

    out1, out2 = pl.pallas_call(
        cam_kernel,
        grid=(n1,),
        in_specs=[
            pl.BlockSpec((None, c, m), lambda i: (i, 0, 0)),   # f1r[i]   (C, M)
            pl.BlockSpec((None, m, c), lambda i: (i, 0, 0)),   # f1t[i]   (M, C)
            pl.BlockSpec((n2, c, m), lambda i: (0, 0, 0)),     # all f2   (N2, C, M)
            pl.BlockSpec((n2, m, c), lambda i: (0, 0, 0)),     # all f2t  (N2, M, C)
            pl.BlockSpec((MID, M), lambda i: (0, 0)),          # w1
            pl.BlockSpec((1, MID), lambda i: (0, 0)),          # b1
            pl.BlockSpec((MID, M), lambda i: (0, 0)),          # w2t
            pl.BlockSpec((1, M), lambda i: (0, 0)),            # b2
        ],
        out_specs=[
            # Outputs written pre-transposed: array is (n2, n1, c, m), grid
            # step i fills the (n2, 1, c, m) slab at column i.
            pl.BlockSpec((n2, 1, c, m), lambda i: (0, i, 0, 0)),
            pl.BlockSpec((n2, 1, c, m), lambda i: (0, i, 0, 0)),
        ],
        out_shape=[
            jax.ShapeDtypeStruct((n2, n1, c, m), jnp.float32),
            jax.ShapeDtypeStruct((n2, n1, c, m), jnp.float32),
        ],
        compiler_params=pltpu.CompilerParams(
            dimension_semantics=("parallel",)),
    )(f1r, f1t, f2r, f2t, w1, b1, w2t, b2)

    # The module's final .transpose(1, 2) is already folded into the output
    # BlockSpec index_map — only a free reshape is left.
    o1 = out1.reshape(1, n2, n1, c, h, w)
    o2 = out2.reshape(1, n2, n1, c, h, w)
    return o1, o2


def cam_reference(f1, f2, w1, b1, w2t, b2):
    """Pure-JAX reference mirroring the PyTorch forward (eval-mode BN)."""
    n1, c, h, w = f1.shape
    n2 = f2.shape[0]
    m = h * w
    f1r = f1.reshape(n1, c, m)
    f2r = f2.reshape(n2, c, m)
    f1n = f1r / jnp.maximum(jnp.linalg.norm(f1r, axis=1, keepdims=True), NORM_EPS)
    f2n = f2r / jnp.maximum(jnp.linalg.norm(f2r, axis=1, keepdims=True), NORM_EPS)
    hp = jax.lax.Precision.HIGHEST
    a1 = jnp.einsum('icp,jcq->ijpq', f1n, f2n, precision=hp)
    a2 = jnp.transpose(a1, (0, 1, 3, 2))

    def get_att(a):
        amean = a.mean(axis=2)                                            # (n1,n2,M)
        t = jnp.maximum((jnp.einsum('ijm,om->ijo', amean, w1, precision=hp)
                         + b1[0]) * BN_SCALE, 0.0)
        s = jnp.einsum('ijo,om->ijm', t, w2t, precision=hp) + b2[0]       # (n1,n2,M)
        v = jnp.mean(a * s[:, :, None, :], axis=-1)                       # (n1,n2,M)
        return jax.nn.softmax(v * TEMP_INV, axis=-1) + 1.0

    att1 = get_att(a1)
    att2 = get_att(a2)
    o1 = (f1r[:, None, :, :] * att1[:, :, None, :]).reshape(1, n1, n2, c, h, w)
    o2 = (f2r[None, :, :, :] * att2[:, :, None, :]).reshape(1, n1, n2, c, h, w)
    return o1.transpose(0, 2, 1, 3, 4, 5), o2.transpose(0, 2, 1, 3, 4, 5)


def init_params(key):
    k1, k2, k3, k4 = jax.random.split(key, 4)
    # conv1: Conv2d(121, 11, 1); weight ~ N(0, sqrt(2/(1*1*11)))
    w1 = jax.random.normal(k1, (MID, M), jnp.float32) * math.sqrt(2.0 / MID)
    b1 = jax.random.uniform(k2, (1, MID), jnp.float32,
                            minval=-1.0 / math.sqrt(M), maxval=1.0 / math.sqrt(M))
    # conv2: Conv2d(11, 121, 1); weight ~ N(0, sqrt(2/(1*1*121)))
    w2 = jax.random.normal(k3, (M, MID), jnp.float32) * math.sqrt(2.0 / M)
    b2 = jax.random.uniform(k4, (1, M), jnp.float32,
                            minval=-1.0 / math.sqrt(MID), maxval=1.0 / math.sqrt(MID))
    # w1 is kept lane-dense (MID, M); conv2 weight pre-transposed to (MID, M).
    return w1, b1, w2.T, b2


if __name__ == "__main__":
    key = jax.random.PRNGKey(0)
    kf1, kf2, kp = jax.random.split(key, 3)

    n1, n2, c, h, w = 2, 3, 4, 11, 11   # h*w must be 121 per the module
    f1 = jax.random.normal(kf1, (n1, c, h, w), jnp.float32)
    f2 = jax.random.normal(kf2, (n2, c, h, w), jnp.float32)

    w1, b1, w2t, b2 = init_params(kp)

    o1, o2 = cam_forward(f1, f2, w1, b1, w2t, b2)
    jax.block_until_ready((o1, o2))

    r1, r2 = cam_reference(f1, f2, w1, b1, w2t, b2)
    assert o1.shape == (1, n2, n1, c, h, w) and o2.shape == (1, n2, n1, c, h, w)
    np.testing.assert_allclose(np.asarray(o1), np.asarray(r1), rtol=1e-3, atol=1e-3)
    np.testing.assert_allclose(np.asarray(o2), np.asarray(r2), rtol=1e-3, atol=1e-3)

    print("KERNEL_OK")
</pallas_src>

<mosaic_0001>
module attributes {stable_mosaic.version = 11 : i64} {
  func.func @cam_kernel(%arg0: i32, %arg1: memref<1x4x121xf32, #tpu.memory_space<vmem>>, %arg2: memref<1x121x4xf32, #tpu.memory_space<vmem>>, %arg3: memref<3x4x121xf32, #tpu.memory_space<vmem>>, %arg4: memref<3x121x4xf32, #tpu.memory_space<vmem>>, %arg5: memref<11x121xf32, #tpu.memory_space<vmem>>, %arg6: memref<1x11xf32, #tpu.memory_space<vmem>>, %arg7: memref<11x121xf32, #tpu.memory_space<vmem>>, %arg8: memref<1x121xf32, #tpu.memory_space<vmem>>, %arg9: memref<3x1x4x121xf32, #tpu.memory_space<vmem>>, %arg10: memref<3x1x4x121xf32, #tpu.memory_space<vmem>>) attributes {dimension_semantics = [#tpu.dimension_semantics<parallel>], iteration_bounds = array<i64: 2>, scalar_prefetch = 0 : i64, scratch_operands = 0 : i64, tpu.core_type = #tpu.core_type<tc>, window_params = [{transform_indices = @transform_0, window_bounds = array<i64: 1, 4, 121>}, {transform_indices = @transform_1, window_bounds = array<i64: 1, 121, 4>}, {pipeline_mode = #tpu.pipeline_mode<synchronous>, transform_indices = @transform_2, window_bounds = array<i64: 3, 4, 121>}, {pipeline_mode = #tpu.pipeline_mode<synchronous>, transform_indices = @transform_3, window_bounds = array<i64: 3, 121, 4>}, {pipeline_mode = #tpu.pipeline_mode<synchronous>, transform_indices = @transform_4, window_bounds = array<i64: 11, 121>}, {pipeline_mode = #tpu.pipeline_mode<synchronous>, transform_indices = @transform_5, window_bounds = array<i64: 1, 11>}, {pipeline_mode = #tpu.pipeline_mode<synchronous>, transform_indices = @transform_6, window_bounds = array<i64: 11, 121>}, {pipeline_mode = #tpu.pipeline_mode<synchronous>, transform_indices = @transform_7, window_bounds = array<i64: 1, 121>}, {transform_indices = @transform_8, window_bounds = array<i64: 3, 1, 4, 121>}, {transform_indices = @transform_9, window_bounds = array<i64: 3, 1, 4, 121>}]} {
    %c0 = arith.constant 0 : index
    %c0_0 = arith.constant 0 : index
    %c0_1 = arith.constant 0 : index
    %0 = vector.load %arg1[%c0, %c0_0, %c0_1] : memref<1x4x121xf32, #tpu.memory_space<vmem>>, vector<1x4x121xf32>
    %1 = vector.shape_cast %0 : vector<1x4x121xf32> to vector<4x121xf32>
    %c0_2 = arith.constant 0 : index
    %c0_3 = arith.constant 0 : index
    %c0_4 = arith.constant 0 : index
    %2 = vector.load %arg2[%c0_2, %c0_3, %c0_4] : memref<1x121x4xf32, #tpu.memory_space<vmem>>, vector<1x121x4xf32>
    %3 = vector.shape_cast %2 : vector<1x121x4xf32> to vector<121x4xf32>
    %c0_5 = arith.constant 0 : index
    %c0_6 = arith.constant 0 : index
    %c0_7 = arith.constant 0 : index
    %4 = vector.load %arg3[%c0_5, %c0_6, %c0_7] : memref<3x4x121xf32, #tpu.memory_space<vmem>>, vector<3x4x121xf32>
    %c0_8 = arith.constant 0 : index
    %c0_9 = arith.constant 0 : index
    %c0_10 = arith.constant 0 : index
    %5 = vector.load %arg4[%c0_8, %c0_9, %c0_10] : memref<3x121x4xf32, #tpu.memory_space<vmem>>, vector<3x121x4xf32>
    %c0_11 = arith.constant 0 : index
    %c0_12 = arith.constant 0 : index
    %6 = vector.load %arg5[%c0_11, %c0_12] : memref<11x121xf32, #tpu.memory_space<vmem>>, vector<11x121xf32>
    %c0_13 = arith.constant 0 : index
    %c0_14 = arith.constant 0 : index
    %7 = vector.load %arg6[%c0_13, %c0_14] : memref<1x11xf32, #tpu.memory_space<vmem>>, vector<1x11xf32>
    %c0_15 = arith.constant 0 : index
    %c0_16 = arith.constant 0 : index
    %8 = vector.load %arg7[%c0_15, %c0_16] : memref<11x121xf32, #tpu.memory_space<vmem>>, vector<11x121xf32>
    %c0_17 = arith.constant 0 : index
    %c0_18 = arith.constant 0 : index
    %9 = vector.load %arg8[%c0_17, %c0_18] : memref<1x121xf32, #tpu.memory_space<vmem>>, vector<1x121xf32>
    %10 = arith.mulf %3, %3 : vector<121x4xf32>
    %cst = arith.constant dense<0.000000e+00> : vector<121xf32>
    %11 = vector.multi_reduction <add>, %10, %cst [1] : vector<121x4xf32> to vector<121xf32>
    %12 = vector.shape_cast %11 : vector<121xf32> to vector<121x1xf32>
    %13 = math.sqrt %12 : vector<121x1xf32>
    %cst_19 = arith.constant 9.99999996E-13 : f32
    %14 = vector.broadcast %cst_19 : f32 to vector<121x1xf32>
    %15 = arith.maximumf %13, %14 : vector<121x1xf32>
    %16 = vector.broadcast %15 : vector<121x1xf32> to vector<121x4xf32>
    %17 = arith.divf %3, %16 : vector<121x4xf32>
    %18 = arith.mulf %5, %5 : vector<3x121x4xf32>
    %cst_20 = arith.constant dense<0.000000e+00> : vector<3x121xf32>
    %19 = vector.multi_reduction <add>, %18, %cst_20 [2] : vector<3x121x4xf32> to vector<3x121xf32>
    %20 = vector.shape_cast %19 : vector<3x121xf32> to vector<3x121x1xf32>
    %21 = math.sqrt %20 : vector<3x121x1xf32>
    %cst_21 = arith.constant 9.99999996E-13 : f32
    %22 = vector.broadcast %cst_21 : f32 to vector<3x121x1xf32>
    %23 = arith.maximumf %21, %22 : vector<3x121x1xf32>
    %24 = vector.broadcast %23 : vector<3x121x1xf32> to vector<3x121x4xf32>
    %25 = arith.divf %5, %24 : vector<3x121x4xf32>
    %26 = vector.shape_cast %17 : vector<121x4xf32> to vector<1x121x4xf32>
    %27 = vector.shape_cast %26 : vector<1x121x4xf32> to vector<1x121x4xf32>
    %28 = vector.broadcast %27 : vector<1x121x4xf32> to vector<3x121x4xf32>
    "tpu.trace_start"() <{level = 10 : i32, message = "jpc,jqc->jpq"}> : () -> ()
    %cst_22 = arith.constant dense<0.000000e+00> : vector<3x121x121xf32>
    %29 = tpu.matmul %28, %25, %cst_22 {dimension_numbers = #tpu.dot_dimension_numbers<[2], [2], [1], [1], [0, 0, 0, 1, 1, 1], [0], [0]>} : vector<3x121x4xf32>, vector<3x121x4xf32>, vector<3x121x121xf32> -> vector<3x121x121xf32>
    "tpu.trace_stop"() : () -> ()
    %cst_23 = arith.constant dense<0.000000e+00> : vector<3x121xf32>
    %30 = vector.multi_reduction <add>, %29, %cst_23 [1] : vector<3x121x121xf32> to vector<3x121xf32>
    %cst_24 = arith.constant 1.210000e+02 : f32
    %31 = vector.broadcast %cst_24 : f32 to vector<3x121xf32>
    %32 = arith.divf %30, %31 : vector<3x121xf32>
    %cst_25 = arith.constant dense<0.000000e+00> : vector<3x11xf32>
    %33 = tpu.matmul %32, %6, %cst_25 {dimension_numbers = #tpu.dot_dimension_numbers<[1], [1], [0], [0], [0, 0, 1, 0], [], []>} : vector<3x121xf32>, vector<11x121xf32>, vector<3x11xf32> -> vector<3x11xf32>
    %34 = vector.broadcast %7 : vector<1x11xf32> to vector<3x11xf32>
    %35 = arith.addf %33, %34 : vector<3x11xf32>
    %cst_26 = arith.constant 0.999994993 : f32
    %36 = vector.broadcast %cst_26 : f32 to vector<3x11xf32>
    %37 = arith.mulf %35, %36 : vector<3x11xf32>
    %cst_27 = arith.constant 0.000000e+00 : f32
    %38 = vector.broadcast %cst_27 : f32 to vector<3x11xf32>
    %39 = arith.maximumf %37, %38 : vector<3x11xf32>
    %cst_28 = arith.constant dense<0.000000e+00> : vector<3x121xf32>
    %40 = tpu.matmul %39, %8, %cst_28 {dimension_numbers = #tpu.dot_dimension_numbers<[1], [0], [0], [1], [0, 0, 1, 1], [], []>} : vector<3x11xf32>, vector<11x121xf32>, vector<3x121xf32> -> vector<3x121xf32>
    %41 = vector.broadcast %9 : vector<1x121xf32> to vector<3x121xf32>
    %42 = arith.addf %40, %41 : vector<3x121xf32>
    %43 = vector.shape_cast %42 : vector<3x121xf32> to vector<3x1x121xf32>
    %44 = vector.broadcast %43 : vector<3x1x121xf32> to vector<3x121x121xf32>
    %45 = arith.mulf %29, %44 : vector<3x121x121xf32>
    %cst_29 = arith.constant dense<0.000000e+00> : vector<3x121xf32>
    %46 = vector.multi_reduction <add>, %45, %cst_29 [2] : vector<3x121x121xf32> to vector<3x121xf32>
    %cst_30 = arith.constant 0.330578506 : f32
    %47 = vector.broadcast %cst_30 : f32 to vector<3x121xf32>
    %48 = arith.mulf %46, %47 : vector<3x121xf32>
    %cst_31 = arith.constant dense<0xFF800000> : vector<3xf32>
    %49 = vector.multi_reduction <maximumf>, %48, %cst_31 [1] : vector<3x121xf32> to vector<3xf32>
    %50 = vector.shape_cast %49 : vector<3xf32> to vector<3x1xf32>
    %51 = vector.broadcast %50 : vector<3x1xf32> to vector<3x121xf32>
    %52 = arith.subf %48, %51 : vector<3x121xf32>
    %53 = math.exp %52 : vector<3x121xf32>
    %cst_32 = arith.constant dense<0.000000e+00> : vector<3xf32>
    %54 = vector.multi_reduction <add>, %53, %cst_32 [1] : vector<3x121xf32> to vector<3xf32>
    %55 = vector.shape_cast %54 : vector<3xf32> to vector<3x1xf32>
    %56 = vector.broadcast %55 : vector<3x1xf32> to vector<3x121xf32>
    %57 = arith.divf %53, %56 : vector<3x121xf32>
    %cst_33 = arith.constant 1.000000e+00 : f32
    %58 = vector.broadcast %cst_33 : f32 to vector<3x121xf32>
    %59 = arith.addf %57, %58 : vector<3x121xf32>
    %cst_34 = arith.constant dense<0.000000e+00> : vector<3x121xf32>
    %60 = vector.multi_reduction <add>, %29, %cst_34 [2] : vector<3x121x121xf32> to vector<3x121xf32>
    %cst_35 = arith.constant 1.210000e+02 : f32
    %61 = vector.broadcast %cst_35 : f32 to vector<3x121xf32>
    %62 = arith.divf %60, %61 : vector<3x121xf32>
    %cst_36 = arith.constant dense<0.000000e+00> : vector<3x11xf32>
    %63 = tpu.matmul %62, %6, %cst_36 {dimension_numbers = #tpu.dot_dimension_numbers<[1], [1], [0], [0], [0, 0, 1, 0], [], []>} : vector<3x121xf32>, vector<11x121xf32>, vector<3x11xf32> -> vector<3x11xf32>
    %64 = vector.broadcast %7 : vector<1x11xf32> to vector<3x11xf32>
    %65 = arith.addf %63, %64 : vector<3x11xf32>
    %cst_37 = arith.constant 0.999994993 : f32
    %66 = vector.broadcast %cst_37 : f32 to vector<3x11xf32>
    %67 = arith.mulf %65, %66 : vector<3x11xf32>
    %cst_38 = arith.constant 0.000000e+00 : f32
    %68 = vector.broadcast %cst_38 : f32 to vector<3x11xf32>
    %69 = arith.maximumf %67, %68 : vector<3x11xf32>
    %cst_39 = arith.constant dense<0.000000e+00> : vector<3x121xf32>
    %70 = tpu.matmul %69, %8, %cst_39 {dimension_numbers = #tpu.dot_dimension_numbers<[1], [0], [0], [1], [0, 0, 1, 1], [], []>} : vector<3x11xf32>, vector<11x121xf32>, vector<3x121xf32> -> vector<3x121xf32>
    %71 = vector.broadcast %9 : vector<1x121xf32> to vector<3x121xf32>
    %72 = arith.addf %70, %71 : vector<3x121xf32>
    %73 = vector.shape_cast %72 : vector<3x121xf32> to vector<3x121x1xf32>
    %74 = vector.broadcast %73 : vector<3x121x1xf32> to vector<3x121x121xf32>
    %75 = arith.mulf %29, %74 : vector<3x121x121xf32>
    %cst_40 = arith.constant dense<0.000000e+00> : vector<3x121xf32>
    %76 = vector.multi_reduction <add>, %75, %cst_40 [1] : vector<3x121x121xf32> to vector<3x121xf32>
    %cst_41 = arith.constant 0.330578506 : f32
    %77 = vector.broadcast %cst_41 : f32 to vector<3x121xf32>
    %78 = arith.mulf %76, %77 : vector<3x121xf32>
    %cst_42 = arith.constant dense<0xFF800000> : vector<3xf32>
    %79 = vector.multi_reduction <maximumf>, %78, %cst_42 [1] : vector<3x121xf32> to vector<3xf32>
    %80 = vector.shape_cast %79 : vector<3xf32> to vector<3x1xf32>
    %81 = vector.broadcast %80 : vector<3x1xf32> to vector<3x121xf32>
    %82 = arith.subf %78, %81 : vector<3x121xf32>
    %83 = math.exp %82 : vector<3x121xf32>
    %cst_43 = arith.constant dense<0.000000e+00> : vector<3xf32>
    %84 = vector.multi_reduction <add>, %83, %cst_43 [1] : vector<3x121xf32> to vector<3xf32>
    %85 = vector.shape_cast %84 : vector<3xf32> to vector<3x1xf32>
    %86 = vector.broadcast %85 : vector<3x1xf32> to vector<3x121xf32>
    %87 = arith.divf %83, %86 : vector<3x121xf32>
    %cst_44 = arith.constant 1.000000e+00 : f32
    %88 = vector.broadcast %cst_44 : f32 to vector<3x121xf32>
    %89 = arith.addf %87, %88 : vector<3x121xf32>
    %90 = vector.shape_cast %1 : vector<4x121xf32> to vector<1x4x121xf32>
    %91 = vector.shape_cast %59 : vector<3x121xf32> to vector<3x1x121xf32>
    %92 = vector.broadcast %90 : vector<1x4x121xf32> to vector<3x4x121xf32>
    %93 = vector.broadcast %91 : vector<3x1x121xf32> to vector<3x4x121xf32>
    %94 = arith.mulf %92, %93 : vector<3x4x121xf32>
    %95 = vector.shape_cast %89 : vector<3x121xf32> to vector<3x1x121xf32>
    %96 = vector.broadcast %95 : vector<3x1x121xf32> to vector<3x4x121xf32>
    %97 = arith.mulf %4, %96 : vector<3x4x121xf32>
    %98 = vector.shape_cast %94 : vector<3x4x121xf32> to vector<3x1x4x121xf32>
    %c0_45 = arith.constant 0 : index
    %c0_46 = arith.constant 0 : index
    %c0_47 = arith.constant 0 : index
    %c0_48 = arith.constant 0 : index
    %99 = vector.load %arg9[%c0_45, %c0_46, %c0_47, %c0_48] : memref<3x1x4x121xf32, #tpu.memory_space<vmem>>, vector<3x1x4x121xf32>
    tpu.vector_store %arg9[%c0_45, %c0_46, %c0_47, %c0_48], %98 {strides = array<i32>} : memref<3x1x4x121xf32, #tpu.memory_space<vmem>>, vector<3x1x4x121xf32>,
    %100 = vector.shape_cast %97 : vector<3x4x121xf32> to vector<3x1x4x121xf32>
    %c0_49 = arith.constant 0 : index
    %c0_50 = arith.constant 0 : index
    %c0_51 = arith.constant 0 : index
    %c0_52 = arith.constant 0 : index
    %101 = vector.load %arg10[%c0_49, %c0_50, %c0_51, %c0_52] : memref<3x1x4x121xf32, #tpu.memory_space<vmem>>, vector<3x1x4x121xf32>
    tpu.vector_store %arg10[%c0_49, %c0_50, %c0_51, %c0_52], %100 {strides = array<i32>} : memref<3x1x4x121xf32, #tpu.memory_space<vmem>>, vector<3x1x4x121xf32>,
    return
  }
  func.func @transform_0(%arg0: i32) -> (i32, i32, i32) {
    %c0_i32 = arith.constant 0 : i32
    %c0_i32_0 = arith.constant 0 : i32
    %c0_i32_1 = arith.constant 0 : i32
    return %arg0, %c0_i32, %c0_i32_0 : i32, i32, i32
  }
  func.func @transform_1(%arg0: i32) -> (i32, i32, i32) {
    %c0_i32 = arith.constant 0 : i32
    %c0_i32_0 = arith.constant 0 : i32
    %c0_i32_1 = arith.constant 0 : i32
    return %arg0, %c0_i32, %c0_i32_0 : i32, i32, i32
  }
  func.func @transform_2(%arg0: i32) -> (i32, i32, i32) {
    %c0_i32 = arith.constant 0 : i32
    %c0_i32_0 = arith.constant 0 : i32
    %c0_i32_1 = arith.constant 0 : i32
    %c0_i32_2 = arith.constant 0 : i32
    return %c0_i32, %c0_i32_0, %c0_i32_1 : i32, i32, i32
  }
  func.func @transform_3(%arg0: i32) -> (i32, i32, i32) {
    %c0_i32 = arith.constant 0 : i32
    %c0_i32_0 = arith.constant 0 : i32
    %c0_i32_1 = arith.constant 0 : i32
    %c0_i32_2 = arith.constant 0 : i32
    return %c0_i32, %c0_i32_0, %c0_i32_1 : i32, i32, i32
  }
  func.func @transform_4(%arg0: i32) -> (i32, i32) {
    %c0_i32 = arith.constant 0 : i32
    %c0_i32_0 = arith.constant 0 : i32
    %c0_i32_1 = arith.constant 0 : i32
    return %c0_i32, %c0_i32_0 : i32, i32
  }
  func.func @transform_5(%arg0: i32) -> (i32, i32) {
    %c0_i32 = arith.constant 0 : i32
    %c0_i32_0 = arith.constant 0 : i32
    %c0_i32_1 = arith.constant 0 : i32
    return %c0_i32, %c0_i32_0 : i32, i32
  }
  func.func @transform_6(%arg0: i32) -> (i32, i32) {
    %c0_i32 = arith.constant 0 : i32
    %c0_i32_0 = arith.constant 0 : i32
    %c0_i32_1 = arith.constant 0 : i32
    return %c0_i32, %c0_i32_0 : i32, i32
  }
  func.func @transform_7(%arg0: i32) -> (i32, i32) {
    %c0_i32 = arith.constant 0 : i32
    %c0_i32_0 = arith.constant 0 : i32
    %c0_i32_1 = arith.constant 0 : i32
    return %c0_i32, %c0_i32_0 : i32, i32
  }
  func.func @transform_8(%arg0: i32) -> (i32, i32, i32, i32) {
    %c0_i32 = arith.constant 0 : i32
    %c0_i32_0 = arith.constant 0 : i32
    %c0_i32_1 = arith.constant 0 : i32
    %c0_i32_2 = arith.constant 0 : i32
    return %c0_i32, %arg0, %c0_i32_0, %c0_i32_1 : i32, i32, i32, i32
  }
  func.func @transform_9(%arg0: i32) -> (i32, i32, i32, i32) {
    %c0_i32 = arith.constant 0 : i32
    %c0_i32_0 = arith.constant 0 : i32
    %c0_i32_1 = arith.constant 0 : i32
    %c0_i32_2 = arith.constant 0 : i32
    return %c0_i32, %arg0, %c0_i32_0, %c0_i32_1 : i32, i32, i32, i32
  }
}

</mosaic_0001>

<llo_original>
// kernel: tpu_custom_call.1
$region0: #{tpu_custom_call.1}
  #allocation0 [shape = 'u32[]', space=smem, size = 0x4, offset = 0x4, fixed_abs, tag = 'smem constant byte address 0x4 - core index']
  #allocation1 [shape = 'u32[72,128]{1,0:T(1,128)}', space=vmem, size = 0x9000, scoped, tag = 'internal scratch']
  %s0 = inlined_call_operand.vmem [shape: f32[2,4,121], index: 0, kind: input, shape index: {}]
  %s1 = inlined_call_operand.vmem [shape: f32[2,121,4], index: 1, kind: input, shape index: {}]
  %s2 = inlined_call_operand.vmem [shape: f32[3,4,121], index: 2, kind: input, shape index: {}]
  %s3 = inlined_call_operand.vmem [shape: f32[3,121,4], index: 3, kind: input, shape index: {}]
  %s4 = inlined_call_operand.vmem [shape: f32[11,121], index: 4, kind: input, shape index: {}]
  %s5 = inlined_call_operand.vmem [shape: f32[1,11], index: 5, kind: input, shape index: {}]
  %s6 = inlined_call_operand.vmem [shape: f32[11,121], index: 6, kind: input, shape index: {}]
  %s7 = inlined_call_operand.vmem [shape: f32[1,121], index: 7, kind: input, shape index: {}]
  %s8 = inlined_call_operand.hbm [shape: f32[3,2,4,121], index: 8, kind: output, shape index: {0}]
  %s9 = inlined_call_operand.hbm [shape: f32[3,2,4,121], index: 9, kind: output, shape index: {1}]
  %10 = xla_tuple %s8, %s9
  %s11 = sld [smem:[#allocation0]]
  $region73: #{tpu_custom_call.1} parent=0
    _
  %s13 = ssub.s32 1, %s11
  %s14 = scalar_select 0, %s13, %s11
  $region1: #{tpu_custom_call.1} parent=0
    #allocation2 [shape = 'u8[12288]{0}', space=vmem, size = 0x3000, scoped, tag = 'output window, operand 0']
    #allocation3 [shape = 's32[2]{0}', space=sflag, size = 0x8, scoped, tag = 'scoped memory for tpu_custom_call.1']
    #allocation4 [shape = 'u8[12288]{0}', space=vmem, size = 0x3000, scoped, tag = 'output window, operand 1']
    #allocation5 [shape = 's32[2]{0}', space=sflag, size = 0x8, scoped, tag = 'scoped memory for tpu_custom_call.1']
    %15 = vsyncpa [#allocation3], 0
    %s16 = scalar_lea.sflag [#allocation3], 1
    %17 = vsyncpa %s16, 0
    %18 = vsyncpa [#allocation5], 0
    %s19 = scalar_lea.sflag [#allocation5], 1
    %20 = vsyncpa %s19, 0
    loop: start=0, step=1, limit=4
    $region2: #{tpu_custom_call.1} parent=1 // loop_pre_header
      _
    $region3: #{tpu_custom_call.1} parent=1 // loop_header
      %s22 = sphi 0, %s26
      %p23 = scmp.ge.s32.totalorder %s22, 4
      %s32 = sphi 0, %s34
      %s35 = sphi 0, %s32
      %s36 = sphi 0, %s35
      %s52 = sphi 0, %s36
      %s58 = sphi 0, %s60
      %s61 = sphi 0, %s58
      %s62 = sphi 0, %s61
      %s78 = sphi 0, %s62
      %s82 = sphi 0, %s82
      %s84 = sphi 0, %s82
      %s85 = sphi 0, %s84
      %s99 = sphi 0, %s85
      %s103 = sphi 0, %s103
      %s105 = sphi 0, %s103
      %s106 = sphi 0, %s105
      %s120 = sphi 0, %s106
      %s124 = sphi 0, %s124
      %s126 = sphi 0, %s124
      %s127 = sphi 0, %s126
      %s141 = sphi 0, %s127
      %s145 = sphi 0, %s145
      %s147 = sphi 0, %s145
      %s148 = sphi 0, %s147
      %s162 = sphi 0, %s148
      %s166 = sphi 0, %s166
      %s168 = sphi 0, %s166
      %s169 = sphi 0, %s168
      %s183 = sphi 0, %s169
      %s187 = sphi 0, %s187
      %s189 = sphi 0, %s187
      %s190 = sphi 0, %s189
      %s204 = sphi 0, %s190
      %s210 = sphi 0, %s212
      %s213 = sphi 0, %s210
      %s214 = sphi 0, %s213
      %s230 = sphi 0, %s214
      %s236 = sphi 0, %s238
      %s239 = sphi 0, %s236
      %s240 = sphi 0, %s239
      %s256 = sphi 0, %s240
    $region4: #{tpu_custom_call.1} parent=1 // loop_header_branch
      %25 = sbr.rel (%p23) target = $region8
    $region5: #{tpu_custom_call.1} parent=1 // loop_body
      %s27 = ssub.s32 %s22, 1
      %s28 = ssub.s32 %s22, 2
      %s29 = sadd.s32 %s22, 1
      %s30 = ssub.s32 %s22, %s29
      %p31 = scmp.eq.s32.totalorder %s30, 0
      %s33 = sadd.s32 %s32, 1
      %s34 = scalar_select %p31, %s32, %s33
      %p37 = pneg %p31
      %p38 = scmp.eq.s32.totalorder %s22, 1
      %p39 = por %p37, %p38
      %p40 = scmp.ne.s32.totalorder %s32, %s35
      %p41 = scmp.eq.s32.totalorder %s22, 0
      %p42 = por %p40, %p41
      %p43 = scmp.ne.s32.totalorder %s32, %s35
      %p44 = scmp.eq.s32.totalorder %s27, 1
      %p45 = por %p43, %p44
      %p46 = scmp.ne.s32.totalorder %s35, %s36
      %p47 = scmp.eq.s32.totalorder %s27, 0
      %p48 = por %p46, %p47
      %p49 = scmp.ne.s32.totalorder %s35, %s36
      %p50 = scmp.eq.s32.totalorder %s28, 1
      %p51 = por %p49, %p50
      %p53 = scmp.ne.s32.totalorder %s36, %s52
      %p54 = scmp.eq.s32.totalorder %s28, 0
      %p55 = por %p53, %p54
      %s56 = ssub.s32 %s22, %s29
      %p57 = scmp.eq.s32.totalorder %s56, 0
      %s59 = sadd.s32 %s58, 1
      %s60 = scalar_select %p57, %s58, %s59
      %p63 = pneg %p57
      %p64 = scmp.eq.s32.totalorder %s22, 1
      %p65 = por %p63, %p64
      %p66 = scmp.ne.s32.totalorder %s58, %s61
      %p67 = scmp.eq.s32.totalorder %s22, 0
      %p68 = por %p66, %p67
      %p69 = scmp.ne.s32.totalorder %s58, %s61
      %p70 = scmp.eq.s32.totalorder %s27, 1
      %p71 = por %p69, %p70
      %p72 = scmp.ne.s32.totalorder %s61, %s62
      %p73 = scmp.eq.s32.totalorder %s27, 0
      %p74 = por %p72, %p73
      %p75 = scmp.ne.s32.totalorder %s61, %s62
      %p76 = scmp.eq.s32.totalorder %s28, 1
      %p77 = por %p75, %p76
      %p79 = scmp.ne.s32.totalorder %s62, %s78
      %p80 = scmp.eq.s32.totalorder %s28, 0
      %p81 = por %p79, %p80
      %s83 = sadd.s32 %s82, 1
      %p86 = scmp.eq.s32.totalorder %s22, 1
      %p87 = scmp.ne.s32.totalorder %s82, %s84
      %p88 = scmp.eq.s32.totalorder %s22, 0
      %p89 = por %p87, %p88
      %p90 = scmp.ne.s32.totalorder %s82, %s84
      %p91 = scmp.eq.s32.totalorder %s27, 1
      %p92 = por %p90, %p91
      %p93 = scmp.ne.s32.totalorder %s84, %s85
      %p94 = scmp.eq.s32.totalorder %s27, 0
      %p95 = por %p93, %p94
      %p96 = scmp.ne.s32.totalorder %s84, %s85
      %p97 = scmp.eq.s32.totalorder %s28, 1
      %p98 = por %p96, %p97
      %p100 = scmp.ne.s32.totalorder %s85, %s99
      %p101 = scmp.eq.s32.totalorder %s28, 0
      %p102 = por %p100, %p101
      %s104 = sadd.s32 %s103, 1
      %p107 = scmp.eq.s32.totalorder %s22, 1
      %p108 = scmp.ne.s32.totalorder %s103, %s105
      %p109 = scmp.eq.s32.totalorder %s22, 0
      %p110 = por %p108, %p109
      %p111 = scmp.ne.s32.totalorder %s103, %s105
      %p112 = scmp.eq.s32.totalorder %s27, 1
      %p113 = por %p111, %p112
      %p114 = scmp.ne.s32.totalorder %s105, %s106
      %p115 = scmp.eq.s32.totalorder %s27, 0
      %p116 = por %p114, %p115
      %p117 = scmp.ne.s32.totalorder %s105, %s106
      %p118 = scmp.eq.s32.totalorder %s28, 1
      %p119 = por %p117, %p118
      %p121 = scmp.ne.s32.totalorder %s106, %s120
      %p122 = scmp.eq.s32.totalorder %s28, 0
      %p123 = por %p121, %p122
      %s125 = sadd.s32 %s124, 1
      %p128 = scmp.eq.s32.totalorder %s22, 1
      %p129 = scmp.ne.s32.totalorder %s124, %s126
      %p130 = scmp.eq.s32.totalorder %s22, 0
      %p131 = por %p129, %p130
      %p132 = scmp.ne.s32.totalorder %s124, %s126
      %p133 = scmp.eq.s32.totalorder %s27, 1
      %p134 = por %p132, %p133
      %p135 = scmp.ne.s32.totalorder %s126, %s127
      %p136 = scmp.eq.s32.totalorder %s27, 0
      %p137 = por %p135, %p136
      %p138 = scmp.ne.s32.totalorder %s126, %s127
      %p139 = scmp.eq.s32.totalorder %s28, 1
      %p140 = por %p138, %p139
      %p142 = scmp.ne.s32.totalorder %s127, %s141
      %p143 = scmp.eq.s32.totalorder %s28, 0
      %p144 = por %p142, %p143
      %s146 = sadd.s32 %s145, 1
      %p149 = scmp.eq.s32.totalorder %s22, 1
      %p150 = scmp.ne.s32.totalorder %s145, %s147
      %p151 = scmp.eq.s32.totalorder %s22, 0
      %p152 = por %p150, %p151
      %p153 = scmp.ne.s32.totalorder %s145, %s147
      %p154 = scmp.eq.s32.totalorder %s27, 1
      %p155 = por %p153, %p154
      %p156 = scmp.ne.s32.totalorder %s147, %s148
      %p157 = scmp.eq.s32.totalorder %s27, 0
      %p158 = por %p156, %p157
      %p159 = scmp.ne.s32.totalorder %s147, %s148
      %p160 = scmp.eq.s32.totalorder %s28, 1
      %p161 = por %p159, %p160
      %p163 = scmp.ne.s32.totalorder %s148, %s162
      %p164 = scmp.eq.s32.totalorder %s28, 0
      %p165 = por %p163, %p164
      %s167 = sadd.s32 %s166, 1
      %p170 = scmp.eq.s32.totalorder %s22, 1
      %p171 = scmp.ne.s32.totalorder %s166, %s168
      %p172 = scmp.eq.s32.totalorder %s22, 0
      %p173 = por %p171, %p172
      %p174 = scmp.ne.s32.totalorder %s166, %s168
      %p175 = scmp.eq.s32.totalorder %s27, 1
      %p176 = por %p174, %p175
      %p177 = scmp.ne.s32.totalorder %s168, %s169
      %p178 = scmp.eq.s32.totalorder %s27, 0
      %p179 = por %p177, %p178
      %p180 = scmp.ne.s32.totalorder %s168, %s169
      %p181 = scmp.eq.s32.totalorder %s28, 1
      %p182 = por %p180, %p181
      %p184 = scmp.ne.s32.totalorder %s169, %s183
      %p185 = scmp.eq.s32.totalorder %s28, 0
      %p186 = por %p184, %p185
      %s188 = sadd.s32 %s187, 1
      %p191 = scmp.eq.s32.totalorder %s22, 1
      %p192 = scmp.ne.s32.totalorder %s187, %s189
      %p193 = scmp.eq.s32.totalorder %s22, 0
      %p194 = por %p192, %p193
      %p195 = scmp.ne.s32.totalorder %s187, %s189
      %p196 = scmp.eq.s32.totalorder %s27, 1
      %p197 = por %p195, %p196
      %p198 = scmp.ne.s32.totalorder %s189, %s190
      %p199 = scmp.eq.s32.totalorder %s27, 0
      %p200 = por %p198, %p199
      %p201 = scmp.ne.s32.totalorder %s189, %s190
      %p202 = scmp.eq.s32.totalorder %s28, 1
      %p203 = por %p201, %p202
      %p205 = scmp.ne.s32.totalorder %s190, %s204
      %p206 = scmp.eq.s32.totalorder %s28, 0
      %p207 = por %p205, %p206
      %s208 = ssub.s32 %s22, %s29
      %p209 = scmp.eq.s32.totalorder %s208, 0
      %s211 = sadd.s32 %s210, 1
      %s212 = scalar_select %p209, %s210, %s211
      %p215 = pneg %p209
      %p216 = scmp.eq.s32.totalorder %s22, 1
      %p217 = por %p215, %p216
      %p218 = scmp.ne.s32.totalorder %s210, %s213
      %p219 = scmp.eq.s32.totalorder %s22, 0
      %p220 = por %p218, %p219
      %p221 = scmp.ne.s32.totalorder %s210, %s213
      %p222 = scmp.eq.s32.totalorder %s27, 1
      %p223 = por %p221, %p222
      %p224 = scmp.ne.s32.totalorder %s213, %s214
      %p225 = scmp.eq.s32.totalorder %s27, 0
      %p226 = por %p224, %p225
      %p227 = scmp.ne.s32.totalorder %s213, %s214
      %p228 = scmp.eq.s32.totalorder %s28, 1
      %p229 = por %p227, %p228
      %p231 = scmp.ne.s32.totalorder %s214, %s230
      %p232 = scmp.eq.s32.totalorder %s28, 0
      %p233 = por %p231, %p232
      %s234 = ssub.s32 %s22, %s29
      %p235 = scmp.eq.s32.totalorder %s234, 0
      %s237 = sadd.s32 %s236, 1
      %s238 = scalar_select %p235, %s236, %s237
      %p241 = pneg %p235
      %p242 = scmp.eq.s32.totalorder %s22, 1
      %p243 = por %p241, %p242
      %p244 = scmp.ne.s32.totalorder %s236, %s239
      %p245 = scmp.eq.s32.totalorder %s22, 0
      %p246 = por %p244, %p245
      %p247 = scmp.ne.s32.totalorder %s236, %s239
      %p248 = scmp.eq.s32.totalorder %s27, 1
      %p249 = por %p247, %p248
      %p250 = scmp.ne.s32.totalorder %s239, %s240
      %p251 = scmp.eq.s32.totalorder %s27, 0
      %p252 = por %p250, %p251
      %p253 = scmp.ne.s32.totalorder %s239, %s240
      %p254 = scmp.eq.s32.totalorder %s28, 1
      %p255 = por %p253, %p254
      %p257 = scmp.ne.s32.totalorder %s240, %s256
      %p258 = scmp.eq.s32.totalorder %s28, 0
      %p259 = por %p257, %p258
      %p260 = scmp.le.s32.totalorder 1, %s22
      %p261 = scmp.lt.s32.totalorder %s22, 3
      %p262 = pnand %p260, %p261
      %p263 = pneg %p262
      // Predicated region
      $region9: #{tpu_custom_call.1} parent=5 // pred_check
        _
      $region10: #{tpu_custom_call.1} parent=5 // pred_check_branch
        %265 = sbr.rel (%p262) target = $region12
      $region11: #{tpu_custom_call.1} parent=5 // pred_region
        %s266 = ssub.s32 %s22, 1
        // Predicated region
        $region13: #{tpu_custom_call.1} parent=11 // pred_check
          %p267 = pneg %p95
        $region14: #{tpu_custom_call.1} parent=11 // pred_check_branch
          %269 = sbr.rel (%p267) target = $region16
        $region15: #{tpu_custom_call.1} parent=11 // pred_region
          _
        $region16: #{tpu_custom_call.1} parent=11 // pred_fallthru
          _
        // Predicated region
        $region17: #{tpu_custom_call.1} parent=11 // pred_check
          %p270 = pneg %p116
        $region18: #{tpu_custom_call.1} parent=11 // pred_check_branch
          %272 = sbr.rel (%p270) target = $region20
        $region19: #{tpu_custom_call.1} parent=11 // pred_region
          _
        $region20: #{tpu_custom_call.1} parent=11 // pred_fallthru
          _
        // Predicated region
        $region21: #{tpu_custom_call.1} parent=11 // pred_check
          %p273 = pneg %p137
        $region22: #{tpu_custom_call.1} parent=11 // pred_check_branch
          %275 = sbr.rel (%p273) target = $region24
        $region23: #{tpu_custom_call.1} parent=11 // pred_region
          _
        $region24: #{tpu_custom_call.1} parent=11 // pred_fallthru
          _
        // Predicated region
        $region25: #{tpu_custom_call.1} parent=11 // pred_check
          %p276 = pneg %p158
        $region26: #{tpu_custom_call.1} parent=11 // pred_check_branch
          %278 = sbr.rel (%p276) target = $region28
        $region27: #{tpu_custom_call.1} parent=11 // pred_region
          _
        $region28: #{tpu_custom_call.1} parent=11 // pred_fallthru
          _
        // Predicated region
        $region29: #{tpu_custom_call.1} parent=11 // pred_check
          %p279 = pneg %p179
        $region30: #{tpu_custom_call.1} parent=11 // pred_check_branch
          %281 = sbr.rel (%p279) target = $region32
        $region31: #{tpu_custom_call.1} parent=11 // pred_region
          _
        $region32: #{tpu_custom_call.1} parent=11 // pred_fallthru
          _
        // Predicated region
        $region33: #{tpu_custom_call.1} parent=11 // pred_check
          %p282 = pneg %p200
        $region34: #{tpu_custom_call.1} parent=11 // pred_check_branch
          %284 = sbr.rel (%p282) target = $region36
        $region35: #{tpu_custom_call.1} parent=11 // pred_region
          _
        $region36: #{tpu_custom_call.1} parent=11 // pred_fallthru
          _
      $region12: #{tpu_custom_call.1} parent=5 // pred_fallthru
        _
      %p285 = scmp.lt.s32.totalorder %s22, 2
      // Predicated region
      $region37: #{tpu_custom_call.1} parent=5 // pred_check
        %p286 = pneg %p285
      $region38: #{tpu_custom_call.1} parent=5 // pred_check_branch
        %288 = sbr.rel (%p286) target = $region40
      $region39: #{tpu_custom_call.1} parent=5 // pred_region
        // Predicated region
        $region41: #{tpu_custom_call.1} parent=39 // pred_check
          %p289 = pneg %p42
        $region42: #{tpu_custom_call.1} parent=39 // pred_check_branch
          %291 = sbr.rel (%p289) target = $region44
        $region43: #{tpu_custom_call.1} parent=39 // pred_region
          %p292 = scmp.lt.s32.totalorder %s22, 1
          %s293 = scalar_select %p292, %s22, 1
          %s294 = smul.addr %s293, 4
          %s295 = scalar_lea.vmem %s0, %s294
        $region44: #{tpu_custom_call.1} parent=39 // pred_fallthru
          _
        // Predicated region
        $region45: #{tpu_custom_call.1} parent=39 // pred_check
          %p296 = pneg %p68
        $region46: #{tpu_custom_call.1} parent=39 // pred_check_branch
          %298 = sbr.rel (%p296) target = $region48
        $region47: #{tpu_custom_call.1} parent=39 // pred_region
          %p299 = scmp.lt.s32.totalorder %s22, 1
          %s300 = scalar_select %p299, %s22, 1
          %s301 = smul.addr %s300, 16
          %s302 = smul.addr %s301, 8
          %s303 = scalar_lea.vmem %s1, %s302
        $region48: #{tpu_custom_call.1} parent=39 // pred_fallthru
          _
      $region40: #{tpu_custom_call.1} parent=5 // pred_fallthru
        _
      %p304 = scmp.le.s32.totalorder 1, %s22
      %p305 = scmp.lt.s32.totalorder %s22, 3
      %p306 = pnand %p304, %p305
      %p307 = pneg %p306
      // Predicated region
      $region49: #{tpu_custom_call.1} parent=5 // pred_check
        _
      $region50: #{tpu_custom_call.1} parent=5 // pred_check_branch
        %309 = sbr.rel (%p306) target = $region52
      $region51: #{tpu_custom_call.1} parent=5 // pred_region
        %s310 = ssub.s32 %s22, 1
        %p311 = scmp.lt.s32.totalorder %s27, 1
        %s312 = scalar_select %p311, %s27, 1
        %s313 = smul.addr %s312, 4
        %s314 = scalar_lea.vmem %s0, %s313
        %p315 = pneg %p48
        %p316 = pneg %p45
        %p317 = scmp.lt.s32.totalorder %s27, 1
        %s318 = scalar_select %p317, %s27, 1
        %s319 = smul.addr %s318, 16
        %s320 = smul.addr %s319, 8
        %s321 = scalar_lea.vmem %s1, %s320
        %p322 = pneg %p74
        %p323 = pneg %p71
        %p324 = pneg %p95
        %p325 = pneg %p92
        %p326 = pneg %p116
        %p327 = pneg %p113
        %p328 = pneg %p137
        %p329 = pneg %p134
        %p330 = pneg %p158
        %p331 = pneg %p155
        %p332 = pneg %p179
        %p333 = pneg %p176
        %p334 = pneg %p200
        %p335 = pneg %p197
        %p336 = pneg %p226
        %p337 = pneg %p223
        %s338 = sand.u32 %s213, 1
        %s339 = scalar_lea.sflag [#allocation3], %s338
        %s340 = sand.u32 %s213, 1
        %s341 = smul.addr %s340, 12
        %s342 = scalar_lea.vmem [#allocation2], %s341
        %p343 = pneg %p252
        %p344 = pneg %p249
        %s345 = sand.u32 %s239, 1
        %s346 = scalar_lea.sflag [#allocation5], %s345
        %s347 = sand.u32 %s239, 1
        %s348 = smul.addr %s347, 12
        %s349 = scalar_lea.vmem [#allocation4], %s348
        %p350 = scmp.lt.s32.totalorder %s27, 1
        %s351 = scalar_select %p350, %s27, 1
        %s352 = smul.addr %s351, 4
        %s353 = scalar_lea.vmem %s0, %s352
        %p354 = scmp.lt.s32.totalorder %s27, 1
        %s355 = scalar_select %p354, %s27, 1
        %s356 = smul.addr %s355, 16
        %s357 = smul.addr %s356, 8
        %s358 = scalar_lea.vmem %s1, %s357
        %v359 = vld [vmem:[%s353] sm:$0xf]
        %v360 = vld [vmem:[%s358] sm:$0xff]
        %v361 = vld [vmem:[%s358 + $0x8] sm:$0xff]
        %v362 = vld [vmem:[%s358 + $0x10] sm:$0xff]
        %v363 = vld [vmem:[%s358 + $0x18] sm:$0xff]
        %v364 = vld [vmem:[%s358 + $0x20] sm:$0xff]
        %v365 = vld [vmem:[%s358 + $0x28] sm:$0xff]
        %v366 = vld [vmem:[%s358 + $0x30] sm:$0xff]
        %v367 = vld [vmem:[%s358 + $0x38] sm:$0xff]
        %v368 = vld [vmem:[%s358 + $0x40] sm:$0xff]
        %v369 = vld [vmem:[%s358 + $0x48] sm:$0xff]
        %v370 = vld [vmem:[%s358 + $0x50] sm:$0xff]
        %v371 = vld [vmem:[%s358 + $0x58] sm:$0xff]
        %v372 = vld [vmem:[%s358 + $0x60] sm:$0xff]
        %v373 = vld [vmem:[%s358 + $0x68] sm:$0xff]
        %v374 = vld [vmem:[%s358 + $0x70] sm:$0xff]
        %v375 = vld [vmem:[%s358 + $0x78] sm:$0x1]
        %v376 = vld [vmem:[%s2] sm:$0xf]
        %v377 = vld [vmem:[%s2 + $0x4] sm:$0xf]
        %v378 = vld [vmem:[%s2 + $0x8] sm:$0xf]
        %v379 = vld [vmem:[%s3] sm:$0xff]
        %v380 = vld [vmem:[%s3 + $0x8] sm:$0xff]
        %v381 = vld [vmem:[%s3 + $0x10] sm:$0xff]
        %v382 = vld [vmem:[%s3 + $0x18] sm:$0xff]
        %v383 = vld [vmem:[%s3 + $0x20] sm:$0xff]
        %v384 = vld [vmem:[%s3 + $0x28] sm:$0xff]
        %v385 = vld [vmem:[%s3 + $0x30] sm:$0xff]
        %v386 = vld [vmem:[%s3 + $0x38] sm:$0xff]
        %v387 = vld [vmem:[%s3 + $0x40] sm:$0xff]
        %v388 = vld [vmem:[%s3 + $0x48] sm:$0xff]
        %v389 = vld [vmem:[%s3 + $0x50] sm:$0xff]
        %v390 = vld [vmem:[%s3 + $0x58] sm:$0xff]
        %v391 = vld [vmem:[%s3 + $0x60] sm:$0xff]
        %v392 = vld [vmem:[%s3 + $0x68] sm:$0xff]
        %v393 = vld [vmem:[%s3 + $0x70] sm:$0xff]
        %v394 = vld [vmem:[%s3 + $0x78] sm:$0x1]
        %v395 = vld [vmem:[%s3 + $0x80] sm:$0xff]
        %v396 = vld [vmem:[%s3 + $0x88] sm:$0xff]
        %v397 = vld [vmem:[%s3 + $0x90] sm:$0xff]
        %v398 = vld [vmem:[%s3 + $0x98] sm:$0xff]
        %v399 = vld [vmem:[%s3 + $0xa0] sm:$0xff]
        %v400 = vld [vmem:[%s3 + $0xa8] sm:$0xff]
        %v401 = vld [vmem:[%s3 + $0xb0] sm:$0xff]
        %v402 = vld [vmem:[%s3 + $0xb8] sm:$0xff]
        %v403 = vld [vmem:[%s3 + $0xc0] sm:$0xff]
        %v404 = vld [vmem:[%s3 + $0xc8] sm:$0xff]
        %v405 = vld [vmem:[%s3 + $0xd0] sm:$0xff]
        %v406 = vld [vmem:[%s3 + $0xd8] sm:$0xff]
        %v407 = vld [vmem:[%s3 + $0xe0] sm:$0xff]
        %v408 = vld [vmem:[%s3 + $0xe8] sm:$0xff]
        %v409 = vld [vmem:[%s3 + $0xf0] sm:$0xff]
        %v410 = vld [vmem:[%s3 + $0xf8] sm:$0x1]
        %v411 = vld [vmem:[%s3 + $0x100] sm:$0xff]
        %v412 = vld [vmem:[%s3 + $0x108] sm:$0xff]
        %v413 = vld [vmem:[%s3 + $0x110] sm:$0xff]
        %v414 = vld [vmem:[%s3 + $0x118] sm:$0xff]
        %v415 = vld [vmem:[%s3 + $0x120] sm:$0xff]
        %v416 = vld [vmem:[%s3 + $0x128] sm:$0xff]
        %v417 = vld [vmem:[%s3 + $0x130] sm:$0xff]
        %v418 = vld [vmem:[%s3 + $0x138] sm:$0xff]
        %v419 = vld [vmem:[%s3 + $0x140] sm:$0xff]
        %v420 = vld [vmem:[%s3 + $0x148] sm:$0xff]
        %v421 = vld [vmem:[%s3 + $0x150] sm:$0xff]
        %v422 = vld [vmem:[%s3 + $0x158] sm:$0xff]
        %v423 = vld [vmem:[%s3 + $0x160] sm:$0xff]
        %v424 = vld [vmem:[%s3 + $0x168] sm:$0xff]
        %v425 = vld [vmem:[%s3 + $0x170] sm:$0xff]
        %v426 = vld [vmem:[%s3 + $0x178] sm:$0x1]
        %v427 = vld [vmem:[%s4] sm:$0xff]
        %v428 = vld [vmem:[%s4 + $0x8] sm:$0x7]
        %v429 = vld [vmem:[%s5] sm:$0x1]
        %v430 = vld [vmem:[%s6] sm:$0xff]
        %v431 = vld [vmem:[%s6 + $0x8] sm:$0x7]
        %v432 = vld [vmem:[%s7] sm:$0x1]
        %v433 = vmul.f32 %v360, %v360
        %v434 = vmul.f32 %v361, %v361
        %v435 = vmul.f32 %v362, %v362
        %v436 = vmul.f32 %v363, %v363
        %v437 = vmul.f32 %v364, %v364
        %v438 = vmul.f32 %v365, %v365
        %v439 = vmul.f32 %v366, %v366
        %v440 = vmul.f32 %v367, %v367
        %v441 = vmul.f32 %v368, %v368
        %v442 = vmul.f32 %v369, %v369
        %v443 = vmul.f32 %v370, %v370
        %v444 = vmul.f32 %v371, %v371
        %v445 = vmul.f32 %v372, %v372
        %v446 = vmul.f32 %v373, %v373
        %v447 = vmul.f32 %v374, %v374
        %v448 = vmul.f32 %v375, %v375
        %vm449 = vcmask 31744
        %v450 = vsel %vm449, %v433, 0.0
        %451 = vadd.xlane.f32.xlu0 %v450
        %v452 = vpop.xlane.xlu0 %451
        %v453 = vsel %vm449, %v434, 0.0
        %454 = vadd.xlane.f32.xlu0 %v453
        %v455 = vpop.xlane.xlu0 %454
        %v456 = vsel %vm449, %v435, 0.0
        %457 = vadd.xlane.f32.xlu0 %v456
        %v458 = vpop.xlane.xlu0 %457
        %v459 = vsel %vm449, %v436, 0.0
        %460 = vadd.xlane.f32.xlu0 %v459
        %v461 = vpop.xlane.xlu0 %460
        %v462 = vsel %vm449, %v437, 0.0
        %463 = vadd.xlane.f32.xlu0 %v462
        %v464 = vpop.xlane.xlu0 %463
        %v465 = vsel %vm449, %v438, 0.0
        %466 = vadd.xlane.f32.xlu0 %v465
        %v467 = vpop.xlane.xlu0 %466
        %v468 = vsel %vm449, %v439, 0.0
        %469 = vadd.xlane.f32.xlu0 %v468
        %v470 = vpop.xlane.xlu0 %469
        %v471 = vsel %vm449, %v440, 0.0
        %472 = vadd.xlane.f32.xlu0 %v471
        %v473 = vpop.xlane.xlu0 %472
        %v474 = vsel %vm449, %v441, 0.0
        %475 = vadd.xlane.f32.xlu0 %v474
        %v476 = vpop.xlane.xlu0 %475
        %v477 = vsel %vm449, %v442, 0.0
        %478 = vadd.xlane.f32.xlu0 %v477
        %v479 = vpop.xlane.xlu0 %478
        %v480 = vsel %vm449, %v443, 0.0
        %481 = vadd.xlane.f32.xlu0 %v480
        %v482 = vpop.xlane.xlu0 %481
        %v483 = vsel %vm449, %v444, 0.0
        %484 = vadd.xlane.f32.xlu0 %v483
        %v485 = vpop.xlane.xlu0 %484
        %v486 = vsel %vm449, %v445, 0.0
        %487 = vadd.xlane.f32.xlu0 %v486
        %v488 = vpop.xlane.xlu0 %487
        %v489 = vsel %vm449, %v446, 0.0
        %490 = vadd.xlane.f32.xlu0 %v489
        %v491 = vpop.xlane.xlu0 %490
        %v492 = vsel %vm449, %v447, 0.0
        %493 = vadd.xlane.f32.xlu0 %v492
        %v494 = vpop.xlane.xlu0 %493
        %vm495 = vcmask 24576
        %v496 = vsel %vm495, %v448, 0.0
        %497 = vadd.xlane.f32.xlu0 %v496
        %v498 = vpop.xlane.xlu0 %497
        %v499 = vrsqrt.pop %v452
        %v500 = vmul.f32 %v499, %v452
        %v501 = vmul.f32 %v500, %v499
        %v502 = vmul.f32 0.5, %v501
        %v503 = vsub.f32 1.5, %v502
        %v504 = vmul.f32 %v499, %v503
        %v505 = vmul.f32 %v452, %v504
        %vm506 = vcmp.eq.f32.partialorder %v452, inf
        %v507 = vsel %vm506, %v452, %v505
        %vm508 = vcmp.eq.f32.partialorder %v452, 0.0
        %v509 = vand.u32 %v452, 2147483648
        %v510 = vsel %vm508, %v509, %v507
        %v511 = vrsqrt.pop %v455
        %v512 = vmul.f32 %v511, %v455
        %v513 = vmul.f32 %v512, %v511
        %v514 = vmul.f32 0.5, %v513
        %v515 = vsub.f32 1.5, %v514
        %v516 = vmul.f32 %v511, %v515
        %v517 = vmul.f32 %v455, %v516
        %vm518 = vcmp.eq.f32.partialorder %v455, inf
        %v519 = vsel %vm518, %v455, %v517
        %vm520 = vcmp.eq.f32.partialorder %v455, 0.0
        %v521 = vand.u32 %v455, 2147483648
        %v522 = vsel %vm520, %v521, %v519
        %v523 = vrsqrt.pop %v458
        %v524 = vmul.f32 %v523, %v458
        %v525 = vmul.f32 %v524, %v523
        %v526 = vmul.f32 0.5, %v525
        %v527 = vsub.f32 1.5, %v526
        %v528 = vmul.f32 %v523, %v527
        %v529 = vmul.f32 %v458, %v528
        %vm530 = vcmp.eq.f32.partialorder %v458, inf
        %v531 = vsel %vm530, %v458, %v529
        %vm532 = vcmp.eq.f32.partialorder %v458, 0.0
        %v533 = vand.u32 %v458, 2147483648
        %v534 = vsel %vm532, %v533, %v531
        %v535 = vrsqrt.pop %v461
        %v536 = vmul.f32 %v535, %v461
        %v537 = vmul.f32 %v536, %v535
        %v538 = vmul.f32 0.5, %v537
        %v539 = vsub.f32 1.5, %v538
        %v540 = vmul.f32 %v535, %v539
        %v541 = vmul.f32 %v461, %v540
        %vm542 = vcmp.eq.f32.partialorder %v461, inf
        %v543 = vsel %vm542, %v461, %v541
        %vm544 = vcmp.eq.f32.partialorder %v461, 0.0
        %v545 = vand.u32 %v461, 2147483648
        %v546 = vsel %vm544, %v545, %v543
        %v547 = vrsqrt.pop %v464
        %v548 = vmul.f32 %v547, %v464
        %v549 = vmul.f32 %v548, %v547
        %v550 = vmul.f32 0.5, %v549
        %v551 = vsub.f32 1.5, %v550
        %v552 = vmul.f32 %v547, %v551
        %v553 = vmul.f32 %v464, %v552
        %vm554 = vcmp.eq.f32.partialorder %v464, inf
        %v555 = vsel %vm554, %v464, %v553
        %vm556 = vcmp.eq.f32.partialorder %v464, 0.0
        %v557 = vand.u32 %v464, 2147483648
        %v558 = vsel %vm556, %v557, %v555
        %v559 = vrsqrt.pop %v467
        %v560 = vmul.f32 %v559, %v467
        %v561 = vmul.f32 %v560, %v559
        %v562 = vmul.f32 0.5, %v561
        %v563 = vsub.f32 1.5, %v562
        %v564 = vmul.f32 %v559, %v563
        %v565 = vmul.f32 %v467, %v564
        %vm566 = vcmp.eq.f32.partialorder %v467, inf
        %v567 = vsel %vm566, %v467, %v565
        %vm568 = vcmp.eq.f32.partialorder %v467, 0.0
        %v569 = vand.u32 %v467, 2147483648
        %v570 = vsel %vm568, %v569, %v567
        %v571 = vrsqrt.pop %v470
        %v572 = vmul.f32 %v571, %v470
        %v573 = vmul.f32 %v572, %v571
        %v574 = vmul.f32 0.5, %v573
        %v575 = vsub.f32 1.5, %v574
        %v576 = vmul.f32 %v571, %v575
        %v577 = vmul.f32 %v470, %v576
        %vm578 = vcmp.eq.f32.partialorder %v470, inf
        %v579 = vsel %vm578, %v470, %v577
        %vm580 = vcmp.eq.f32.partialorder %v470, 0.0
        %v581 = vand.u32 %v470, 2147483648
        %v582 = vsel %vm580, %v581, %v579
        %v583 = vrsqrt.pop %v473
        %v584 = vmul.f32 %v583, %v473
        %v585 = vmul.f32 %v584, %v583
        %v586 = vmul.f32 0.5, %v585
        %v587 = vsub.f32 1.5, %v586
        %v588 = vmul.f32 %v583, %v587
        %v589 = vmul.f32 %v473, %v588
        %vm590 = vcmp.eq.f32.partialorder %v473, inf
        %v591 = vsel %vm590, %v473, %v589
        %vm592 = vcmp.eq.f32.partialorder %v473, 0.0
        %v593 = vand.u32 %v473, 2147483648
        %v594 = vsel %vm592, %v593, %v591
        %v595 = vrsqrt.pop %v476
        %v596 = vmul.f32 %v595, %v476
        %v597 = vmul.f32 %v596, %v595
        %v598 = vmul.f32 0.5, %v597
        %v599 = vsub.f32 1.5, %v598
        %v600 = vmul.f32 %v595, %v599
        %v601 = vmul.f32 %v476, %v600
        %vm602 = vcmp.eq.f32.partialorder %v476, inf
        %v603 = vsel %vm602, %v476, %v601
        %vm604 = vcmp.eq.f32.partialorder %v476, 0.0
        %v605 = vand.u32 %v476, 2147483648
        %v606 = vsel %vm604, %v605, %v603
        %v607 = vrsqrt.pop %v479
        %v608 = vmul.f32 %v607, %v479
        %v609 = vmul.f32 %v608, %v607
        %v610 = vmul.f32 0.5, %v609
        %v611 = vsub.f32 1.5, %v610
        %v612 = vmul.f32 %v607, %v611
        %v613 = vmul.f32 %v479, %v612
        %vm614 = vcmp.eq.f32.partialorder %v479, inf
        %v615 = vsel %vm614, %v479, %v613
        %vm616 = vcmp.eq.f32.partialorder %v479, 0.0
        %v617 = vand.u32 %v479, 2147483648
        %v618 = vsel %vm616, %v617, %v615
        %v619 = vrsqrt.pop %v482
        %v620 = vmul.f32 %v619, %v482
        %v621 = vmul.f32 %v620, %v619
        %v622 = vmul.f32 0.5, %v621
        %v623 = vsub.f32 1.5, %v622
        %v624 = vmul.f32 %v619, %v623
        %v625 = vmul.f32 %v482, %v624
        %vm626 = vcmp.eq.f32.partialorder %v482, inf
        %v627 = vsel %vm626, %v482, %v625
        %vm628 = vcmp.eq.f32.partialorder %v482, 0.0
        %v629 = vand.u32 %v482, 2147483648
        %v630 = vsel %vm628, %v629, %v627
        %v631 = vrsqrt.pop %v485
        %v632 = vmul.f32 %v631, %v485
        %v633 = vmul.f32 %v632, %v631
        %v634 = vmul.f32 0.5, %v633
        %v635 = vsub.f32 1.5, %v634
        %v636 = vmul.f32 %v631, %v635
        %v637 = vmul.f32 %v485, %v636
        %vm638 = vcmp.eq.f32.partialorder %v485, inf
        %v639 = vsel %vm638, %v485, %v637
        %vm640 = vcmp.eq.f32.partialorder %v485, 0.0
        %v641 = vand.u32 %v485, 2147483648
        %v642 = vsel %vm640, %v641, %v639
        %v643 = vrsqrt.pop %v488
        %v644 = vmul.f32 %v643, %v488
        %v645 = vmul.f32 %v644, %v643
        %v646 = vmul.f32 0.5, %v645
        %v647 = vsub.f32 1.5, %v646
        %v648 = vmul.f32 %v643, %v647
        %v649 = vmul.f32 %v488, %v648
        %vm650 = vcmp.eq.f32.partialorder %v488, inf
        %v651 = vsel %vm650, %v488, %v649
        %vm652 = vcmp.eq.f32.partialorder %v488, 0.0
        %v653 = vand.u32 %v488, 2147483648
        %v654 = vsel %vm652, %v653, %v651
        %v655 = vrsqrt.pop %v491
        %v656 = vmul.f32 %v655, %v491
        %v657 = vmul.f32 %v656, %v655
        %v658 = vmul.f32 0.5, %v657
        %v659 = vsub.f32 1.5, %v658
        %v660 = vmul.f32 %v655, %v659
        %v661 = vmul.f32 %v491, %v660
        %vm662 = vcmp.eq.f32.partialorder %v491, inf
        %v663 = vsel %vm662, %v491, %v661
        %vm664 = vcmp.eq.f32.partialorder %v491, 0.0
        %v665 = vand.u32 %v491, 2147483648
        %v666 = vsel %vm664, %v665, %v663
        %v667 = vrsqrt.pop %v494
        %v668 = vmul.f32 %v667, %v494
        %v669 = vmul.f32 %v668, %v667
        %v670 = vmul.f32 0.5, %v669
        %v671 = vsub.f32 1.5, %v670
        %v672 = vmul.f32 %v667, %v671
        %v673 = vmul.f32 %v494, %v672
        %vm674 = vcmp.eq.f32.partialorder %v494, inf
        %v675 = vsel %vm674, %v494, %v673
        %vm676 = vcmp.eq.f32.partialorder %v494, 0.0
        %v677 = vand.u32 %v494, 2147483648
        %v678 = vsel %vm676, %v677, %v675
        %v679 = vrsqrt.pop %v498
        %v680 = vmul.f32 %v679, %v498
        %v681 = vmul.f32 %v680, %v679
        %v682 = vmul.f32 0.5, %v681
        %v683 = vsub.f32 1.5, %v682
        %v684 = vmul.f32 %v679, %v683
        %v685 = vmul.f32 %v498, %v684
        %vm686 = vcmp.eq.f32.partialorder %v498, inf
        %v687 = vsel %vm686, %v498, %v685
        %vm688 = vcmp.eq.f32.partialorder %v498, 0.0
        %v689 = vand.u32 %v498, 2147483648
        %v690 = vsel %vm688, %v689, %v687
        %v691 = vmax.f32 %v510, 1e-12
        %v692 = vmax.f32 %v522, 1e-12
        %v693 = vmax.f32 %v534, 1e-12
        %v694 = vmax.f32 %v546, 1e-12
        %v695 = vmax.f32 %v558, 1e-12
        %v696 = vmax.f32 %v570, 1e-12
        %v697 = vmax.f32 %v582, 1e-12
        %v698 = vmax.f32 %v594, 1e-12
        %v699 = vmax.f32 %v606, 1e-12
        %v700 = vmax.f32 %v618, 1e-12
        %v701 = vmax.f32 %v630, 1e-12
        %v702 = vmax.f32 %v642, 1e-12
        %v703 = vmax.f32 %v654, 1e-12
        %v704 = vmax.f32 %v666, 1e-12
        %v705 = vmax.f32 %v678, 1e-12
        %v706 = vmax.f32 %v690, 1e-12
        %v707 = vrcp.pop %v691
        %v708 = vmul.f32 %v691, %v707
        %v709 = vsub.f32 1.0, %v708
        %v710 = vmul.f32 %v707, %v709
        %v711 = vadd.f32 %v707, %v710
        %vm712 = vweird.f32 %v691
        %vm713 = vweird.f32 %v707
        %vm714 = vmor %vm712, %vm713
        %v715 = vsel %vm714, %v707, %v711
        %v716 = vand.u32 2147483647, %v691
        %vm717 = vcmp.eq.f32.partialorder %v716, 8.507059e+37
        %v718 = vand.u32 %v691, 2147483648
        %v719 = vor.u32 1.1754944e-38, %v718
        %v720 = vsel %vm717, %v719, %v715
        %v721 = vmul.f32 %v360, %v720
        %v722 = vrcp.pop %v692
        %v723 = vmul.f32 %v692, %v722
        %v724 = vsub.f32 1.0, %v723
        %v725 = vmul.f32 %v722, %v724
        %v726 = vadd.f32 %v722, %v725
        %vm727 = vweird.f32 %v692
        %vm728 = vweird.f32 %v722
        %vm729 = vmor %vm727, %vm728
        %v730 = vsel %vm729, %v722, %v726
        %v731 = vand.u32 2147483647, %v692
        %vm732 = vcmp.eq.f32.partialorder %v731, 8.507059e+37
        %v733 = vand.u32 %v692, 2147483648
        %v734 = vor.u32 1.1754944e-38, %v733
        %v735 = vsel %vm732, %v734, %v730
        %v736 = vmul.f32 %v361, %v735
        %v737 = vrcp.pop %v693
        %v738 = vmul.f32 %v693, %v737
        %v739 = vsub.f32 1.0, %v738
        %v740 = vmul.f32 %v737, %v739
        %v741 = vadd.f32 %v737, %v740
        %vm742 = vweird.f32 %v693
        %vm743 = vweird.f32 %v737
        %vm744 = vmor %vm742, %vm743
        %v745 = vsel %vm744, %v737, %v741
        %v746 = vand.u32 2147483647, %v693
        %vm747 = vcmp.eq.f32.partialorder %v746, 8.507059e+37
        %v748 = vand.u32 %v693, 2147483648
        %v749 = vor.u32 1.1754944e-38, %v748
        %v750 = vsel %vm747, %v749, %v745
        %v751 = vmul.f32 %v362, %v750
        %v752 = vrcp.pop %v694
        %v753 = vmul.f32 %v694, %v752
        %v754 = vsub.f32 1.0, %v753
        %v755 = vmul.f32 %v752, %v754
        %v756 = vadd.f32 %v752, %v755
        %vm757 = vweird.f32 %v694
        %vm758 = vweird.f32 %v752
        %vm759 = vmor %vm757, %vm758
        %v760 = vsel %vm759, %v752, %v756
        %v761 = vand.u32 2147483647, %v694
        %vm762 = vcmp.eq.f32.partialorder %v761, 8.507059e+37
        %v763 = vand.u32 %v694, 2147483648
        %v764 = vor.u32 1.1754944e-38, %v763
        %v765 = vsel %vm762, %v764, %v760
        %v766 = vmul.f32 %v363, %v765
        %v767 = vrcp.pop %v695
        %v768 = vmul.f32 %v695, %v767
        %v769 = vsub.f32 1.0, %v768
        %v770 = vmul.f32 %v767, %v769
        %v771 = vadd.f32 %v767, %v770
        %vm772 = vweird.f32 %v695
        %vm773 = vweird.f32 %v767
        %vm774 = vmor %vm772, %vm773
        %v775 = vsel %vm774, %v767, %v771
        %v776 = vand.u32 2147483647, %v695
        %vm777 = vcmp.eq.f32.partialorder %v776, 8.507059e+37
        %v778 = vand.u32 %v695, 2147483648
        %v779 = vor.u32 1.1754944e-38, %v778
        %v780 = vsel %vm777, %v779, %v775
        %v781 = vmul.f32 %v364, %v780
        %v782 = vrcp.pop %v696
        %v783 = vmul.f32 %v696, %v782
        %v784 = vsub.f32 1.0, %v783
        %v785 = vmul.f32 %v782, %v784
        %v786 = vadd.f32 %v782, %v785
        %vm787 = vweird.f32 %v696
        %vm788 = vweird.f32 %v782
        %vm789 = vmor %vm787, %vm788
        %v790 = vsel %vm789, %v782, %v786
        %v791 = vand.u32 2147483647, %v696
        %vm792 = vcmp.eq.f32.partialorder %v791, 8.507059e+37
        %v793 = vand.u32 %v696, 2147483648
        %v794 = vor.u32 1.1754944e-38, %v793
        %v795 = vsel %vm792, %v794, %v790
        %v796 = vmul.f32 %v365, %v795
        %v797 = vrcp.pop %v697
        %v798 = vmul.f32 %v697, %v797
        %v799 = vsub.f32 1.0, %v798
        %v800 = vmul.f32 %v797, %v799
        %v801 = vadd.f32 %v797, %v800
        %vm802 = vweird.f32 %v697
        %vm803 = vweird.f32 %v797
        %vm804 = vmor %vm802, %vm803
        %v805 = vsel %vm804, %v797, %v801
        %v806 = vand.u32 2147483647, %v697
        %vm807 = vcmp.eq.f32.partialorder %v806, 8.507059e+37
        %v808 = vand.u32 %v697, 2147483648
        %v809 = vor.u32 1.1754944e-38, %v808
        %v810 = vsel %vm807, %v809, %v805
        %v811 = vmul.f32 %v366, %v810
        %v812 = vrcp.pop %v698
        %v813 = vmul.f32 %v698, %v812
        %v814 = vsub.f32 1.0, %v813
        %v815 = vmul.f32 %v812, %v814
        %v816 = vadd.f32 %v812, %v815
        %vm817 = vweird.f32 %v698
        %vm818 = vweird.f32 %v812
        %vm819 = vmor %vm817, %vm818
        %v820 = vsel %vm819, %v812, %v816
        %v821 = vand.u32 2147483647, %v698
        %vm822 = vcmp.eq.f32.partialorder %v821, 8.507059e+37
        %v823 = vand.u32 %v698, 2147483648
        %v824 = vor.u32 1.1754944e-38, %v823
        %v825 = vsel %vm822, %v824, %v820
        %v826 = vmul.f32 %v367, %v825
        %v827 = vrcp.pop %v699
        %v828 = vmul.f32 %v699, %v827
        %v829 = vsub.f32 1.0, %v828
        %v830 = vmul.f32 %v827, %v829
        %v831 = vadd.f32 %v827, %v830
        %vm832 = vweird.f32 %v699
        %vm833 = vweird.f32 %v827
        %vm834 = vmor %vm832, %vm833
        %v835 = vsel %vm834, %v827, %v831
        %v836 = vand.u32 2147483647, %v699
        %vm837 = vcmp.eq.f32.partialorder %v836, 8.507059e+37
        %v838 = vand.u32 %v699, 2147483648
        %v839 = vor.u32 1.1754944e-38, %v838
        %v840 = vsel %vm837, %v839, %v835
        %v841 = vmul.f32 %v368, %v840
        %v842 = vrcp.pop %v700
        %v843 = vmul.f32 %v700, %v842
        %v844 = vsub.f32 1.0, %v843
        %v845 = vmul.f32 %v842, %v844
        %v846 = vadd.f32 %v842, %v845
        %vm847 = vweird.f32 %v700
        %vm848 = vweird.f32 %v842
        %vm849 = vmor %vm847, %vm848
        %v850 = vsel %vm849, %v842, %v846
        %v851 = vand.u32 2147483647, %v700
        %vm852 = vcmp.eq.f32.partialorder %v851, 8.507059e+37
        %v853 = vand.u32 %v700, 2147483648
        %v854 = vor.u32 1.1754944e-38, %v853
        %v855 = vsel %vm852, %v854, %v850
        %v856 = vmul.f32 %v369, %v855
        %v857 = vrcp.pop %v701
        %v858 = vmul.f32 %v701, %v857
        %v859 = vsub.f32 1.0, %v858
        %v860 = vmul.f32 %v857, %v859
        %v861 = vadd.f32 %v857, %v860
        %vm862 = vweird.f32 %v701
        %vm863 = vweird.f32 %v857
        %vm864 = vmor %vm862, %vm863
        %v865 = vsel %vm864, %v857, %v861
        %v866 = vand.u32 2147483647, %v701
        %vm867 = vcmp.eq.f32.partialorder %v866, 8.507059e+37
        %v868 = vand.u32 %v701, 2147483648
        %v869 = vor.u32 1.1754944e-38, %v868
        %v870 = vsel %vm867, %v869, %v865
        %v871 = vmul.f32 %v370, %v870
        %v872 = vrcp.pop %v702
        %v873 = vmul.f32 %v702, %v872
        %v874 = vsub.f32 1.0, %v873
        %v875 = vmul.f32 %v872, %v874
        %v876 = vadd.f32 %v872, %v875
        %vm877 = vweird.f32 %v702
        %vm878 = vweird.f32 %v872
        %vm879 = vmor %vm877, %vm878
        %v880 = vsel %vm879, %v872, %v876
        %v881 = vand.u32 2147483647, %v702
        %vm882 = vcmp.eq.f32.partialorder %v881, 8.507059e+37
        %v883 = vand.u32 %v702, 2147483648
        %v884 = vor.u32 1.1754944e-38, %v883
        %v885 = vsel %vm882, %v884, %v880
        %v886 = vmul.f32 %v371, %v885
        %v887 = vrcp.pop %v703
        %v888 = vmul.f32 %v703, %v887
        %v889 = vsub.f32 1.0, %v888
        %v890 = vmul.f32 %v887, %v889
        %v891 = vadd.f32 %v887, %v890
        %vm892 = vweird.f32 %v703
        %vm893 = vweird.f32 %v887
        %vm894 = vmor %vm892, %vm893
        %v895 = vsel %vm894, %v887, %v891
        %v896 = vand.u32 2147483647, %v703
        %vm897 = vcmp.eq.f32.partialorder %v896, 8.507059e+37
        %v898 = vand.u32 %v703, 2147483648
        %v899 = vor.u32 1.1754944e-38, %v898
        %v900 = vsel %vm897, %v899, %v895
        %v901 = vmul.f32 %v372, %v900
        %v902 = vrcp.pop %v704
        %v903 = vmul.f32 %v704, %v902
        %v904 = vsub.f32 1.0, %v903
        %v905 = vmul.f32 %v902, %v904
        %v906 = vadd.f32 %v902, %v905
        %vm907 = vweird.f32 %v704
        %vm908 = vweird.f32 %v902
        %vm909 = vmor %vm907, %vm908
        %v910 = vsel %vm909, %v902, %v906
        %v911 = vand.u32 2147483647, %v704
        %vm912 = vcmp.eq.f32.partialorder %v911, 8.507059e+37
        %v913 = vand.u32 %v704, 2147483648
        %v914 = vor.u32 1.1754944e-38, %v913
        %v915 = vsel %vm912, %v914, %v910
        %v916 = vmul.f32 %v373, %v915
        %v917 = vrcp.pop %v705
        %v918 = vmul.f32 %v705, %v917
        %v919 = vsub.f32 1.0, %v918
        %v920 = vmul.f32 %v917, %v919
        %v921 = vadd.f32 %v917, %v920
        %vm922 = vweird.f32 %v705
        %vm923 = vweird.f32 %v917
        %vm924 = vmor %vm922, %vm923
        %v925 = vsel %vm924, %v917, %v921
        %v926 = vand.u32 2147483647, %v705
        %vm927 = vcmp.eq.f32.partialorder %v926, 8.507059e+37
        %v928 = vand.u32 %v705, 2147483648
        %v929 = vor.u32 1.1754944e-38, %v928
        %v930 = vsel %vm927, %v929, %v925
        %v931 = vmul.f32 %v374, %v930
        %v932 = vrcp.pop %v706
        %v933 = vmul.f32 %v706, %v932
        %v934 = vsub.f32 1.0, %v933
        %v935 = vmul.f32 %v932, %v934
        %v936 = vadd.f32 %v932, %v935
        %vm937 = vweird.f32 %v706
        %vm938 = vweird.f32 %v932
        %vm939 = vmor %vm937, %vm938
        %v940 = vsel %vm939, %v932, %v936
        %v941 = vand.u32 2147483647, %v706
        %vm942 = vcmp.eq.f32.partialorder %v941, 8.507059e+37
        %v943 = vand.u32 %v706, 2147483648
        %v944 = vor.u32 1.1754944e-38, %v943
        %v945 = vsel %vm942, %v944, %v940
        %v946 = vmul.f32 %v375, %v945
        %v947 = vmul.f32 %v379, %v379
        %v948 = vmul.f32 %v380, %v380
        %v949 = vmul.f32 %v381, %v381
        %v950 = vmul.f32 %v382, %v382
        %v951 = vmul.f32 %v383, %v383
        %v952 = vmul.f32 %v384, %v384
        %v953 = vmul.f32 %v385, %v385
        %v954 = vmul.f32 %v386, %v386
        %v955 = vmul.f32 %v387, %v387
        %v956 = vmul.f32 %v388, %v388
        %v957 = vmul.f32 %v389, %v389
        %v958 = vmul.f32 %v390, %v390
        %v959 = vmul.f32 %v391, %v391
        %v960 = vmul.f32 %v392, %v392
        %v961 = vmul.f32 %v393, %v393
        %v962 = vmul.f32 %v394, %v394
        %v963 = vmul.f32 %v395, %v395
        %v964 = vmul.f32 %v396, %v396
        %v965 = vmul.f32 %v397, %v397
        %v966 = vmul.f32 %v398, %v398
        %v967 = vmul.f32 %v399, %v399
        %v968 = vmul.f32 %v400, %v400
        %v969 = vmul.f32 %v401, %v401
        %v970 = vmul.f32 %v402, %v402
        %v971 = vmul.f32 %v403, %v403
        %v972 = vmul.f32 %v404, %v404
        %v973 = vmul.f32 %v405, %v405
        %v974 = vmul.f32 %v406, %v406
        %v975 = vmul.f32 %v407, %v407
        %v976 = vmul.f32 %v408, %v408
        %v977 = vmul.f32 %v409, %v409
        %v978 = vmul.f32 %v410, %v410
        %v979 = vmul.f32 %v411, %v411
        %v980 = vmul.f32 %v412, %v412
        %v981 = vmul.f32 %v413, %v413
        %v982 = vmul.f32 %v414, %v414
        %v983 = vmul.f32 %v415, %v415
        %v984 = vmul.f32 %v416, %v416
        %v985 = vmul.f32 %v417, %v417
        %v986 = vmul.f32 %v418, %v418
        %v987 = vmul.f32 %v419, %v419
        %v988 = vmul.f32 %v420, %v420
        %v989 = vmul.f32 %v421, %v421
        %v990 = vmul.f32 %v422, %v422
        %v991 = vmul.f32 %v423, %v423
        %v992 = vmul.f32 %v424, %v424
        %v993 = vmul.f32 %v425, %v425
        %v994 = vmul.f32 %v426, %v426
        %v995 = vsel %vm449, %v947, 0.0
        %996 = vadd.xlane.f32.xlu0 %v995
        %v997 = vpop.xlane.xlu0 %996
        %v998 = vsel %vm449, %v948, 0.0
        %999 = vadd.xlane.f32.xlu0 %v998
        %v1000 = vpop.xlane.xlu0 %999
        %v1001 = vsel %vm449, %v949, 0.0
        %1002 = vadd.xlane.f32.xlu0 %v1001
        %v1003 = vpop.xlane.xlu0 %1002
        %v1004 = vsel %vm449, %v950, 0.0
        %1005 = vadd.xlane.f32.xlu0 %v1004
        %v1006 = vpop.xlane.xlu0 %1005
        %v1007 = vsel %vm449, %v951, 0.0
        %1008 = vadd.xlane.f32.xlu0 %v1007
        %v1009 = vpop.xlane.xlu0 %1008
        %v1010 = vsel %vm449, %v952, 0.0
        %1011 = vadd.xlane.f32.xlu0 %v1010
        %v1012 = vpop.xlane.xlu0 %1011
        %v1013 = vsel %vm449, %v953, 0.0
        %1014 = vadd.xlane.f32.xlu0 %v1013
        %v1015 = vpop.xlane.xlu0 %1014
        %v1016 = vsel %vm449, %v954, 0.0
        %1017 = vadd.xlane.f32.xlu0 %v1016
        %v1018 = vpop.xlane.xlu0 %1017
        %v1019 = vsel %vm449, %v955, 0.0
        %1020 = vadd.xlane.f32.xlu0 %v1019
        %v1021 = vpop.xlane.xlu0 %1020
        %v1022 = vsel %vm449, %v956, 0.0
        %1023 = vadd.xlane.f32.xlu0 %v1022
        %v1024 = vpop.xlane.xlu0 %1023
        %v1025 = vsel %vm449, %v957, 0.0
        %1026 = vadd.xlane.f32.xlu0 %v1025
        %v1027 = vpop.xlane.xlu0 %1026
        %v1028 = vsel %vm449, %v958, 0.0
        %1029 = vadd.xlane.f32.xlu0 %v1028
        %v1030 = vpop.xlane.xlu0 %1029
        %v1031 = vsel %vm449, %v959, 0.0
        %1032 = vadd.xlane.f32.xlu0 %v1031
        %v1033 = vpop.xlane.xlu0 %1032
        %v1034 = vsel %vm449, %v960, 0.0
        %1035 = vadd.xlane.f32.xlu0 %v1034
        %v1036 = vpop.xlane.xlu0 %1035
        %v1037 = vsel %vm449, %v961, 0.0
        %1038 = vadd.xlane.f32.xlu0 %v1037
        %v1039 = vpop.xlane.xlu0 %1038
        %v1040 = vsel %vm495, %v962, 0.0
        %1041 = vadd.xlane.f32.xlu0 %v1040
        %v1042 = vpop.xlane.xlu0 %1041
        %v1043 = vsel %vm449, %v963, 0.0
        %1044 = vadd.xlane.f32.xlu0 %v1043
        %v1045 = vpop.xlane.xlu0 %1044
        %v1046 = vsel %vm449, %v964, 0.0
        %1047 = vadd.xlane.f32.xlu0 %v1046
        %v1048 = vpop.xlane.xlu0 %1047
        %v1049 = vsel %vm449, %v965, 0.0
        %1050 = vadd.xlane.f32.xlu0 %v1049
        %v1051 = vpop.xlane.xlu0 %1050
        %v1052 = vsel %vm449, %v966, 0.0
        %1053 = vadd.xlane.f32.xlu0 %v1052
        %v1054 = vpop.xlane.xlu0 %1053
        %v1055 = vsel %vm449, %v967, 0.0
        %1056 = vadd.xlane.f32.xlu0 %v1055
        %v1057 = vpop.xlane.xlu0 %1056
        %v1058 = vsel %vm449, %v968, 0.0
        %1059 = vadd.xlane.f32.xlu0 %v1058
        %v1060 = vpop.xlane.xlu0 %1059
        %v1061 = vsel %vm449, %v969, 0.0
        %1062 = vadd.xlane.f32.xlu0 %v1061
        %v1063 = vpop.xlane.xlu0 %1062
        %v1064 = vsel %vm449, %v970, 0.0
        %1065 = vadd.xlane.f32.xlu0 %v1064
        %v1066 = vpop.xlane.xlu0 %1065
        %v1067 = vsel %vm449, %v971, 0.0
        %1068 = vadd.xlane.f32.xlu0 %v1067
        %v1069 = vpop.xlane.xlu0 %1068
        %v1070 = vsel %vm449, %v972, 0.0
        %1071 = vadd.xlane.f32.xlu0 %v1070
        %v1072 = vpop.xlane.xlu0 %1071
        %v1073 = vsel %vm449, %v973, 0.0
        %1074 = vadd.xlane.f32.xlu0 %v1073
        %v1075 = vpop.xlane.xlu0 %1074
        %v1076 = vsel %vm449, %v974, 0.0
        %1077 = vadd.xlane.f32.xlu0 %v1076
        %v1078 = vpop.xlane.xlu0 %1077
        %v1079 = vsel %vm449, %v975, 0.0
        %1080 = vadd.xlane.f32.xlu0 %v1079
        %v1081 = vpop.xlane.xlu0 %1080
        %v1082 = vsel %vm449, %v976, 0.0
        %1083 = vadd.xlane.f32.xlu0 %v1082
        %v1084 = vpop.xlane.xlu0 %1083
        %v1085 = vsel %vm449, %v977, 0.0
        %1086 = vadd.xlane.f32.xlu0 %v1085
        %v1087 = vpop.xlane.xlu0 %1086
        %v1088 = vsel %vm495, %v978, 0.0
        %1089 = vadd.xlane.f32.xlu0 %v1088
        %v1090 = vpop.xlane.xlu0 %1089
        %v1091 = vsel %vm449, %v979, 0.0
        %1092 = vadd.xlane.f32.xlu0 %v1091
        %v1093 = vpop.xlane.xlu0 %1092
        %v1094 = vsel %vm449, %v980, 0.0
        %1095 = vadd.xlane.f32.xlu0 %v1094
        %v1096 = vpop.xlane.xlu0 %1095
        %v1097 = vsel %vm449, %v981, 0.0
        %1098 = vadd.xlane.f32.xlu0 %v1097
        %v1099 = vpop.xlane.xlu0 %1098
        %v1100 = vsel %vm449, %v982, 0.0
        %1101 = vadd.xlane.f32.xlu0 %v1100
        %v1102 = vpop.xlane.xlu0 %1101
        %v1103 = vsel %vm449, %v983, 0.0
        %1104 = vadd.xlane.f32.xlu0 %v1103
        %v1105 = vpop.xlane.xlu0 %1104
        %v1106 = vsel %vm449, %v984, 0.0
        %1107 = vadd.xlane.f32.xlu0 %v1106
        %v1108 = vpop.xlane.xlu0 %1107
        %v1109 = vsel %vm449, %v985, 0.0
        %1110 = vadd.xlane.f32.xlu0 %v1109
        %v1111 = vpop.xlane.xlu0 %1110
        %v1112 = vsel %vm449, %v986, 0.0
        %1113 = vadd.xlane.f32.xlu0 %v1112
        %v1114 = vpop.xlane.xlu0 %1113
        %v1115 = vsel %vm449, %v987, 0.0
        %1116 = vadd.xlane.f32.xlu0 %v1115
        %v1117 = vpop.xlane.xlu0 %1116
        %v1118 = vsel %vm449, %v988, 0.0
        %1119 = vadd.xlane.f32.xlu0 %v1118
        %v1120 = vpop.xlane.xlu0 %1119
        %v1121 = vsel %vm449, %v989, 0.0
        %1122 = vadd.xlane.f32.xlu0 %v1121
        %v1123 = vpop.xlane.xlu0 %1122
        %v1124 = vsel %vm449, %v990, 0.0
        %1125 = vadd.xlane.f32.xlu0 %v1124
        %v1126 = vpop.xlane.xlu0 %1125
        %v1127 = vsel %vm449, %v991, 0.0
        %1128 = vadd.xlane.f32.xlu0 %v1127
        %v1129 = vpop.xlane.xlu0 %1128
        %v1130 = vsel %vm449, %v992, 0.0
        %1131 = vadd.xlane.f32.xlu0 %v1130
        %v1132 = vpop.xlane.xlu0 %1131
        %v1133 = vsel %vm449, %v993, 0.0
        %1134 = vadd.xlane.f32.xlu0 %v1133
        %v1135 = vpop.xlane.xlu0 %1134
        %v1136 = vsel %vm495, %v994, 0.0
        %1137 = vadd.xlane.f32.xlu0 %v1136
        %v1138 = vpop.xlane.xlu0 %1137
        %v1139 = vrsqrt.pop %v997
        %v1140 = vmul.f32 %v1139, %v997
        %v1141 = vmul.f32 %v1140, %v1139
        %v1142 = vmul.f32 0.5, %v1141
        %v1143 = vsub.f32 1.5, %v1142
        %v1144 = vmul.f32 %v1139, %v1143
        %v1145 = vmul.f32 %v997, %v1144
        %vm1146 = vcmp.eq.f32.partialorder %v997, inf
        %v1147 = vsel %vm1146, %v997, %v1145
        %vm1148 = vcmp.eq.f32.partialorder %v997, 0.0
        %v1149 = vand.u32 %v997, 2147483648
        %v1150 = vsel %vm1148, %v1149, %v1147
        %v1151 = vrsqrt.pop %v1000
        %v1152 = vmul.f32 %v1151, %v1000
        %v1153 = vmul.f32 %v1152, %v1151
        %v1154 = vmul.f32 0.5, %v1153
        %v1155 = vsub.f32 1.5, %v1154
        %v1156 = vmul.f32 %v1151, %v1155
        %v1157 = vmul.f32 %v1000, %v1156
        %vm1158 = vcmp.eq.f32.partialorder %v1000, inf
        %v1159 = vsel %vm1158, %v1000, %v1157
        %vm1160 = vcmp.eq.f32.partialorder %v1000, 0.0
        %v1161 = vand.u32 %v1000, 2147483648
        %v1162 = vsel %vm1160, %v1161, %v1159
        %v1163 = vrsqrt.pop %v1003
        %v1164 = vmul.f32 %v1163, %v1003
        %v1165 = vmul.f32 %v1164, %v1163
        %v1166 = vmul.f32 0.5, %v1165
        %v1167 = vsub.f32 1.5, %v1166
        %v1168 = vmul.f32 %v1163, %v1167
        %v1169 = vmul.f32 %v1003, %v1168
        %vm1170 = vcmp.eq.f32.partialorder %v1003, inf
        %v1171 = vsel %vm1170, %v1003, %v1169
        %vm1172 = vcmp.eq.f32.partialorder %v1003, 0.0
        %v1173 = vand.u32 %v1003, 2147483648
        %v1174 = vsel %vm1172, %v1173, %v1171
        %v1175 = vrsqrt.pop %v1006
        %v1176 = vmul.f32 %v1175, %v1006
        %v1177 = vmul.f32 %v1176, %v1175
        %v1178 = vmul.f32 0.5, %v1177
        %v1179 = vsub.f32 1.5, %v1178
        %v1180 = vmul.f32 %v1175, %v1179
        %v1181 = vmul.f32 %v1006, %v1180
        %vm1182 = vcmp.eq.f32.partialorder %v1006, inf
        %v1183 = vsel %vm1182, %v1006, %v1181
        %vm1184 = vcmp.eq.f32.partialorder %v1006, 0.0
        %v1185 = vand.u32 %v1006, 2147483648
        %v1186 = vsel %vm1184, %v1185, %v1183
        %v1187 = vrsqrt.pop %v1009
        %v1188 = vmul.f32 %v1187, %v1009
        %v1189 = vmul.f32 %v1188, %v1187
        %v1190 = vmul.f32 0.5, %v1189
        %v1191 = vsub.f32 1.5, %v1190
        %v1192 = vmul.f32 %v1187, %v1191
        %v1193 = vmul.f32 %v1009, %v1192
        %vm1194 = vcmp.eq.f32.partialorder %v1009, inf
        %v1195 = vsel %vm1194, %v1009, %v1193
        %vm1196 = vcmp.eq.f32.partialorder %v1009, 0.0
        %v1197 = vand.u32 %v1009, 2147483648
        %v1198 = vsel %vm1196, %v1197, %v1195
        %v1199 = vrsqrt.pop %v1012
        %v1200 = vmul.f32 %v1199, %v1012
        %v1201 = vmul.f32 %v1200, %v1199
        %v1202 = vmul.f32 0.5, %v1201
        %v1203 = vsub.f32 1.5, %v1202
        %v1204 = vmul.f32 %v1199, %v1203
        %v1205 = vmul.f32 %v1012, %v1204
        %vm1206 = vcmp.eq.f32.partialorder %v1012, inf
        %v1207 = vsel %vm1206, %v1012, %v1205
        %vm1208 = vcmp.eq.f32.partialorder %v1012, 0.0
        %v1209 = vand.u32 %v1012, 2147483648
        %v1210 = vsel %vm1208, %v1209, %v1207
        %v1211 = vrsqrt.pop %v1015
        %v1212 = vmul.f32 %v1211, %v1015
        %v1213 = vmul.f32 %v1212, %v1211
        %v1214 = vmul.f32 0.5, %v1213
        %v1215 = vsub.f32 1.5, %v1214
        %v1216 = vmul.f32 %v1211, %v1215
        %v1217 = vmul.f32 %v1015, %v1216
        %vm1218 = vcmp.eq.f32.partialorder %v1015, inf
        %v1219 = vsel %vm1218, %v1015, %v1217
        %vm1220 = vcmp.eq.f32.partialorder %v1015, 0.0
        %v1221 = vand.u32 %v1015, 2147483648
        %v1222 = vsel %vm1220, %v1221, %v1219
        %v1223 = vrsqrt.pop %v1018
        %v1224 = vmul.f32 %v1223, %v1018
        %v1225 = vmul.f32 %v1224, %v1223
        %v1226 = vmul.f32 0.5, %v1225
        %v1227 = vsub.f32 1.5, %v1226
        %v1228 = vmul.f32 %v1223, %v1227
        %v1229 = vmul.f32 %v1018, %v1228
        %vm1230 = vcmp.eq.f32.partialorder %v1018, inf
        %v1231 = vsel %vm1230, %v1018, %v1229
        %vm1232 = vcmp.eq.f32.partialorder %v1018, 0.0
        %v1233 = vand.u32 %v1018, 2147483648
        %v1234 = vsel %vm1232, %v1233, %v1231
        %v1235 = vrsqrt.pop %v1021
        %v1236 = vmul.f32 %v1235, %v1021
        %v1237 = vmul.f32 %v1236, %v1235
        %v1238 = vmul.f32 0.5, %v1237
        %v1239 = vsub.f32 1.5, %v1238
        %v1240 = vmul.f32 %v1235, %v1239
        %v1241 = vmul.f32 %v1021, %v1240
        %vm1242 = vcmp.eq.f32.partialorder %v1021, inf
        %v1243 = vsel %vm1242, %v1021, %v1241
        %vm1244 = vcmp.eq.f32.partialorder %v1021, 0.0
        %v1245 = vand.u32 %v1021, 2147483648
        %v1246 = vsel %vm1244, %v1245, %v1243
        %v1247 = vrsqrt.pop %v1024
        %v1248 = vmul.f32 %v1247, %v1024
        %v1249 = vmul.f32 %v1248, %v1247
        %v1250 = vmul.f32 0.5, %v1249
        %v1251 = vsub.f32 1.5, %v1250
        %v1252 = vmul.f32 %v1247, %v1251
        %v1253 = vmul.f32 %v1024, %v1252
        %vm1254 = vcmp.eq.f32.partialorder %v1024, inf
        %v1255 = vsel %vm1254, %v1024, %v1253
        %vm1256 = vcmp.eq.f32.partialorder %v1024, 0.0
        %v1257 = vand.u32 %v1024, 2147483648
        %v1258 = vsel %vm1256, %v1257, %v1255
        %v1259 = vrsqrt.pop %v1027
        %v1260 = vmul.f32 %v1259, %v1027
        %v1261 = vmul.f32 %v1260, %v1259
        %v1262 = vmul.f32 0.5, %v1261
        %v1263 = vsub.f32 1.5, %v1262
        %v1264 = vmul.f32 %v1259, %v1263
        %v1265 = vmul.f32 %v1027, %v1264
        %vm1266 = vcmp.eq.f32.partialorder %v1027, inf
        %v1267 = vsel %vm1266, %v1027, %v1265
        %vm1268 = vcmp.eq.f32.partialorder %v1027, 0.0
        %v1269 = vand.u32 %v1027, 2147483648
        %v1270 = vsel %vm1268, %v1269, %v1267
        %v1271 = vrsqrt.pop %v1030
        %v1272 = vmul.f32 %v1271, %v1030
        %v1273 = vmul.f32 %v1272, %v1271
        %v1274 = vmul.f32 0.5, %v1273
        %v1275 = vsub.f32 1.5, %v1274
        %v1276 = vmul.f32 %v1271, %v1275
        %v1277 = vmul.f32 %v1030, %v1276
        %vm1278 = vcmp.eq.f32.partialorder %v1030, inf
        %v1279 = vsel %vm1278, %v1030, %v1277
        %vm1280 = vcmp.eq.f32.partialorder %v1030, 0.0
        %v1281 = vand.u32 %v1030, 2147483648
        %v1282 = vsel %vm1280, %v1281, %v1279
        %v1283 = vrsqrt.pop %v1033
        %v1284 = vmul.f32 %v1283, %v1033
        %v1285 = vmul.f32 %v1284, %v1283
        %v1286 = vmul.f32 0.5, %v1285
        %v1287 = vsub.f32 1.5, %v1286
        %v1288 = vmul.f32 %v1283, %v1287
        %v1289 = vmul.f32 %v1033, %v1288
        %vm1290 = vcmp.eq.f32.partialorder %v1033, inf
        %v1291 = vsel %vm1290, %v1033, %v1289
        %vm1292 = vcmp.eq.f32.partialorder %v1033, 0.0
        %v1293 = vand.u32 %v1033, 2147483648
        %v1294 = vsel %vm1292, %v1293, %v1291
        %v1295 = vrsqrt.pop %v1036
        %v1296 = vmul.f32 %v1295, %v1036
        %v1297 = vmul.f32 %v1296, %v1295
        %v1298 = vmul.f32 0.5, %v1297
        %v1299 = vsub.f32 1.5, %v1298
        %v1300 = vmul.f32 %v1295, %v1299
        %v1301 = vmul.f32 %v1036, %v1300
        %vm1302 = vcmp.eq.f32.partialorder %v1036, inf
        %v1303 = vsel %vm1302, %v1036, %v1301
        %vm1304 = vcmp.eq.f32.partialorder %v1036, 0.0
        %v1305 = vand.u32 %v1036, 2147483648
        %v1306 = vsel %vm1304, %v1305, %v1303
        %v1307 = vrsqrt.pop %v1039
        %v1308 = vmul.f32 %v1307, %v1039
        %v1309 = vmul.f32 %v1308, %v1307
        %v1310 = vmul.f32 0.5, %v1309
        %v1311 = vsub.f32 1.5, %v1310
        %v1312 = vmul.f32 %v1307, %v1311
        %v1313 = vmul.f32 %v1039, %v1312
        %vm1314 = vcmp.eq.f32.partialorder %v1039, inf
        %v1315 = vsel %vm1314, %v1039, %v1313
        %vm1316 = vcmp.eq.f32.partialorder %v1039, 0.0
        %v1317 = vand.u32 %v1039, 2147483648
        %v1318 = vsel %vm1316, %v1317, %v1315
        %v1319 = vrsqrt.pop %v1042
        %v1320 = vmul.f32 %v1319, %v1042
        %v1321 = vmul.f32 %v1320, %v1319
        %v1322 = vmul.f32 0.5, %v1321
        %v1323 = vsub.f32 1.5, %v1322
        %v1324 = vmul.f32 %v1319, %v1323
        %v1325 = vmul.f32 %v1042, %v1324
        %vm1326 = vcmp.eq.f32.partialorder %v1042, inf
        %v1327 = vsel %vm1326, %v1042, %v1325
        %vm1328 = vcmp.eq.f32.partialorder %v1042, 0.0
        %v1329 = vand.u32 %v1042, 2147483648
        %v1330 = vsel %vm1328, %v1329, %v1327
        %v1331 = vrsqrt.pop %v1045
        %v1332 = vmul.f32 %v1331, %v1045
        %v1333 = vmul.f32 %v1332, %v1331
        %v1334 = vmul.f32 0.5, %v1333
        %v1335 = vsub.f32 1.5, %v1334
        %v1336 = vmul.f32 %v1331, %v1335
        %v1337 = vmul.f32 %v1045, %v1336
        %vm1338 = vcmp.eq.f32.partialorder %v1045, inf
        %v1339 = vsel %vm1338, %v1045, %v1337
        %vm1340 = vcmp.eq.f32.partialorder %v1045, 0.0
        %v1341 = vand.u32 %v1045, 2147483648
        %v1342 = vsel %vm1340, %v1341, %v1339
        %v1343 = vrsqrt.pop %v1048
        %v1344 = vmul.f32 %v1343, %v1048
        %v1345 = vmul.f32 %v1344, %v1343
        %v1346 = vmul.f32 0.5, %v1345
        %v1347 = vsub.f32 1.5, %v1346
        %v1348 = vmul.f32 %v1343, %v1347
        %v1349 = vmul.f32 %v1048, %v1348
        %vm1350 = vcmp.eq.f32.partialorder %v1048, inf
        %v1351 = vsel %vm1350, %v1048, %v1349
        %vm1352 = vcmp.eq.f32.partialorder %v1048, 0.0
        %v1353 = vand.u32 %v1048, 2147483648
        %v1354 = vsel %vm1352, %v1353, %v1351
        %v1355 = vrsqrt.pop %v1051
        %v1356 = vmul.f32 %v1355, %v1051
        %v1357 = vmul.f32 %v1356, %v1355
        %v1358 = vmul.f32 0.5, %v1357
        %v1359 = vsub.f32 1.5, %v1358
        %v1360 = vmul.f32 %v1355, %v1359
        %v1361 = vmul.f32 %v1051, %v1360
        %vm1362 = vcmp.eq.f32.partialorder %v1051, inf
        %v1363 = vsel %vm1362, %v1051, %v1361
        %vm1364 = vcmp.eq.f32.partialorder %v1051, 0.0
        %v1365 = vand.u32 %v1051, 2147483648
        %v1366 = vsel %vm1364, %v1365, %v1363
        %v1367 = vrsqrt.pop %v1054
        %v1368 = vmul.f32 %v1367, %v1054
        %v1369 = vmul.f32 %v1368, %v1367
        %v1370 = vmul.f32 0.5, %v1369
        %v1371 = vsub.f32 1.5, %v1370
        %v1372 = vmul.f32 %v1367, %v1371
        %v1373 = vmul.f32 %v1054, %v1372
        %vm1374 = vcmp.eq.f32.partialorder %v1054, inf
        %v1375 = vsel %vm1374, %v1054, %v1373
        %vm1376 = vcmp.eq.f32.partialorder %v1054, 0.0
        %v1377 = vand.u32 %v1054, 2147483648
        %v1378 = vsel %vm1376, %v1377, %v1375
        %v1379 = vrsqrt.pop %v1057
        %v1380 = vmul.f32 %v1379, %v1057
        %v1381 = vmul.f32 %v1380, %v1379
        %v1382 = vmul.f32 0.5, %v1381
        %v1383 = vsub.f32 1.5, %v1382
        %v1384 = vmul.f32 %v1379, %v1383
        %v1385 = vmul.f32 %v1057, %v1384
        %vm1386 = vcmp.eq.f32.partialorder %v1057, inf
        %v1387 = vsel %vm1386, %v1057, %v1385
        %vm1388 = vcmp.eq.f32.partialorder %v1057, 0.0
        %v1389 = vand.u32 %v1057, 2147483648
        %v1390 = vsel %vm1388, %v1389, %v1387
        %v1391 = vrsqrt.pop %v1060
        %v1392 = vmul.f32 %v1391, %v1060
        %v1393 = vmul.f32 %v1392, %v1391
        %v1394 = vmul.f32 0.5, %v1393
        %v1395 = vsub.f32 1.5, %v1394
        %v1396 = vmul.f32 %v1391, %v1395
        %v1397 = vmul.f32 %v1060, %v1396
        %vm1398 = vcmp.eq.f32.partialorder %v1060, inf
        %v1399 = vsel %vm1398, %v1060, %v1397
        %vm1400 = vcmp.eq.f32.partialorder %v1060, 0.0
        %v1401 = vand.u32 %v1060, 2147483648
        %v1402 = vsel %vm1400, %v1401, %v1399
        %v1403 = vrsqrt.pop %v1063
        %v1404 = vmul.f32 %v1403, %v1063
        %v1405 = vmul.f32 %v1404, %v1403
        %v1406 = vmul.f32 0.5, %v1405
        %v1407 = vsub.f32 1.5, %v1406
        %v1408 = vmul.f32 %v1403, %v1407
        %v1409 = vmul.f32 %v1063, %v1408
        %vm1410 = vcmp.eq.f32.partialorder %v1063, inf
        %v1411 = vsel %vm1410, %v1063, %v1409
        %vm1412 = vcmp.eq.f32.partialorder %v1063, 0.0
        %v1413 = vand.u32 %v1063, 2147483648
        %v1414 = vsel %vm1412, %v1413, %v1411
        %v1415 = vrsqrt.pop %v1066
        %v1416 = vmul.f32 %v1415, %v1066
        %v1417 = vmul.f32 %v1416, %v1415
        %v1418 = vmul.f32 0.5, %v1417
        %v1419 = vsub.f32 1.5, %v1418
        %v1420 = vmul.f32 %v1415, %v1419
        %v1421 = vmul.f32 %v1066, %v1420
        %vm1422 = vcmp.eq.f32.partialorder %v1066, inf
        %v1423 = vsel %vm1422, %v1066, %v1421
        %vm1424 = vcmp.eq.f32.partialorder %v1066, 0.0
        %v1425 = vand.u32 %v1066, 2147483648
        %v1426 = vsel %vm1424, %v1425, %v1423
        %v1427 = vrsqrt.pop %v1069
        %v1428 = vmul.f32 %v1427, %v1069
        %v1429 = vmul.f32 %v1428, %v1427
        %v1430 = vmul.f32 0.5, %v1429
        %v1431 = vsub.f32 1.5, %v1430
        %v1432 = vmul.f32 %v1427, %v1431
        %v1433 = vmul.f32 %v1069, %v1432
        %vm1434 = vcmp.eq.f32.partialorder %v1069, inf
        %v1435 = vsel %vm1434, %v1069, %v1433
        %vm1436 = vcmp.eq.f32.partialorder %v1069, 0.0
        %v1437 = vand.u32 %v1069, 2147483648
        %v1438 = vsel %vm1436, %v1437, %v1435
        %v1439 = vrsqrt.pop %v1072
        %v1440 = vmul.f32 %v1439, %v1072
        %v1441 = vmul.f32 %v1440, %v1439
        %v1442 = vmul.f32 0.5, %v1441
        %v1443 = vsub.f32 1.5, %v1442
        %v1444 = vmul.f32 %v1439, %v1443
        %v1445 = vmul.f32 %v1072, %v1444
        %vm1446 = vcmp.eq.f32.partialorder %v1072, inf
        %v1447 = vsel %vm1446, %v1072, %v1445
        %vm1448 = vcmp.eq.f32.partialorder %v1072, 0.0
        %v1449 = vand.u32 %v1072, 2147483648
        %v1450 = vsel %vm1448, %v1449, %v1447
        %v1451 = vrsqrt.pop %v1075
        %v1452 = vmul.f32 %v1451, %v1075
        %v1453 = vmul.f32 %v1452, %v1451
        %v1454 = vmul.f32 0.5, %v1453
        %v1455 = vsub.f32 1.5, %v1454
        %v1456 = vmul.f32 %v1451, %v1455
        %v1457 = vmul.f32 %v1075, %v1456
        %vm1458 = vcmp.eq.f32.partialorder %v1075, inf
        %v1459 = vsel %vm1458, %v1075, %v1457
        %vm1460 = vcmp.eq.f32.partialorder %v1075, 0.0
        %v1461 = vand.u32 %v1075, 2147483648
        %v1462 = vsel %vm1460, %v1461, %v1459
        %v1463 = vrsqrt.pop %v1078
        %v1464 = vmul.f32 %v1463, %v1078
        %v1465 = vmul.f32 %v1464, %v1463
        %v1466 = vmul.f32 0.5, %v1465
        %v1467 = vsub.f32 1.5, %v1466
        %v1468 = vmul.f32 %v1463, %v1467
        %v1469 = vmul.f32 %v1078, %v1468
        %vm1470 = vcmp.eq.f32.partialorder %v1078, inf
        %v1471 = vsel %vm1470, %v1078, %v1469
        %vm1472 = vcmp.eq.f32.partialorder %v1078, 0.0
        %v1473 = vand.u32 %v1078, 2147483648
        %v1474 = vsel %vm1472, %v1473, %v1471
        %v1475 = vrsqrt.pop %v1081
        %v1476 = vmul.f32 %v1475, %v1081
        %v1477 = vmul.f32 %v1476, %v1475
        %v1478 = vmul.f32 0.5, %v1477
        %v1479 = vsub.f32 1.5, %v1478
        %v1480 = vmul.f32 %v1475, %v1479
        %v1481 = vmul.f32 %v1081, %v1480
        %vm1482 = vcmp.eq.f32.partialorder %v1081, inf
        %v1483 = vsel %vm1482, %v1081, %v1481
        %vm1484 = vcmp.eq.f32.partialorder %v1081, 0.0
        %v1485 = vand.u32 %v1081, 2147483648
        %v1486 = vsel %vm1484, %v1485, %v1483
        %v1487 = vrsqrt.pop %v1084
        %v1488 = vmul.f32 %v1487, %v1084
        %v1489 = vmul.f32 %v1488, %v1487
        %v1490 = vmul.f32 0.5, %v1489
        %v1491 = vsub.f32 1.5, %v1490
        %v1492 = vmul.f32 %v1487, %v1491
        %v1493 = vmul.f32 %v1084, %v1492
        %vm1494 = vcmp.eq.f32.partialorder %v1084, inf
        %v1495 = vsel %vm1494, %v1084, %v1493
        %vm1496 = vcmp.eq.f32.partialorder %v1084, 0.0
        %v1497 = vand.u32 %v1084, 2147483648
        %v1498 = vsel %vm1496, %v1497, %v1495
        %v1499 = vrsqrt.pop %v1087
        %v1500 = vmul.f32 %v1499, %v1087
        %v1501 = vmul.f32 %v1500, %v1499
        %v1502 = vmul.f32 0.5, %v1501
        %v1503 = vsub.f32 1.5, %v1502
        %v1504 = vmul.f32 %v1499, %v1503
        %v1505 = vmul.f32 %v1087, %v1504
        %vm1506 = vcmp.eq.f32.partialorder %v1087, inf
        %v1507 = vsel %vm1506, %v1087, %v1505
        %vm1508 = vcmp.eq.f32.partialorder %v1087, 0.0
        %v1509 = vand.u32 %v1087, 2147483648
        %v1510 = vsel %vm1508, %v1509, %v1507
        %v1511 = vrsqrt.pop %v1090
        %v1512 = vmul.f32 %v1511, %v1090
        %v1513 = vmul.f32 %v1512, %v1511
        %v1514 = vmul.f32 0.5, %v1513
        %v1515 = vsub.f32 1.5, %v1514
        %v1516 = vmul.f32 %v1511, %v1515
        %v1517 = vmul.f32 %v1090, %v1516
        %vm1518 = vcmp.eq.f32.partialorder %v1090, inf
        %v1519 = vsel %vm1518, %v1090, %v1517
        %vm1520 = vcmp.eq.f32.partialorder %v1090, 0.0
        %v1521 = vand.u32 %v1090, 2147483648
        %v1522 = vsel %vm1520, %v1521, %v1519
        %v1523 = vrsqrt.pop %v1093
        %v1524 = vmul.f32 %v1523, %v1093
        %v1525 = vmul.f32 %v1524, %v1523
        %v1526 = vmul.f32 0.5, %v1525
        %v1527 = vsub.f32 1.5, %v1526
        %v1528 = vmul.f32 %v1523, %v1527
        %v1529 = vmul.f32 %v1093, %v1528
        %vm1530 = vcmp.eq.f32.partialorder %v1093, inf
        %v1531 = vsel %vm1530, %v1093, %v1529
        %vm1532 = vcmp.eq.f32.partialorder %v1093, 0.0
        %v1533 = vand.u32 %v1093, 2147483648
        %v1534 = vsel %vm1532, %v1533, %v1531
        %v1535 = vrsqrt.pop %v1096
        %v1536 = vmul.f32 %v1535, %v1096
        %v1537 = vmul.f32 %v1536, %v1535
        %v1538 = vmul.f32 0.5, %v1537
        %v1539 = vsub.f32 1.5, %v1538
        %v1540 = vmul.f32 %v1535, %v1539
        %v1541 = vmul.f32 %v1096, %v1540
        %vm1542 = vcmp.eq.f32.partialorder %v1096, inf
        %v1543 = vsel %vm1542, %v1096, %v1541
        %vm1544 = vcmp.eq.f32.partialorder %v1096, 0.0
        %v1545 = vand.u32 %v1096, 2147483648
        %v1546 = vsel %vm1544, %v1545, %v1543
        %v1547 = vrsqrt.pop %v1099
        %v1548 = vmul.f32 %v1547, %v1099
        %v1549 = vmul.f32 %v1548, %v1547
        %v1550 = vmul.f32 0.5, %v1549
        %v1551 = vsub.f32 1.5, %v1550
        %v1552 = vmul.f32 %v1547, %v1551
        %v1553 = vmul.f32 %v1099, %v1552
        %vm1554 = vcmp.eq.f32.partialorder %v1099, inf
        %v1555 = vsel %vm1554, %v1099, %v1553
        %vm1556 = vcmp.eq.f32.partialorder %v1099, 0.0
        %v1557 = vand.u32 %v1099, 2147483648
        %v1558 = vsel %vm1556, %v1557, %v1555
        %v1559 = vrsqrt.pop %v1102
        %v1560 = vmul.f32 %v1559, %v1102
        %v1561 = vmul.f32 %v1560, %v1559
        %v1562 = vmul.f32 0.5, %v1561
        %v1563 = vsub.f32 1.5, %v1562
        %v1564 = vmul.f32 %v1559, %v1563
        %v1565 = vmul.f32 %v1102, %v1564
        %vm1566 = vcmp.eq.f32.partialorder %v1102, inf
        %v1567 = vsel %vm1566, %v1102, %v1565
        %vm1568 = vcmp.eq.f32.partialorder %v1102, 0.0
        %v1569 = vand.u32 %v1102, 2147483648
        %v1570 = vsel %vm1568, %v1569, %v1567
        %v1571 = vrsqrt.pop %v1105
        %v1572 = vmul.f32 %v1571, %v1105
        %v1573 = vmul.f32 %v1572, %v1571
        %v1574 = vmul.f32 0.5, %v1573
        %v1575 = vsub.f32 1.5, %v1574
        %v1576 = vmul.f32 %v1571, %v1575
        %v1577 = vmul.f32 %v1105, %v1576
        %vm1578 = vcmp.eq.f32.partialorder %v1105, inf
        %v1579 = vsel %vm1578, %v1105, %v1577
        %vm1580 = vcmp.eq.f32.partialorder %v1105, 0.0
        %v1581 = vand.u32 %v1105, 2147483648
        %v1582 = vsel %vm1580, %v1581, %v1579
        %v1583 = vrsqrt.pop %v1108
        %v1584 = vmul.f32 %v1583, %v1108
        %v1585 = vmul.f32 %v1584, %v1583
        %v1586 = vmul.f32 0.5, %v1585
        %v1587 = vsub.f32 1.5, %v1586
        %v1588 = vmul.f32 %v1583, %v1587
        %v1589 = vmul.f32 %v1108, %v1588
        %vm1590 = vcmp.eq.f32.partialorder %v1108, inf
        %v1591 = vsel %vm1590, %v1108, %v1589
        %vm1592 = vcmp.eq.f32.partialorder %v1108, 0.0
        %v1593 = vand.u32 %v1108, 2147483648
        %v1594 = vsel %vm1592, %v1593, %v1591
        %v1595 = vrsqrt.pop %v1111
        %v1596 = vmul.f32 %v1595, %v1111
        %v1597 = vmul.f32 %v1596, %v1595
        %v1598 = vmul.f32 0.5, %v1597
        %v1599 = vsub.f32 1.5, %v1598
        %v1600 = vmul.f32 %v1595, %v1599
        %v1601 = vmul.f32 %v1111, %v1600
        %vm1602 = vcmp.eq.f32.partialorder %v1111, inf
        %v1603 = vsel %vm1602, %v1111, %v1601
        %vm1604 = vcmp.eq.f32.partialorder %v1111, 0.0
        %v1605 = vand.u32 %v1111, 2147483648
        %v1606 = vsel %vm1604, %v1605, %v1603
        %v1607 = vrsqrt.pop %v1114
        %v1608 = vmul.f32 %v1607, %v1114
        %v1609 = vmul.f32 %v1608, %v1607
        %v1610 = vmul.f32 0.5, %v1609
        %v1611 = vsub.f32 1.5, %v1610
        %v1612 = vmul.f32 %v1607, %v1611
        %v1613 = vmul.f32 %v1114, %v1612
        %vm1614 = vcmp.eq.f32.partialorder %v1114, inf
        %v1615 = vsel %vm1614, %v1114, %v1613
        %vm1616 = vcmp.eq.f32.partialorder %v1114, 0.0
        %v1617 = vand.u32 %v1114, 2147483648
        %v1618 = vsel %vm1616, %v1617, %v1615
        %v1619 = vrsqrt.pop %v1117
        %v1620 = vmul.f32 %v1619, %v1117
        %v1621 = vmul.f32 %v1620, %v1619
        %v1622 = vmul.f32 0.5, %v1621
        %v1623 = vsub.f32 1.5, %v1622
        %v1624 = vmul.f32 %v1619, %v1623
        %v1625 = vmul.f32 %v1117, %v1624
        %vm1626 = vcmp.eq.f32.partialorder %v1117, inf
        %v1627 = vsel %vm1626, %v1117, %v1625
        %vm1628 = vcmp.eq.f32.partialorder %v1117, 0.0
        %v1629 = vand.u32 %v1117, 2147483648
        %v1630 = vsel %vm1628, %v1629, %v1627
        %v1631 = vrsqrt.pop %v1120
        %v1632 = vmul.f32 %v1631, %v1120
        %v1633 = vmul.f32 %v1632, %v1631
        %v1634 = vmul.f32 0.5, %v1633
        %v1635 = vsub.f32 1.5, %v1634
        %v1636 = vmul.f32 %v1631, %v1635
        %v1637 = vmul.f32 %v1120, %v1636
        %vm1638 = vcmp.eq.f32.partialorder %v1120, inf
        %v1639 = vsel %vm1638, %v1120, %v1637
        %vm1640 = vcmp.eq.f32.partialorder %v1120, 0.0
        %v1641 = vand.u32 %v1120, 2147483648
        %v1642 = vsel %vm1640, %v1641, %v1639
        %v1643 = vrsqrt.pop %v1123
        %v1644 = vmul.f32 %v1643, %v1123
        %v1645 = vmul.f32 %v1644, %v1643
        %v1646 = vmul.f32 0.5, %v1645
        %v1647 = vsub.f32 1.5, %v1646
        %v1648 = vmul.f32 %v1643, %v1647
        %v1649 = vmul.f32 %v1123, %v1648
        %vm1650 = vcmp.eq.f32.partialorder %v1123, inf
        %v1651 = vsel %vm1650, %v1123, %v1649
        %vm1652 = vcmp.eq.f32.partialorder %v1123, 0.0
        %v1653 = vand.u32 %v1123, 2147483648
        %v1654 = vsel %vm1652, %v1653, %v1651
        %v1655 = vrsqrt.pop %v1126
        %v1656 = vmul.f32 %v1655, %v1126
        %v1657 = vmul.f32 %v1656, %v1655
        %v1658 = vmul.f32 0.5, %v1657
        %v1659 = vsub.f32 1.5, %v1658
        %v1660 = vmul.f32 %v1655, %v1659
        %v1661 = vmul.f32 %v1126, %v1660
        %vm1662 = vcmp.eq.f32.partialorder %v1126, inf
        %v1663 = vsel %vm1662, %v1126, %v1661
        %vm1664 = vcmp.eq.f32.partialorder %v1126, 0.0
        %v1665 = vand.u32 %v1126, 2147483648
        %v1666 = vsel %vm1664, %v1665, %v1663
        %v1667 = vrsqrt.pop %v1129
        %v1668 = vmul.f32 %v1667, %v1129
        %v1669 = vmul.f32 %v1668, %v1667
        %v1670 = vmul.f32 0.5, %v1669
        %v1671 = vsub.f32 1.5, %v1670
        %v1672 = vmul.f32 %v1667, %v1671
        %v1673 = vmul.f32 %v1129, %v1672
        %vm1674 = vcmp.eq.f32.partialorder %v1129, inf
        %v1675 = vsel %vm1674, %v1129, %v1673
        %vm1676 = vcmp.eq.f32.partialorder %v1129, 0.0
        %v1677 = vand.u32 %v1129, 2147483648
        %v1678 = vsel %vm1676, %v1677, %v1675
        %v1679 = vrsqrt.pop %v1132
        %v1680 = vmul.f32 %v1679, %v1132
        %v1681 = vmul.f32 %v1680, %v1679
        %v1682 = vmul.f32 0.5, %v1681
        %v1683 = vsub.f32 1.5, %v1682
        %v1684 = vmul.f32 %v1679, %v1683
        %v1685 = vmul.f32 %v1132, %v1684
        %vm1686 = vcmp.eq.f32.partialorder %v1132, inf
        %v1687 = vsel %vm1686, %v1132, %v1685
        %vm1688 = vcmp.eq.f32.partialorder %v1132, 0.0
        %v1689 = vand.u32 %v1132, 2147483648
        %v1690 = vsel %vm1688, %v1689, %v1687
        %v1691 = vrsqrt.pop %v1135
        %v1692 = vmul.f32 %v1691, %v1135
        %v1693 = vmul.f32 %v1692, %v1691
        %v1694 = vmul.f32 0.5, %v1693
        %v1695 = vsub.f32 1.5, %v1694
        %v1696 = vmul.f32 %v1691, %v1695
        %v1697 = vmul.f32 %v1135, %v1696
        %vm1698 = vcmp.eq.f32.partialorder %v1135, inf
        %v1699 = vsel %vm1698, %v1135, %v1697
        %vm1700 = vcmp.eq.f32.partialorder %v1135, 0.0
        %v1701 = vand.u32 %v1135, 2147483648
        %v1702 = vsel %vm1700, %v1701, %v1699
        %v1703 = vrsqrt.pop %v1138
        %v1704 = vmul.f32 %v1703, %v1138
        %v1705 = vmul.f32 %v1704, %v1703
        %v1706 = vmul.f32 0.5, %v1705
        %v1707 = vsub.f32 1.5, %v1706
        %v1708 = vmul.f32 %v1703, %v1707
        %v1709 = vmul.f32 %v1138, %v1708
        %vm1710 = vcmp.eq.f32.partialorder %v1138, inf
        %v1711 = vsel %vm1710, %v1138, %v1709
        %vm1712 = vcmp.eq.f32.partialorder %v1138, 0.0
        %v1713 = vand.u32 %v1138, 2147483648
        %v1714 = vsel %vm1712, %v1713, %v1711
        %v1715 = vmax.f32 %v1150, 1e-12
        %v1716 = vmax.f32 %v1162, 1e-12
        %v1717 = vmax.f32 %v1174, 1e-12
        %v1718 = vmax.f32 %v1186, 1e-12
        %v1719 = vmax.f32 %v1198, 1e-12
        %v1720 = vmax.f32 %v1210, 1e-12
        %v1721 = vmax.f32 %v1222, 1e-12
        %v1722 = vmax.f32 %v1234, 1e-12
        %v1723 = vmax.f32 %v1246, 1e-12
        %v1724 = vmax.f32 %v1258, 1e-12
        %v1725 = vmax.f32 %v1270, 1e-12
        %v1726 = vmax.f32 %v1282, 1e-12
        %v1727 = vmax.f32 %v1294, 1e-12
        %v1728 = vmax.f32 %v1306, 1e-12
        %v1729 = vmax.f32 %v1318, 1e-12
        %v1730 = vmax.f32 %v1330, 1e-12
        %v1731 = vmax.f32 %v1342, 1e-12
        %v1732 = vmax.f32 %v1354, 1e-12
        %v1733 = vmax.f32 %v1366, 1e-12
        %v1734 = vmax.f32 %v1378, 1e-12
        %v1735 = vmax.f32 %v1390, 1e-12
        %v1736 = vmax.f32 %v1402, 1e-12
        %v1737 = vmax.f32 %v1414, 1e-12
        %v1738 = vmax.f32 %v1426, 1e-12
        %v1739 = vmax.f32 %v1438, 1e-12
        %v1740 = vmax.f32 %v1450, 1e-12
        %v1741 = vmax.f32 %v1462, 1e-12
        %v1742 = vmax.f32 %v1474, 1e-12
        %v1743 = vmax.f32 %v1486, 1e-12
        %v1744 = vmax.f32 %v1498, 1e-12
        %v1745 = vmax.f32 %v1510, 1e-12
        %v1746 = vmax.f32 %v1522, 1e-12
        %v1747 = vmax.f32 %v1534, 1e-12
        %v1748 = vmax.f32 %v1546, 1e-12
        %v1749 = vmax.f32 %v1558, 1e-12
        %v1750 = vmax.f32 %v1570, 1e-12
        %v1751 = vmax.f32 %v1582, 1e-12
        %v1752 = vmax.f32 %v1594, 1e-12
        %v1753 = vmax.f32 %v1606, 1e-12
        %v1754 = vmax.f32 %v1618, 1e-12
        %v1755 = vmax.f32 %v1630, 1e-12
        %v1756 = vmax.f32 %v1642, 1e-12
        %v1757 = vmax.f32 %v1654, 1e-12
        %v1758 = vmax.f32 %v1666, 1e-12
        %v1759 = vmax.f32 %v1678, 1e-12
        %v1760 = vmax.f32 %v1690, 1e-12
        %v1761 = vmax.f32 %v1702, 1e-12
        %v1762 = vmax.f32 %v1714, 1e-12
        %v1763 = vrcp.pop %v1715
        %v1764 = vmul.f32 %v1715, %v1763
        %v1765 = vsub.f32 1.0, %v1764
        %v1766 = vmul.f32 %v1763, %v1765
        %v1767 = vadd.f32 %v1763, %v1766
        %vm1768 = vweird.f32 %v1715
        %vm1769 = vweird.f32 %v1763
        %vm1770 = vmor %vm1768, %vm1769
        %v1771 = vsel %vm1770, %v1763, %v1767
        %v1772 = vand.u32 2147483647, %v1715
        %vm1773 = vcmp.eq.f32.partialorder %v1772, 8.507059e+37
        %v1774 = vand.u32 %v1715, 2147483648
        %v1775 = vor.u32 1.1754944e-38, %v1774
        %v1776 = vsel %vm1773, %v1775, %v1771
        %v1777 = vmul.f32 %v379, %v1776
        %v1778 = vrcp.pop %v1716
        %v1779 = vmul.f32 %v1716, %v1778
        %v1780 = vsub.f32 1.0, %v1779
        %v1781 = vmul.f32 %v1778, %v1780
        %v1782 = vadd.f32 %v1778, %v1781
        %vm1783 = vweird.f32 %v1716
        %vm1784 = vweird.f32 %v1778
        %vm1785 = vmor %vm1783, %vm1784
        %v1786 = vsel %vm1785, %v1778, %v1782
        %v1787 = vand.u32 2147483647, %v1716
        %vm1788 = vcmp.eq.f32.partialorder %v1787, 8.507059e+37
        %v1789 = vand.u32 %v1716, 2147483648
        %v1790 = vor.u32 1.1754944e-38, %v1789
        %v1791 = vsel %vm1788, %v1790, %v1786
        %v1792 = vmul.f32 %v380, %v1791
        %v1793 = vrcp.pop %v1717
        %v1794 = vmul.f32 %v1717, %v1793
        %v1795 = vsub.f32 1.0, %v1794
        %v1796 = vmul.f32 %v1793, %v1795
        %v1797 = vadd.f32 %v1793, %v1796
        %vm1798 = vweird.f32 %v1717
        %vm1799 = vweird.f32 %v1793
        %vm1800 = vmor %vm1798, %vm1799
        %v1801 = vsel %vm1800, %v1793, %v1797
        %v1802 = vand.u32 2147483647, %v1717
        %vm1803 = vcmp.eq.f32.partialorder %v1802, 8.507059e+37
        %v1804 = vand.u32 %v1717, 2147483648
        %v1805 = vor.u32 1.1754944e-38, %v1804
        %v1806 = vsel %vm1803, %v1805, %v1801
        %v1807 = vmul.f32 %v381, %v1806
        %v1808 = vrcp.pop %v1718
        %v1809 = vmul.f32 %v1718, %v1808
        %v1810 = vsub.f32 1.0, %v1809
        %v1811 = vmul.f32 %v1808, %v1810
        %v1812 = vadd.f32 %v1808, %v1811
        %vm1813 = vweird.f32 %v1718
        %vm1814 = vweird.f32 %v1808
        %vm1815 = vmor %vm1813, %vm1814
        %v1816 = vsel %vm1815, %v1808, %v1812
        %v1817 = vand.u32 2147483647, %v1718
        %vm1818 = vcmp.eq.f32.partialorder %v1817, 8.507059e+37
        %v1819 = vand.u32 %v1718, 2147483648
        %v1820 = vor.u32 1.1754944e-38, %v1819
        %v1821 = vsel %vm1818, %v1820, %v1816
        %v1822 = vmul.f32 %v382, %v1821
        %v1823 = vrcp.pop %v1719
        %v1824 = vmul.f32 %v1719, %v1823
        %v1825 = vsub.f32 1.0, %v1824
        %v1826 = vmul.f32 %v1823, %v1825
        %v1827 = vadd.f32 %v1823, %v1826
        %vm1828 = vweird.f32 %v1719
        %vm1829 = vweird.f32 %v1823
        %vm1830 = vmor %vm1828, %vm1829
        %v1831 = vsel %vm1830, %v1823, %v1827
        %v1832 = vand.u32 2147483647, %v1719
        %vm1833 = vcmp.eq.f32.partialorder %v1832, 8.507059e+37
        %v1834 = vand.u32 %v1719, 2147483648
        %v1835 = vor.u32 1.1754944e-38, %v1834
        %v1836 = vsel %vm1833, %v1835, %v1831
        %v1837 = vmul.f32 %v383, %v1836
        %v1838 = vrcp.pop %v1720
        %v1839 = vmul.f32 %v1720, %v1838
        %v1840 = vsub.f32 1.0, %v1839
        %v1841 = vmul.f32 %v1838, %v1840
        %v1842 = vadd.f32 %v1838, %v1841
        %vm1843 = vweird.f32 %v1720
        %vm1844 = vweird.f32 %v1838
        %vm1845 = vmor %vm1843, %vm1844
        %v1846 = vsel %vm1845, %v1838, %v1842
        %v1847 = vand.u32 2147483647, %v1720
        %vm1848 = vcmp.eq.f32.partialorder %v1847, 8.507059e+37
        %v1849 = vand.u32 %v1720, 2147483648
        %v1850 = vor.u32 1.1754944e-38, %v1849
        %v1851 = vsel %vm1848, %v1850, %v1846
        %v1852 = vmul.f32 %v384, %v1851
        %v1853 = vrcp.pop %v1721
        %v1854 = vmul.f32 %v1721, %v1853
        %v1855 = vsub.f32 1.0, %v1854
        %v1856 = vmul.f32 %v1853, %v1855
        %v1857 = vadd.f32 %v1853, %v1856
        %vm1858 = vweird.f32 %v1721
        %vm1859 = vweird.f32 %v1853
        %vm1860 = vmor %vm1858, %vm1859
        %v1861 = vsel %vm1860, %v1853, %v1857
        %v1862 = vand.u32 2147483647, %v1721
        %vm1863 = vcmp.eq.f32.partialorder %v1862, 8.507059e+37
        %v1864 = vand.u32 %v1721, 2147483648
        %v1865 = vor.u32 1.1754944e-38, %v1864
        %v1866 = vsel %vm1863, %v1865, %v1861
        %v1867 = vmul.f32 %v385, %v1866
        %v1868 = vrcp.pop %v1722
        %v1869 = vmul.f32 %v1722, %v1868
        %v1870 = vsub.f32 1.0, %v1869
        %v1871 = vmul.f32 %v1868, %v1870
        %v1872 = vadd.f32 %v1868, %v1871
        %vm1873 = vweird.f32 %v1722
        %vm1874 = vweird.f32 %v1868
        %vm1875 = vmor %vm1873, %vm1874
        %v1876 = vsel %vm1875, %v1868, %v1872
        %v1877 = vand.u32 2147483647, %v1722
        %vm1878 = vcmp.eq.f32.partialorder %v1877, 8.507059e+37
        %v1879 = vand.u32 %v1722, 2147483648
        %v1880 = vor.u32 1.1754944e-38, %v1879
        %v1881 = vsel %vm1878, %v1880, %v1876
        %v1882 = vmul.f32 %v386, %v1881
        %v1883 = vrcp.pop %v1723
        %v1884 = vmul.f32 %v1723, %v1883
        %v1885 = vsub.f32 1.0, %v1884
        %v1886 = vmul.f32 %v1883, %v1885
        %v1887 = vadd.f32 %v1883, %v1886
        %vm1888 = vweird.f32 %v1723
        %vm1889 = vweird.f32 %v1883
        %vm1890 = vmor %vm1888, %vm1889
        %v1891 = vsel %vm1890, %v1883, %v1887
        %v1892 = vand.u32 2147483647, %v1723
        %vm1893 = vcmp.eq.f32.partialorder %v1892, 8.507059e+37
        %v1894 = vand.u32 %v1723, 2147483648
        %v1895 = vor.u32 1.1754944e-38, %v1894
        %v1896 = vsel %vm1893, %v1895, %v1891
        %v1897 = vmul.f32 %v387, %v1896
        %v1898 = vrcp.pop %v1724
        %v1899 = vmul.f32 %v1724, %v1898
        %v1900 = vsub.f32 1.0, %v1899
        %v1901 = vmul.f32 %v1898, %v1900
        %v1902 = vadd.f32 %v1898, %v1901
        %vm1903 = vweird.f32 %v1724
        %vm1904 = vweird.f32 %v1898
        %vm1905 = vmor %vm1903, %vm1904
        %v1906 = vsel %vm1905, %v1898, %v1902
        %v1907 = vand.u32 2147483647, %v1724
        %vm1908 = vcmp.eq.f32.partialorder %v1907, 8.507059e+37
        %v1909 = vand.u32 %v1724, 2147483648
        %v1910 = vor.u32 1.1754944e-38, %v1909
        %v1911 = vsel %vm1908, %v1910, %v1906
        %v1912 = vmul.f32 %v388, %v1911
        %v1913 = vrcp.pop %v1725
        %v1914 = vmul.f32 %v1725, %v1913
        %v1915 = vsub.f32 1.0, %v1914
        %v1916 = vmul.f32 %v1913, %v1915
        %v1917 = vadd.f32 %v1913, %v1916
        %vm1918 = vweird.f32 %v1725
        %vm1919 = vweird.f32 %v1913
        %vm1920 = vmor %vm1918, %vm1919
        %v1921 = vsel %vm1920, %v1913, %v1917
        %v1922 = vand.u32 2147483647, %v1725
        %vm1923 = vcmp.eq.f32.partialorder %v1922, 8.507059e+37
        %v1924 = vand.u32 %v1725, 2147483648
        %v1925 = vor.u32 1.1754944e-38, %v1924
        %v1926 = vsel %vm1923, %v1925, %v1921
        %v1927 = vmul.f32 %v389, %v1926
        %v1928 = vrcp.pop %v1726
        %v1929 = vmul.f32 %v1726, %v1928
        %v1930 = vsub.f32 1.0, %v1929
        %v1931 = vmul.f32 %v1928, %v1930
        %v1932 = vadd.f32 %v1928, %v1931
        %vm1933 = vweird.f32 %v1726
        %vm1934 = vweird.f32 %v1928
        %vm1935 = vmor %vm1933, %vm1934
        %v1936 = vsel %vm1935, %v1928, %v1932
        %v1937 = vand.u32 2147483647, %v1726
        %vm1938 = vcmp.eq.f32.partialorder %v1937, 8.507059e+37
        %v1939 = vand.u32 %v1726, 2147483648
        %v1940 = vor.u32 1.1754944e-38, %v1939
        %v1941 = vsel %vm1938, %v1940, %v1936
        %v1942 = vmul.f32 %v390, %v1941
        %v1943 = vrcp.pop %v1727
        %v1944 = vmul.f32 %v1727, %v1943
        %v1945 = vsub.f32 1.0, %v1944
        %v1946 = vmul.f32 %v1943, %v1945
        %v1947 = vadd.f32 %v1943, %v1946
        %vm1948 = vweird.f32 %v1727
        %vm1949 = vweird.f32 %v1943
        %vm1950 = vmor %vm1948, %vm1949
        %v1951 = vsel %vm1950, %v1943, %v1947
        %v1952 = vand.u32 2147483647, %v1727
        %vm1953 = vcmp.eq.f32.partialorder %v1952, 8.507059e+37
        %v1954 = vand.u32 %v1727, 2147483648
        %v1955 = vor.u32 1.1754944e-38, %v1954
        %v1956 = vsel %vm1953, %v1955, %v1951
        %v1957 = vmul.f32 %v391, %v1956
        %v1958 = vrcp.pop %v1728
        %v1959 = vmul.f32 %v1728, %v1958
        %v1960 = vsub.f32 1.0, %v1959
        %v1961 = vmul.f32 %v1958, %v1960
        %v1962 = vadd.f32 %v1958, %v1961
        %vm1963 = vweird.f32 %v1728
        %vm1964 = vweird.f32 %v1958
        %vm1965 = vmor %vm1963, %vm1964
        %v1966 = vsel %vm1965, %v1958, %v1962
        %v1967 = vand.u32 2147483647, %v1728
        %vm1968 = vcmp.eq.f32.partialorder %v1967, 8.507059e+37
        %v1969 = vand.u32 %v1728, 2147483648
        %v1970 = vor.u32 1.1754944e-38, %v1969
        %v1971 = vsel %vm1968, %v1970, %v1966
        %v1972 = vmul.f32 %v392, %v1971
        %v1973 = vrcp.pop %v1729
        %v1974 = vmul.f32 %v1729, %v1973
        %v1975 = vsub.f32 1.0, %v1974
        %v1976 = vmul.f32 %v1973, %v1975
        %v1977 = vadd.f32 %v1973, %v1976
        %vm1978 = vweird.f32 %v1729
        %vm1979 = vweird.f32 %v1973
        %vm1980 = vmor %vm1978, %vm1979
        %v1981 = vsel %vm1980, %v1973, %v1977
        %v1982 = vand.u32 2147483647, %v1729
        %vm1983 = vcmp.eq.f32.partialorder %v1982, 8.507059e+37
        %v1984 = vand.u32 %v1729, 2147483648
        %v1985 = vor.u32 1.1754944e-38, %v1984
        %v1986 = vsel %vm1983, %v1985, %v1981
        %v1987 = vmul.f32 %v393, %v1986
        %v1988 = vrcp.pop %v1730
        %v1989 = vmul.f32 %v1730, %v1988
        %v1990 = vsub.f32 1.0, %v1989
        %v1991 = vmul.f32 %v1988, %v1990
        %v1992 = vadd.f32 %v1988, %v1991
        %vm1993 = vweird.f32 %v1730
        %vm1994 = vweird.f32 %v1988
        %vm1995 = vmor %vm1993, %vm1994
        %v1996 = vsel %vm1995, %v1988, %v1992
        %v1997 = vand.u32 2147483647, %v1730
        %vm1998 = vcmp.eq.f32.partialorder %v1997, 8.507059e+37
        %v1999 = vand.u32 %v1730, 2147483648
        %v2000 = vor.u32 1.1754944e-38, %v1999
        %v2001 = vsel %vm1998, %v2000, %v1996
        %v2002 = vmul.f32 %v394, %v2001
        %v2003 = vrcp.pop %v1731
        %v2004 = vmul.f32 %v1731, %v2003
        %v2005 = vsub.f32 1.0, %v2004
        %v2006 = vmul.f32 %v2003, %v2005
        %v2007 = vadd.f32 %v2003, %v2006
        %vm2008 = vweird.f32 %v1731
        %vm2009 = vweird.f32 %v2003
        %vm2010 = vmor %vm2008, %vm2009
        %v2011 = vsel %vm2010, %v2003, %v2007
        %v2012 = vand.u32 2147483647, %v1731
        %vm2013 = vcmp.eq.f32.partialorder %v2012, 8.507059e+37
        %v2014 = vand.u32 %v1731, 2147483648
        %v2015 = vor.u32 1.1754944e-38, %v2014
        %v2016 = vsel %vm2013, %v2015, %v2011
        %v2017 = vmul.f32 %v395, %v2016
        %v2018 = vrcp.pop %v1732
        %v2019 = vmul.f32 %v1732, %v2018
        %v2020 = vsub.f32 1.0, %v2019
        %v2021 = vmul.f32 %v2018, %v2020
        %v2022 = vadd.f32 %v2018, %v2021
        %vm2023 = vweird.f32 %v1732
        %vm2024 = vweird.f32 %v2018
        %vm2025 = vmor %vm2023, %vm2024
        %v2026 = vsel %vm2025, %v2018, %v2022
        %v2027 = vand.u32 2147483647, %v1732
        %vm2028 = vcmp.eq.f32.partialorder %v2027, 8.507059e+37
        %v2029 = vand.u32 %v1732, 2147483648
        %v2030 = vor.u32 1.1754944e-38, %v2029
        %v2031 = vsel %vm2028, %v2030, %v2026
        %v2032 = vmul.f32 %v396, %v2031
        %v2033 = vrcp.pop %v1733
        %v2034 = vmul.f32 %v1733, %v2033
        %v2035 = vsub.f32 1.0, %v2034
        %v2036 = vmul.f32 %v2033, %v2035
        %v2037 = vadd.f32 %v2033, %v2036
        %vm2038 = vweird.f32 %v1733
        %vm2039 = vweird.f32 %v2033
        %vm2040 = vmor %vm2038, %vm2039
        %v2041 = vsel %vm2040, %v2033, %v2037
        %v2042 = vand.u32 2147483647, %v1733
        %vm2043 = vcmp.eq.f32.partialorder %v2042, 8.507059e+37
        %v2044 = vand.u32 %v1733, 2147483648
        %v2045 = vor.u32 1.1754944e-38, %v2044
        %v2046 = vsel %vm2043, %v2045, %v2041
        %v2047 = vmul.f32 %v397, %v2046
        %v2048 = vrcp.pop %v1734
        %v2049 = vmul.f32 %v1734, %v2048
        %v2050 = vsub.f32 1.0, %v2049
        %v2051 = vmul.f32 %v2048, %v2050
        %v2052 = vadd.f32 %v2048, %v2051
        %vm2053 = vweird.f32 %v1734
        %vm2054 = vweird.f32 %v2048
        %vm2055 = vmor %vm2053, %vm2054
        %v2056 = vsel %vm2055, %v2048, %v2052
        %v2057 = vand.u32 2147483647, %v1734
        %vm2058 = vcmp.eq.f32.partialorder %v2057, 8.507059e+37
        %v2059 = vand.u32 %v1734, 2147483648
        %v2060 = vor.u32 1.1754944e-38, %v2059
        %v2061 = vsel %vm2058, %v2060, %v2056
        %v2062 = vmul.f32 %v398, %v2061
        %v2063 = vrcp.pop %v1735
        %v2064 = vmul.f32 %v1735, %v2063
        %v2065 = vsub.f32 1.0, %v2064
        %v2066 = vmul.f32 %v2063, %v2065
        %v2067 = vadd.f32 %v2063, %v2066
        %vm2068 = vweird.f32 %v1735
        %vm2069 = vweird.f32 %v2063
        %vm2070 = vmor %vm2068, %vm2069
        %v2071 = vsel %vm2070, %v2063, %v2067
        %v2072 = vand.u32 2147483647, %v1735
        %vm2073 = vcmp.eq.f32.partialorder %v2072, 8.507059e+37
        %v2074 = vand.u32 %v1735, 2147483648
        %v2075 = vor.u32 1.1754944e-38, %v2074
        %v2076 = vsel %vm2073, %v2075, %v2071
        %v2077 = vmul.f32 %v399, %v2076
        %v2078 = vrcp.pop %v1736
        %v2079 = vmul.f32 %v1736, %v2078
        %v2080 = vsub.f32 1.0, %v2079
        %v2081 = vmul.f32 %v2078, %v2080
        %v2082 = vadd.f32 %v2078, %v2081
        %vm2083 = vweird.f32 %v1736
        %vm2084 = vweird.f32 %v2078
        %vm2085 = vmor %vm2083, %vm2084
        %v2086 = vsel %vm2085, %v2078, %v2082
        %v2087 = vand.u32 2147483647, %v1736
        %vm2088 = vcmp.eq.f32.partialorder %v2087, 8.507059e+37
        %v2089 = vand.u32 %v1736, 2147483648
        %v2090 = vor.u32 1.1754944e-38, %v2089
        %v2091 = vsel %vm2088, %v2090, %v2086
        %v2092 = vmul.f32 %v400, %v2091
        %v2093 = vrcp.pop %v1737
        %v2094 = vmul.f32 %v1737, %v2093
        %v2095 = vsub.f32 1.0, %v2094
        %v2096 = vmul.f32 %v2093, %v2095
        %v2097 = vadd.f32 %v2093, %v2096
        %vm2098 = vweird.f32 %v1737
        %vm2099 = vweird.f32 %v2093
        %vm2100 = vmor %vm2098, %vm2099
        %v2101 = vsel %vm2100, %v2093, %v2097
        %v2102 = vand.u32 2147483647, %v1737
        %vm2103 = vcmp.eq.f32.partialorder %v2102, 8.507059e+37
        %v2104 = vand.u32 %v1737, 2147483648
        %v2105 = vor.u32 1.1754944e-38, %v2104
        %v2106 = vsel %vm2103, %v2105, %v2101
        %v2107 = vmul.f32 %v401, %v2106
        %v2108 = vrcp.pop %v1738
        %v2109 = vmul.f32 %v1738, %v2108
        %v2110 = vsub.f32 1.0, %v2109
        %v2111 = vmul.f32 %v2108, %v2110
        %v2112 = vadd.f32 %v2108, %v2111
        %vm2113 = vweird.f32 %v1738
        %vm2114 = vweird.f32 %v2108
        %vm2115 = vmor %vm2113, %vm2114
        %v2116 = vsel %vm2115, %v2108, %v2112
        %v2117 = vand.u32 2147483647, %v1738
        %vm2118 = vcmp.eq.f32.partialorder %v2117, 8.507059e+37
        %v2119 = vand.u32 %v1738, 2147483648
        %v2120 = vor.u32 1.1754944e-38, %v2119
        %v2121 = vsel %vm2118, %v2120, %v2116
        %v2122 = vmul.f32 %v402, %v2121
        %v2123 = vrcp.pop %v1739
        %v2124 = vmul.f32 %v1739, %v2123
        %v2125 = vsub.f32 1.0, %v2124
        %v2126 = vmul.f32 %v2123, %v2125
        %v2127 = vadd.f32 %v2123, %v2126
        %vm2128 = vweird.f32 %v1739
        %vm2129 = vweird.f32 %v2123
        %vm2130 = vmor %vm2128, %vm2129
        %v2131 = vsel %vm2130, %v2123, %v2127
        %v2132 = vand.u32 2147483647, %v1739
        %vm2133 = vcmp.eq.f32.partialorder %v2132, 8.507059e+37
        %v2134 = vand.u32 %v1739, 2147483648
        %v2135 = vor.u32 1.1754944e-38, %v2134
        %v2136 = vsel %vm2133, %v2135, %v2131
        %v2137 = vmul.f32 %v403, %v2136
        %v2138 = vrcp.pop %v1740
        %v2139 = vmul.f32 %v1740, %v2138
        %v2140 = vsub.f32 1.0, %v2139
        %v2141 = vmul.f32 %v2138, %v2140
        %v2142 = vadd.f32 %v2138, %v2141
        %vm2143 = vweird.f32 %v1740
        %vm2144 = vweird.f32 %v2138
        %vm2145 = vmor %vm2143, %vm2144
        %v2146 = vsel %vm2145, %v2138, %v2142
        %v2147 = vand.u32 2147483647, %v1740
        %vm2148 = vcmp.eq.f32.partialorder %v2147, 8.507059e+37
        %v2149 = vand.u32 %v1740, 2147483648
        %v2150 = vor.u32 1.1754944e-38, %v2149
        %v2151 = vsel %vm2148, %v2150, %v2146
        %v2152 = vmul.f32 %v404, %v2151
        %v2153 = vrcp.pop %v1741
        %v2154 = vmul.f32 %v1741, %v2153
        %v2155 = vsub.f32 1.0, %v2154
        %v2156 = vmul.f32 %v2153, %v2155
        %v2157 = vadd.f32 %v2153, %v2156
        %vm2158 = vweird.f32 %v1741
        %vm2159 = vweird.f32 %v2153
        %vm2160 = vmor %vm2158, %vm2159
        %v2161 = vsel %vm2160, %v2153, %v2157
        %v2162 = vand.u32 2147483647, %v1741
        %vm2163 = vcmp.eq.f32.partialorder %v2162, 8.507059e+37
        %v2164 = vand.u32 %v1741, 2147483648
        %v2165 = vor.u32 1.1754944e-38, %v2164
        %v2166 = vsel %vm2163, %v2165, %v2161
        %v2167 = vmul.f32 %v405, %v2166
        %v2168 = vrcp.pop %v1742
        %v2169 = vmul.f32 %v1742, %v2168
        %v2170 = vsub.f32 1.0, %v2169
        %v2171 = vmul.f32 %v2168, %v2170
        %v2172 = vadd.f32 %v2168, %v2171
        %vm2173 = vweird.f32 %v1742
        %vm2174 = vweird.f32 %v2168
        %vm2175 = vmor %vm2173, %vm2174
        %v2176 = vsel %vm2175, %v2168, %v2172
        %v2177 = vand.u32 2147483647, %v1742
        %vm2178 = vcmp.eq.f32.partialorder %v2177, 8.507059e+37
        %v2179 = vand.u32 %v1742, 2147483648
        %v2180 = vor.u32 1.1754944e-38, %v2179
        %v2181 = vsel %vm2178, %v2180, %v2176
        %v2182 = vmul.f32 %v406, %v2181
        %v2183 = vrcp.pop %v1743
        %v2184 = vmul.f32 %v1743, %v2183
        %v2185 = vsub.f32 1.0, %v2184
        %v2186 = vmul.f32 %v2183, %v2185
        %v2187 = vadd.f32 %v2183, %v2186
        %vm2188 = vweird.f32 %v1743
        %vm2189 = vweird.f32 %v2183
        %vm2190 = vmor %vm2188, %vm2189
        %v2191 = vsel %vm2190, %v2183, %v2187
        %v2192 = vand.u32 2147483647, %v1743
        %vm2193 = vcmp.eq.f32.partialorder %v2192, 8.507059e+37
        %v2194 = vand.u32 %v1743, 2147483648
        %v2195 = vor.u32 1.1754944e-38, %v2194
        %v2196 = vsel %vm2193, %v2195, %v2191
        %v2197 = vmul.f32 %v407, %v2196
        %v2198 = vrcp.pop %v1744
        %v2199 = vmul.f32 %v1744, %v2198
        %v2200 = vsub.f32 1.0, %v2199
        %v2201 = vmul.f32 %v2198, %v2200
        %v2202 = vadd.f32 %v2198, %v2201
        %vm2203 = vweird.f32 %v1744
        %vm2204 = vweird.f32 %v2198
        %vm2205 = vmor %vm2203, %vm2204
        %v2206 = vsel %vm2205, %v2198, %v2202
        %v2207 = vand.u32 2147483647, %v1744
        %vm2208 = vcmp.eq.f32.partialorder %v2207, 8.507059e+37
        %v2209 = vand.u32 %v1744, 2147483648
        %v2210 = vor.u32 1.1754944e-38, %v2209
        %v2211 = vsel %vm2208, %v2210, %v2206
        %v2212 = vmul.f32 %v408, %v2211
        %v2213 = vrcp.pop %v1745
        %v2214 = vmul.f32 %v1745, %v2213
        %v2215 = vsub.f32 1.0, %v2214
        %v2216 = vmul.f32 %v2213, %v2215
        %v2217 = vadd.f32 %v2213, %v2216
        %vm2218 = vweird.f32 %v1745
        %vm2219 = vweird.f32 %v2213
        %vm2220 = vmor %vm2218, %vm2219
        %v2221 = vsel %vm2220, %v2213, %v2217
        %v2222 = vand.u32 2147483647, %v1745
        %vm2223 = vcmp.eq.f32.partialorder %v2222, 8.507059e+37
        %v2224 = vand.u32 %v1745, 2147483648
        %v2225 = vor.u32 1.1754944e-38, %v2224
        %v2226 = vsel %vm2223, %v2225, %v2221
        %v2227 = vmul.f32 %v409, %v2226
        %v2228 = vrcp.pop %v1746
        %v2229 = vmul.f32 %v1746, %v2228
        %v2230 = vsub.f32 1.0, %v2229
        %v2231 = vmul.f32 %v2228, %v2230
        %v2232 = vadd.f32 %v2228, %v2231
        %vm2233 = vweird.f32 %v1746
        %vm2234 = vweird.f32 %v2228
        %vm2235 = vmor %vm2233, %vm2234
        %v2236 = vsel %vm2235, %v2228, %v2232
        %v2237 = vand.u32 2147483647, %v1746
        %vm2238 = vcmp.eq.f32.partialorder %v2237, 8.507059e+37
        %v2239 = vand.u32 %v1746, 2147483648
        %v2240 = vor.u32 1.1754944e-38, %v2239
        %v2241 = vsel %vm2238, %v2240, %v2236
        %v2242 = vmul.f32 %v410, %v2241
        %v2243 = vrcp.pop %v1747
        %v2244 = vmul.f32 %v1747, %v2243
        %v2245 = vsub.f32 1.0, %v2244
        %v2246 = vmul.f32 %v2243, %v2245
        %v2247 = vadd.f32 %v2243, %v2246
        %vm2248 = vweird.f32 %v1747
        %vm2249 = vweird.f32 %v2243
        %vm2250 = vmor %vm2248, %vm2249
        %v2251 = vsel %vm2250, %v2243, %v2247
        %v2252 = vand.u32 2147483647, %v1747
        %vm2253 = vcmp.eq.f32.partialorder %v2252, 8.507059e+37
        %v2254 = vand.u32 %v1747, 2147483648
        %v2255 = vor.u32 1.1754944e-38, %v2254
        %v2256 = vsel %vm2253, %v2255, %v2251
        %v2257 = vmul.f32 %v411, %v2256
        %v2258 = vrcp.pop %v1748
        %v2259 = vmul.f32 %v1748, %v2258
        %v2260 = vsub.f32 1.0, %v2259
        %v2261 = vmul.f32 %v2258, %v2260
        %v2262 = vadd.f32 %v2258, %v2261
        %vm2263 = vweird.f32 %v1748
        %vm2264 = vweird.f32 %v2258
        %vm2265 = vmor %vm2263, %vm2264
        %v2266 = vsel %vm2265, %v2258, %v2262
        %v2267 = vand.u32 2147483647, %v1748
        %vm2268 = vcmp.eq.f32.partialorder %v2267, 8.507059e+37
        %v2269 = vand.u32 %v1748, 2147483648
        %v2270 = vor.u32 1.1754944e-38, %v2269
        %v2271 = vsel %vm2268, %v2270, %v2266
        %v2272 = vmul.f32 %v412, %v2271
        %v2273 = vrcp.pop %v1749
        %v2274 = vmul.f32 %v1749, %v2273
        %v2275 = vsub.f32 1.0, %v2274
        %v2276 = vmul.f32 %v2273, %v2275
        %v2277 = vadd.f32 %v2273, %v2276
        %vm2278 = vweird.f32 %v1749
        %vm2279 = vweird.f32 %v2273
        %vm2280 = vmor %vm2278, %vm2279
        %v2281 = vsel %vm2280, %v2273, %v2277
        %v2282 = vand.u32 2147483647, %v1749
        %vm2283 = vcmp.eq.f32.partialorder %v2282, 8.507059e+37
        %v2284 = vand.u32 %v1749, 2147483648
        %v2285 = vor.u32 1.1754944e-38, %v2284
        %v2286 = vsel %vm2283, %v2285, %v2281
        %v2287 = vmul.f32 %v413, %v2286
        %v2288 = vrcp.pop %v1750
        %v2289 = vmul.f32 %v1750, %v2288
        %v2290 = vsub.f32 1.0, %v2289
        %v2291 = vmul.f32 %v2288, %v2290
        %v2292 = vadd.f32 %v2288, %v2291
        %vm2293 = vweird.f32 %v1750
        %vm2294 = vweird.f32 %v2288
        %vm2295 = vmor %vm2293, %vm2294
        %v2296 = vsel %vm2295, %v2288, %v2292
        %v2297 = vand.u32 2147483647, %v1750
        %vm2298 = vcmp.eq.f32.partialorder %v2297, 8.507059e+37
        %v2299 = vand.u32 %v1750, 2147483648
        %v2300 = vor.u32 1.1754944e-38, %v2299
        %v2301 = vsel %vm2298, %v2300, %v2296
        %v2302 = vmul.f32 %v414, %v2301
        %v2303 = vrcp.pop %v1751
        %v2304 = vmul.f32 %v1751, %v2303
        %v2305 = vsub.f32 1.0, %v2304
        %v2306 = vmul.f32 %v2303, %v2305
        %v2307 = vadd.f32 %v2303, %v2306
        %vm2308 = vweird.f32 %v1751
        %vm2309 = vweird.f32 %v2303
        %vm2310 = vmor %vm2308, %vm2309
        %v2311 = vsel %vm2310, %v2303, %v2307
        %v2312 = vand.u32 2147483647, %v1751
        %vm2313 = vcmp.eq.f32.partialorder %v2312, 8.507059e+37
        %v2314 = vand.u32 %v1751, 2147483648
        %v2315 = vor.u32 1.1754944e-38, %v2314
        %v2316 = vsel %vm2313, %v2315, %v2311
        %v2317 = vmul.f32 %v415, %v2316
        %v2318 = vrcp.pop %v1752
        %v2319 = vmul.f32 %v1752, %v2318
        %v2320 = vsub.f32 1.0, %v2319
        %v2321 = vmul.f32 %v2318, %v2320
        %v2322 = vadd.f32 %v2318, %v2321
        %vm2323 = vweird.f32 %v1752
        %vm2324 = vweird.f32 %v2318
        %vm2325 = vmor %vm2323, %vm2324
        %v2326 = vsel %vm2325, %v2318, %v2322
        %v2327 = vand.u32 2147483647, %v1752
        %vm2328 = vcmp.eq.f32.partialorder %v2327, 8.507059e+37
        %v2329 = vand.u32 %v1752, 2147483648
        %v2330 = vor.u32 1.1754944e-38, %v2329
        %v2331 = vsel %vm2328, %v2330, %v2326
        %v2332 = vmul.f32 %v416, %v2331
        %v2333 = vrcp.pop %v1753
        %v2334 = vmul.f32 %v1753, %v2333
        %v2335 = vsub.f32 1.0, %v2334
        %v2336 = vmul.f32 %v2333, %v2335
        %v2337 = vadd.f32 %v2333, %v2336
        %vm2338 = vweird.f32 %v1753
        %vm2339 = vweird.f32 %v2333
        %vm2340 = vmor %vm2338, %vm2339
        %v2341 = vsel %vm2340, %v2333, %v2337
        %v2342 = vand.u32 2147483647, %v1753
        %vm2343 = vcmp.eq.f32.partialorder %v2342, 8.507059e+37
        %v2344 = vand.u32 %v1753, 2147483648
        %v2345 = vor.u32 1.1754944e-38, %v2344
        %v2346 = vsel %vm2343, %v2345, %v2341
        %v2347 = vmul.f32 %v417, %v2346
        %v2348 = vrcp.pop %v1754
        %v2349 = vmul.f32 %v1754, %v2348
        %v2350 = vsub.f32 1.0, %v2349
        %v2351 = vmul.f32 %v2348, %v2350
        %v2352 = vadd.f32 %v2348, %v2351
        %vm2353 = vweird.f32 %v1754
        %vm2354 = vweird.f32 %v2348
        %vm2355 = vmor %vm2353, %vm2354
        %v2356 = vsel %vm2355, %v2348, %v2352
        %v2357 = vand.u32 2147483647, %v1754
        %vm2358 = vcmp.eq.f32.partialorder %v2357, 8.507059e+37
        %v2359 = vand.u32 %v1754, 2147483648
        %v2360 = vor.u32 1.1754944e-38, %v2359
        %v2361 = vsel %vm2358, %v2360, %v2356
        %v2362 = vmul.f32 %v418, %v2361
        %v2363 = vrcp.pop %v1755
        %v2364 = vmul.f32 %v1755, %v2363
        %v2365 = vsub.f32 1.0, %v2364
        %v2366 = vmul.f32 %v2363, %v2365
        %v2367 = vadd.f32 %v2363, %v2366
        %vm2368 = vweird.f32 %v1755
        %vm2369 = vweird.f32 %v2363
        %vm2370 = vmor %vm2368, %vm2369
        %v2371 = vsel %vm2370, %v2363, %v2367
        %v2372 = vand.u32 2147483647, %v1755
        %vm2373 = vcmp.eq.f32.partialorder %v2372, 8.507059e+37
        %v2374 = vand.u32 %v1755, 2147483648
        %v2375 = vor.u32 1.1754944e-38, %v2374
        %v2376 = vsel %vm2373, %v2375, %v2371
        %v2377 = vmul.f32 %v419, %v2376
        %v2378 = vrcp.pop %v1756
        %v2379 = vmul.f32 %v1756, %v2378
        %v2380 = vsub.f32 1.0, %v2379
        %v2381 = vmul.f32 %v2378, %v2380
        %v2382 = vadd.f32 %v2378, %v2381
        %vm2383 = vweird.f32 %v1756
        %vm2384 = vweird.f32 %v2378
        %vm2385 = vmor %vm2383, %vm2384
        %v2386 = vsel %vm2385, %v2378, %v2382
        %v2387 = vand.u32 2147483647, %v1756
        %vm2388 = vcmp.eq.f32.partialorder %v2387, 8.507059e+37
        %v2389 = vand.u32 %v1756, 2147483648
        %v2390 = vor.u32 1.1754944e-38, %v2389
        %v2391 = vsel %vm2388, %v2390, %v2386
        %v2392 = vmul.f32 %v420, %v2391
        %v2393 = vrcp.pop %v1757
        %v2394 = vmul.f32 %v1757, %v2393
        %v2395 = vsub.f32 1.0, %v2394
        %v2396 = vmul.f32 %v2393, %v2395
        %v2397 = vadd.f32 %v2393, %v2396
        %vm2398 = vweird.f32 %v1757
        %vm2399 = vweird.f32 %v2393
        %vm2400 = vmor %vm2398, %vm2399
        %v2401 = vsel %vm2400, %v2393, %v2397
        %v2402 = vand.u32 2147483647, %v1757
        %vm2403 = vcmp.eq.f32.partialorder %v2402, 8.507059e+37
        %v2404 = vand.u32 %v1757, 2147483648
        %v2405 = vor.u32 1.1754944e-38, %v2404
        %v2406 = vsel %vm2403, %v2405, %v2401
        %v2407 = vmul.f32 %v421, %v2406
        %v2408 = vrcp.pop %v1758
        %v2409 = vmul.f32 %v1758, %v2408
        %v2410 = vsub.f32 1.0, %v2409
        %v2411 = vmul.f32 %v2408, %v2410
        %v2412 = vadd.f32 %v2408, %v2411
        %vm2413 = vweird.f32 %v1758
        %vm2414 = vweird.f32 %v2408
        %vm2415 = vmor %vm2413, %vm2414
        %v2416 = vsel %vm2415, %v2408, %v2412
        %v2417 = vand.u32 2147483647, %v1758
        %vm2418 = vcmp.eq.f32.partialorder %v2417, 8.507059e+37
        %v2419 = vand.u32 %v1758, 2147483648
        %v2420 = vor.u32 1.1754944e-38, %v2419
        %v2421 = vsel %vm2418, %v2420, %v2416
        %v2422 = vmul.f32 %v422, %v2421
        %v2423 = vrcp.pop %v1759
        %v2424 = vmul.f32 %v1759, %v2423
        %v2425 = vsub.f32 1.0, %v2424
        %v2426 = vmul.f32 %v2423, %v2425
        %v2427 = vadd.f32 %v2423, %v2426
        %vm2428 = vweird.f32 %v1759
        %vm2429 = vweird.f32 %v2423
        %vm2430 = vmor %vm2428, %vm2429
        %v2431 = vsel %vm2430, %v2423, %v2427
        %v2432 = vand.u32 2147483647, %v1759
        %vm2433 = vcmp.eq.f32.partialorder %v2432, 8.507059e+37
        %v2434 = vand.u32 %v1759, 2147483648
        %v2435 = vor.u32 1.1754944e-38, %v2434
        %v2436 = vsel %vm2433, %v2435, %v2431
        %v2437 = vmul.f32 %v423, %v2436
        %v2438 = vrcp.pop %v1760
        %v2439 = vmul.f32 %v1760, %v2438
        %v2440 = vsub.f32 1.0, %v2439
        %v2441 = vmul.f32 %v2438, %v2440
        %v2442 = vadd.f32 %v2438, %v2441
        %vm2443 = vweird.f32 %v1760
        %vm2444 = vweird.f32 %v2438
        %vm2445 = vmor %vm2443, %vm2444
        %v2446 = vsel %vm2445, %v2438, %v2442
        %v2447 = vand.u32 2147483647, %v1760
        %vm2448 = vcmp.eq.f32.partialorder %v2447, 8.507059e+37
        %v2449 = vand.u32 %v1760, 2147483648
        %v2450 = vor.u32 1.1754944e-38, %v2449
        %v2451 = vsel %vm2448, %v2450, %v2446
        %v2452 = vmul.f32 %v424, %v2451
        %v2453 = vrcp.pop %v1761
        %v2454 = vmul.f32 %v1761, %v2453
        %v2455 = vsub.f32 1.0, %v2454
        %v2456 = vmul.f32 %v2453, %v2455
        %v2457 = vadd.f32 %v2453, %v2456
        %vm2458 = vweird.f32 %v1761
        %vm2459 = vweird.f32 %v2453
        %vm2460 = vmor %vm2458, %vm2459
        %v2461 = vsel %vm2460, %v2453, %v2457
        %v2462 = vand.u32 2147483647, %v1761
        %vm2463 = vcmp.eq.f32.partialorder %v2462, 8.507059e+37
        %v2464 = vand.u32 %v1761, 2147483648
        %v2465 = vor.u32 1.1754944e-38, %v2464
        %v2466 = vsel %vm2463, %v2465, %v2461
        %v2467 = vmul.f32 %v425, %v2466
        %v2468 = vrcp.pop %v1762
        %v2469 = vmul.f32 %v1762, %v2468
        %v2470 = vsub.f32 1.0, %v2469
        %v2471 = vmul.f32 %v2468, %v2470
        %v2472 = vadd.f32 %v2468, %v2471
        %vm2473 = vweird.f32 %v1762
        %vm2474 = vweird.f32 %v2468
        %vm2475 = vmor %vm2473, %vm2474
        %v2476 = vsel %vm2475, %v2468, %v2472
        %v2477 = vand.u32 2147483647, %v1762
        %vm2478 = vcmp.eq.f32.partialorder %v2477, 8.507059e+37
        %v2479 = vand.u32 %v1762, 2147483648
        %v2480 = vor.u32 1.1754944e-38, %v2479
        %v2481 = vsel %vm2478, %v2480, %v2476
        %v2482 = vmul.f32 %v426, %v2481
        %v2484 = vsel %vm449, %v721, 0
        %v2487 = vsel %vm449, %v736, 0
        %v2490 = vsel %vm449, %v751, 0
        %v2493 = vsel %vm449, %v766, 0
        %v2496 = vsel %vm449, %v781, 0
        %v2499 = vsel %vm449, %v796, 0
        %v2502 = vsel %vm449, %v811, 0
        %v2505 = vsel %vm449, %v826, 0
        %v2508 = vsel %vm449, %v841, 0
        %v2511 = vsel %vm449, %v856, 0
        %v2514 = vsel %vm449, %v871, 0
        %v2517 = vsel %vm449, %v886, 0
        %v2520 = vsel %vm449, %v901, 0
        %v2523 = vsel %vm449, %v916, 0
        %v2526 = vsel %vm449, %v931, 0
        %v2529 = vsel %vm449, %v946, 0
        %v2532 = vsel %vm449, %v1777, 0
        %v2535 = vsel %vm449, %v1792, 0
        %v2538 = vsel %vm449, %v1807, 0
        %v2541 = vsel %vm449, %v1822, 0
        %v2544 = vsel %vm449, %v1837, 0
        %v2547 = vsel %vm449, %v1852, 0
        %v2550 = vsel %vm449, %v1867, 0
        %v2553 = vsel %vm449, %v1882, 0
        %v2556 = vsel %vm449, %v1897, 0
        %v2559 = vsel %vm449, %v1912, 0
        %v2562 = vsel %vm449, %v1927, 0
        %v2565 = vsel %vm449, %v1942, 0
        %v2568 = vsel %vm449, %v1957, 0
        %v2571 = vsel %vm449, %v1972, 0
        %v2574 = vsel %vm449, %v1987, 0
        %v2577 = vsel %vm449, %v2002, 0
        %2579 = vmatpush.xpose.msra.mxu0 %v2577
        %2580 = vmatpush.xpose.msra.mxu0 %v2574
        %2581 = vmatpush.xpose.msra.mxu0 %v2571
        %2582 = vmatpush.xpose.msra.mxu0 %v2568
        %2583 = vmatpush.xpose.msra.mxu0 %v2565
        %2584 = vmatpush.xpose.msra.mxu0 %v2562
        %2585 = vmatpush.xpose.msra.mxu0 %v2559
        %2586 = vmatpush.xpose.msra.mxu0 %v2556
        %2587 = vmatpush.xpose.msra.mxu0 %v2553
        %2588 = vmatpush.xpose.msra.mxu0 %v2550
        %2589 = vmatpush.xpose.msra.mxu0 %v2547
        %2590 = vmatpush.xpose.msra.mxu0 %v2544
        %2591 = vmatpush.xpose.msra.mxu0 %v2541
        %2592 = vmatpush.xpose.msra.mxu0 %v2538
        %2593 = vmatpush.xpose.msra.mxu0 %v2535
        %2594 = vmatpush.xpose.msra.mxu0 %v2532
        %2595 = vmatmul.f32.gmra.mxu0 %v2484
        %v2596 = vpop.f32.mrf.mxu0
        %v2597 = vadd.f32 0.0, %v2596
        %2598 = vmatmul.f32.gmra.mxu0 %v2487
        %v2599 = vpop.f32.mrf.mxu0
        %v2600 = vadd.f32 0.0, %v2599
        %2601 = vmatmul.f32.gmra.mxu0 %v2490
        %v2602 = vpop.f32.mrf.mxu0
        %v2603 = vadd.f32 0.0, %v2602
        %2604 = vmatmul.f32.gmra.mxu0 %v2493
        %v2605 = vpop.f32.mrf.mxu0
        %v2606 = vadd.f32 0.0, %v2605
        %2607 = vmatmul.f32.gmra.mxu0 %v2496
        %v2608 = vpop.f32.mrf.mxu0
        %v2609 = vadd.f32 0.0, %v2608
        %2610 = vmatmul.f32.gmra.mxu0 %v2499
        %v2611 = vpop.f32.mrf.mxu0
        %v2612 = vadd.f32 0.0, %v2611
        %2613 = vmatmul.f32.gmra.mxu0 %v2502
        %v2614 = vpop.f32.mrf.mxu0
        %v2615 = vadd.f32 0.0, %v2614
        %2616 = vmatmul.f32.gmra.mxu0 %v2505
        %v2617 = vpop.f32.mrf.mxu0
        %v2618 = vadd.f32 0.0, %v2617
        %2619 = vmatmul.f32.gmra.mxu0 %v2508
        %v2620 = vpop.f32.mrf.mxu0
        %v2621 = vadd.f32 0.0, %v2620
        %2622 = vmatmul.f32.gmra.mxu0 %v2511
        %v2623 = vpop.f32.mrf.mxu0
        %v2624 = vadd.f32 0.0, %v2623
        %2625 = vmatmul.f32.gmra.mxu0 %v2514
        %v2626 = vpop.f32.mrf.mxu0
        %v2627 = vadd.f32 0.0, %v2626
        %2628 = vmatmul.f32.gmra.mxu0 %v2517
        %v2629 = vpop.f32.mrf.mxu0
        %v2630 = vadd.f32 0.0, %v2629
        %2631 = vmatmul.f32.gmra.mxu0 %v2520
        %v2632 = vpop.f32.mrf.mxu0
        %v2633 = vadd.f32 0.0, %v2632
        %2634 = vmatmul.f32.gmra.mxu0 %v2523
        %v2635 = vpop.f32.mrf.mxu0
        %v2636 = vadd.f32 0.0, %v2635
        %2637 = vmatmul.f32.gmra.mxu0 %v2526
        %v2638 = vpop.f32.mrf.mxu0
        %v2639 = vadd.f32 0.0, %v2638
        %2640 = vmatmul.f32.gmra.mxu0 %v2529
        %v2641 = vpop.f32.mrf.mxu0
        %v2642 = vadd.f32 0.0, %v2641
        %2643 = vdwg.mxu0
        %v2645 = vsel %vm449, %v2017, 0
        %v2648 = vsel %vm449, %v2032, 0
        %v2651 = vsel %vm449, %v2047, 0
        %v2654 = vsel %vm449, %v2062, 0
        %v2657 = vsel %vm449, %v2077, 0
        %v2660 = vsel %vm449, %v2092, 0
        %v2663 = vsel %vm449, %v2107, 0
        %v2666 = vsel %vm449, %v2122, 0
        %v2669 = vsel %vm449, %v2137, 0
        %v2672 = vsel %vm449, %v2152, 0
        %v2675 = vsel %vm449, %v2167, 0
        %v2678 = vsel %vm449, %v2182, 0
        %v2681 = vsel %vm449, %v2197, 0
        %v2684 = vsel %vm449, %v2212, 0
        %v2687 = vsel %vm449, %v2227, 0
        %v2690 = vsel %vm449, %v2242, 0
        %2692 = vmatpush.xpose.msra.mxu0 %v2690
        %2693 = vmatpush.xpose.msra.mxu0 %v2687
        %2694 = vmatpush.xpose.msra.mxu0 %v2684
        %2695 = vmatpush.xpose.msra.mxu0 %v2681
        %2696 = vmatpush.xpose.msra.mxu0 %v2678
        %2697 = vmatpush.xpose.msra.mxu0 %v2675
        %2698 = vmatpush.xpose.msra.mxu0 %v2672
        %2699 = vmatpush.xpose.msra.mxu0 %v2669
        %2700 = vmatpush.xpose.msra.mxu0 %v2666
        %2701 = vmatpush.xpose.msra.mxu0 %v2663
        %2702 = vmatpush.xpose.msra.mxu0 %v2660
        %2703 = vmatpush.xpose.msra.mxu0 %v2657
        %2704 = vmatpush.xpose.msra.mxu0 %v2654
        %2705 = vmatpush.xpose.msra.mxu0 %v2651
        %2706 = vmatpush.xpose.msra.mxu0 %v2648
        %2707 = vmatpush.xpose.msra.mxu0 %v2645
        %2708 = vmatmul.f32.gmra.mxu0 %v2484
        %v2709 = vpop.f32.mrf.mxu0
        %v2710 = vadd.f32 0.0, %v2709
        %2711 = vmatmul.f32.gmra.mxu0 %v2487
        %v2712 = vpop.f32.mrf.mxu0
        %v2713 = vadd.f32 0.0, %v2712
        %2714 = vmatmul.f32.gmra.mxu0 %v2490
        %v2715 = vpop.f32.mrf.mxu0
        %v2716 = vadd.f32 0.0, %v2715
        %2717 = vmatmul.f32.gmra.mxu0 %v2493
        %v2718 = vpop.f32.mrf.mxu0
        %v2719 = vadd.f32 0.0, %v2718
        %2720 = vmatmul.f32.gmra.mxu0 %v2496
        %v2721 = vpop.f32.mrf.mxu0
        %v2722 = vadd.f32 0.0, %v2721
        %2723 = vmatmul.f32.gmra.mxu0 %v2499
        %v2724 = vpop.f32.mrf.mxu0
        %v2725 = vadd.f32 0.0, %v2724
        %2726 = vmatmul.f32.gmra.mxu0 %v2502
        %v2727 = vpop.f32.mrf.mxu0
        %v2728 = vadd.f32 0.0, %v2727
        %2729 = vmatmul.f32.gmra.mxu0 %v2505
        %v2730 = vpop.f32.mrf.mxu0
        %v2731 = vadd.f32 0.0, %v2730
        %2732 = vmatmul.f32.gmra.mxu0 %v2508
        %v2733 = vpop.f32.mrf.mxu0
        %v2734 = vadd.f32 0.0, %v2733
        %2735 = vmatmul.f32.gmra.mxu0 %v2511
        %v2736 = vpop.f32.mrf.mxu0
        %v2737 = vadd.f32 0.0, %v2736
        %2738 = vmatmul.f32.gmra.mxu0 %v2514
        %v2739 = vpop.f32.mrf.mxu0
        %v2740 = vadd.f32 0.0, %v2739
        %2741 = vmatmul.f32.gmra.mxu0 %v2517
        %v2742 = vpop.f32.mrf.mxu0
        %v2743 = vadd.f32 0.0, %v2742
        %2744 = vmatmul.f32.gmra.mxu0 %v2520
        %v2745 = vpop.f32.mrf.mxu0
        %v2746 = vadd.f32 0.0, %v2745
        %2747 = vmatmul.f32.gmra.mxu0 %v2523
        %v2748 = vpop.f32.mrf.mxu0
        %v2749 = vadd.f32 0.0, %v2748
        %2750 = vmatmul.f32.gmra.mxu0 %v2526
        %v2751 = vpop.f32.mrf.mxu0
        %v2752 = vadd.f32 0.0, %v2751
        %2753 = vmatmul.f32.gmra.mxu0 %v2529
        %v2754 = vpop.f32.mrf.mxu0
        %v2755 = vadd.f32 0.0, %v2754
        %2756 = vdwg.mxu0
        %v2758 = vsel %vm449, %v2257, 0
        %v2761 = vsel %vm449, %v2272, 0
        %v2764 = vsel %vm449, %v2287, 0
        %v2767 = vsel %vm449, %v2302, 0
        %v2770 = vsel %vm449, %v2317, 0
        %v2773 = vsel %vm449, %v2332, 0
        %v2776 = vsel %vm449, %v2347, 0
        %v2779 = vsel %vm449, %v2362, 0
        %v2782 = vsel %vm449, %v2377, 0
        %v2785 = vsel %vm449, %v2392, 0
        %v2788 = vsel %vm449, %v2407, 0
        %v2791 = vsel %vm449, %v2422, 0
        %v2794 = vsel %vm449, %v2437, 0
        %v2797 = vsel %vm449, %v2452, 0
        %v2800 = vsel %vm449, %v2467, 0
        %v2803 = vsel %vm449, %v2482, 0
        %2805 = vmatpush.xpose.msra.mxu0 %v2803
        %2806 = vmatpush.xpose.msra.mxu0 %v2800
        %2807 = vmatpush.xpose.msra.mxu0 %v2797
        %2808 = vmatpush.xpose.msra.mxu0 %v2794
        %2809 = vmatpush.xpose.msra.mxu0 %v2791
        %2810 = vmatpush.xpose.msra.mxu0 %v2788
        %2811 = vmatpush.xpose.msra.mxu0 %v2785
        %2812 = vmatpush.xpose.msra.mxu0 %v2782
        %2813 = vmatpush.xpose.msra.mxu0 %v2779
        %2814 = vmatpush.xpose.msra.mxu0 %v2776
        %2815 = vmatpush.xpose.msra.mxu0 %v2773
        %2816 = vmatpush.xpose.msra.mxu0 %v2770
        %2817 = vmatpush.xpose.msra.mxu0 %v2767
        %2818 = vmatpush.xpose.msra.mxu0 %v2764
        %2819 = vmatpush.xpose.msra.mxu0 %v2761
        %2820 = vmatpush.xpose.msra.mxu0 %v2758
        %2821 = vmatmul.f32.gmra.mxu0 %v2484
        %v2822 = vpop.f32.mrf.mxu0
        %v2823 = vadd.f32 0.0, %v2822
        %2824 = vmatmul.f32.gmra.mxu0 %v2487
        %v2825 = vpop.f32.mrf.mxu0
        %v2826 = vadd.f32 0.0, %v2825
        %2827 = vmatmul.f32.gmra.mxu0 %v2490
        %v2828 = vpop.f32.mrf.mxu0
        %v2829 = vadd.f32 0.0, %v2828
        %2830 = vmatmul.f32.gmra.mxu0 %v2493
        %v2831 = vpop.f32.mrf.mxu0
        %v2832 = vadd.f32 0.0, %v2831
        %2833 = vmatmul.f32.gmra.mxu0 %v2496
        %v2834 = vpop.f32.mrf.mxu0
        %v2835 = vadd.f32 0.0, %v2834
        %2836 = vmatmul.f32.gmra.mxu0 %v2499
        %v2837 = vpop.f32.mrf.mxu0
        %v2838 = vadd.f32 0.0, %v2837
        %2839 = vmatmul.f32.gmra.mxu0 %v2502
        %v2840 = vpop.f32.mrf.mxu0
        %v2841 = vadd.f32 0.0, %v2840
        %2842 = vmatmul.f32.gmra.mxu0 %v2505
        %v2843 = vpop.f32.mrf.mxu0
        %v2844 = vadd.f32 0.0, %v2843
        %2845 = vmatmul.f32.gmra.mxu0 %v2508
        %v2846 = vpop.f32.mrf.mxu0
        %v2847 = vadd.f32 0.0, %v2846
        %2848 = vmatmul.f32.gmra.mxu0 %v2511
        %v2849 = vpop.f32.mrf.mxu0
        %v2850 = vadd.f32 0.0, %v2849
        %2851 = vmatmul.f32.gmra.mxu0 %v2514
        %v2852 = vpop.f32.mrf.mxu0
        %v2853 = vadd.f32 0.0, %v2852
        %2854 = vmatmul.f32.gmra.mxu0 %v2517
        %v2855 = vpop.f32.mrf.mxu0
        %v2856 = vadd.f32 0.0, %v2855
        %2857 = vmatmul.f32.gmra.mxu0 %v2520
        %v2858 = vpop.f32.mrf.mxu0
        %v2859 = vadd.f32 0.0, %v2858
        %2860 = vmatmul.f32.gmra.mxu0 %v2523
        %v2861 = vpop.f32.mrf.mxu0
        %v2862 = vadd.f32 0.0, %v2861
        %2863 = vmatmul.f32.gmra.mxu0 %v2526
        %v2864 = vpop.f32.mrf.mxu0
        %v2865 = vadd.f32 0.0, %v2864
        %2866 = vmatmul.f32.gmra.mxu0 %v2529
        %v2867 = vpop.f32.mrf.mxu0
        %v2868 = vadd.f32 0.0, %v2867
        %2869 = vdwg.mxu0
        %vm2870 = vcmask 990208
        %v2871 = vsel %vm2870, %v2597, 0.0
        %v2872 = vsel %vm2870, %v2600, 0.0
        %v2873 = vadd.f32 %v2871, %v2872
        %v2874 = vsel %vm2870, %v2603, 0.0
        %v2875 = vadd.f32 %v2873, %v2874
        %v2876 = vsel %vm2870, %v2606, 0.0
        %v2877 = vadd.f32 %v2875, %v2876
        %v2878 = vsel %vm2870, %v2609, 0.0
        %v2879 = vadd.f32 %v2877, %v2878
        %v2880 = vsel %vm2870, %v2612, 0.0
        %v2881 = vadd.f32 %v2879, %v2880
        %v2882 = vsel %vm2870, %v2615, 0.0
        %v2883 = vadd.f32 %v2881, %v2882
        %v2884 = vsel %vm2870, %v2618, 0.0
        %v2885 = vadd.f32 %v2883, %v2884
        %v2886 = vsel %vm2870, %v2621, 0.0
        %v2887 = vadd.f32 %v2885, %v2886
        %v2888 = vsel %vm2870, %v2624, 0.0
        %v2889 = vadd.f32 %v2887, %v2888
        %v2890 = vsel %vm2870, %v2627, 0.0
        %v2891 = vadd.f32 %v2889, %v2890
        %v2892 = vsel %vm2870, %v2630, 0.0
        %v2893 = vadd.f32 %v2891, %v2892
        %v2894 = vsel %vm2870, %v2633, 0.0
        %v2895 = vadd.f32 %v2893, %v2894
        %v2896 = vsel %vm2870, %v2636, 0.0
        %v2897 = vadd.f32 %v2895, %v2896
        %v2898 = vsel %vm2870, %v2639, 0.0
        %v2899 = vadd.f32 %v2897, %v2898
        %vm2900 = vcmask 983040
        %v2901 = vsel %vm2900, %v2642, 0.0
        %v2902 = vadd.f32 %v2899, %v2901
        %v2903 = vrot.slane %v2902, 4
        %v2904 = vadd.f32 %v2902, %v2903
        %v2905 = vrot.slane %v2904, 2
        %v2906 = vadd.f32 %v2904, %v2905
        %v2907 = vrot.slane %v2906, 1
        %v2908 = vadd.f32 %v2906, %v2907
        %v2909 = vsel %vm2870, %v2710, 0.0
        %v2910 = vsel %vm2870, %v2713, 0.0
        %v2911 = vadd.f32 %v2909, %v2910
        %v2912 = vsel %vm2870, %v2716, 0.0
        %v2913 = vadd.f32 %v2911, %v2912
        %v2914 = vsel %vm2870, %v2719, 0.0
        %v2915 = vadd.f32 %v2913, %v2914
        %v2916 = vsel %vm2870, %v2722, 0.0
        %v2917 = vadd.f32 %v2915, %v2916
        %v2918 = vsel %vm2870, %v2725, 0.0
        %v2919 = vadd.f32 %v2917, %v2918
        %v2920 = vsel %vm2870, %v2728, 0.0
        %v2921 = vadd.f32 %v2919, %v2920
        %v2922 = vsel %vm2870, %v2731, 0.0
        %v2923 = vadd.f32 %v2921, %v2922
        %v2924 = vsel %vm2870, %v2734, 0.0
        %v2925 = vadd.f32 %v2923, %v2924
        %v2926 = vsel %vm2870, %v2737, 0.0
        %v2927 = vadd.f32 %v2925, %v2926
        %v2928 = vsel %vm2870, %v2740, 0.0
        %v2929 = vadd.f32 %v2927, %v2928
        %v2930 = vsel %vm2870, %v2743, 0.0
        %v2931 = vadd.f32 %v2929, %v2930
        %v2932 = vsel %vm2870, %v2746, 0.0
        %v2933 = vadd.f32 %v2931, %v2932
        %v2934 = vsel %vm2870, %v2749, 0.0
        %v2935 = vadd.f32 %v2933, %v2934
        %v2936 = vsel %vm2870, %v2752, 0.0
        %v2937 = vadd.f32 %v2935, %v2936
        %v2938 = vsel %vm2900, %v2755, 0.0
        %v2939 = vadd.f32 %v2937, %v2938
        %v2940 = vrot.slane %v2939, 4
        %v2941 = vadd.f32 %v2939, %v2940
        %v2942 = vrot.slane %v2941, 2
        %v2943 = vadd.f32 %v2941, %v2942
        %v2944 = vrot.slane %v2943, 1
        %v2945 = vadd.f32 %v2943, %v2944
        %v2946 = vsel %vm2870, %v2823, 0.0
        %v2947 = vsel %vm2870, %v2826, 0.0
        %v2948 = vadd.f32 %v2946, %v2947
        %v2949 = vsel %vm2870, %v2829, 0.0
        %v2950 = vadd.f32 %v2948, %v2949
        %v2951 = vsel %vm2870, %v2832, 0.0
        %v2952 = vadd.f32 %v2950, %v2951
        %v2953 = vsel %vm2870, %v2835, 0.0
        %v2954 = vadd.f32 %v2952, %v2953
        %v2955 = vsel %vm2870, %v2838, 0.0
        %v2956 = vadd.f32 %v2954, %v2955
        %v2957 = vsel %vm2870, %v2841, 0.0
        %v2958 = vadd.f32 %v2956, %v2957
        %v2959 = vsel %vm2870, %v2844, 0.0
        %v2960 = vadd.f32 %v2958, %v2959
        %v2961 = vsel %vm2870, %v2847, 0.0
        %v2962 = vadd.f32 %v2960, %v2961
        %v2963 = vsel %vm2870, %v2850, 0.0
        %v2964 = vadd.f32 %v2962, %v2963
        %v2965 = vsel %vm2870, %v2853, 0.0
        %v2966 = vadd.f32 %v2964, %v2965
        %v2967 = vsel %vm2870, %v2856, 0.0
        %v2968 = vadd.f32 %v2966, %v2967
        %v2969 = vsel %vm2870, %v2859, 0.0
        %v2970 = vadd.f32 %v2968, %v2969
        %v2971 = vsel %vm2870, %v2862, 0.0
        %v2972 = vadd.f32 %v2970, %v2971
        %v2973 = vsel %vm2870, %v2865, 0.0
        %v2974 = vadd.f32 %v2972, %v2973
        %v2975 = vsel %vm2900, %v2868, 0.0
        %v2976 = vadd.f32 %v2974, %v2975
        %v2977 = vrot.slane %v2976, 4
        %v2978 = vadd.f32 %v2976, %v2977
        %v2979 = vrot.slane %v2978, 2
        %v2980 = vadd.f32 %v2978, %v2979
        %v2981 = vrot.slane %v2980, 1
        %v2982 = vadd.f32 %v2980, %v2981
        %v2983 = vrcp.pop 121.0
        %v2984 = vmul.f32 121.0, %v2983
        %v2985 = vsub.f32 1.0, %v2984
        %v2986 = vmul.f32 %v2983, %v2985
        %v2987 = vadd.f32 %v2983, %v2986
        %vm2988 = vweird.f32 %v2983
        %v2989 = vsel %vm2988, %v2983, %v2987
        %v2990 = vmul.f32 %v2908, %v2989
        %v2991 = vmul.f32 %v2945, %v2989
        %v2992 = vmul.f32 %v2982, %v2989
        %v2994 = vperm.slane %v429, 0
        %vm2999 = vcmask 1041409
        %v3000 = vsel %vm2999, %v2991, %v2990
        %vm3001 = vcmask 1042434
        %v3002 = vsel %vm3001, %v2992, %v3000
        %v3003 = vsel %vm2870, %v3002, 0
        %v3006 = vsel %vm2870, %v427, 0
        %v3009 = vsel %vm2870, %v428, 0
        %3011 = vmatpush.xpose.msra.mxu0 0.0
        %3012 = vmatpush.xpose.msra.mxu0 0.0
        %3013 = vmatpush.xpose.msra.mxu0 0.0
        %3014 = vmatpush.xpose.msra.mxu0 0.0
        %3015 = vmatpush.xpose.msra.mxu0 0.0
        %3016 = vmatpush.xpose.msra.mxu0 0.0
        %3017 = vmatpush.xpose.msra.mxu0 0.0
        %3018 = vmatpush.xpose.msra.mxu0 0.0
        %3019 = vmatpush.xpose.msra.mxu0 0.0
        %3020 = vmatpush.xpose.msra.mxu0 0.0
        %3021 = vmatpush.xpose.msra.mxu0 0.0
        %3022 = vmatpush.xpose.msra.mxu0 0.0
        %3023 = vmatpush.xpose.msra.mxu0 0.0
        %3024 = vmatpush.xpose.msra.mxu0 0.0
        %3025 = vmatpush.xpose.msra.mxu0 %v3009
        %3026 = vmatpush.xpose.msra.mxu0 %v3006
        %3027 = vmatmul.f32.gmra.mxu0 %v3003
        %v3028 = vpop.f32.mrf.mxu0
        %v3029 = vadd.f32 %v2994, %v3028
        %3030 = vdwg.mxu0
        %v3031 = vmul.f32 %v3029, 0.999995
        %v3032 = vmax.f32 %v3031, 0.0
        %v3034 = vperm.slane %v432, 0
        %vm3036 = vcmask 89088
        %v3038 = vsel %vm3036, %v3032, 0
        %vm3040 = vcmask 1042432
        %v3042 = vsel %vm3040, %v431, 0
        %3044 = vmatpush.msra.mxu0 0.0
        %3045 = vmatpush.msra.mxu0 0.0
        %3046 = vmatpush.msra.mxu0 0.0
        %3047 = vmatpush.msra.mxu0 0.0
        %3048 = vmatpush.msra.mxu0 0.0
        %3049 = vmatpush.msra.mxu0 0.0
        %3050 = vmatpush.msra.mxu0 0.0
        %3051 = vmatpush.msra.mxu0 0.0
        %3052 = vmatpush.msra.mxu0 0.0
        %3053 = vmatpush.msra.mxu0 0.0
        %3054 = vmatpush.msra.mxu0 0.0
        %3055 = vmatpush.msra.mxu0 0.0
        %3056 = vmatpush.msra.mxu0 0.0
        %3057 = vmatpush.msra.mxu0 0.0
        %3058 = vmatpush.msra.mxu0 %v3042
        %3059 = vmatpush.msra.mxu0 %v430
        %3060 = vmatmul.f32.gmra.mxu0 %v3038
        %v3061 = vpop.f32.mrf.mxu0
        %v3062 = vadd.f32 %v3034, %v3061
        %3063 = vdwg.mxu0
        %v3065 = vrot.slane %v3062, 1
        %v3066 = vrot.slane %v3062, 2
        %v3067 = vperm.slane %v3062, 0
        %v3068 = vperm.slane %v3065, 0
        %v3069 = vperm.slane %v3066, 0
        %v3073 = vmul.f32 %v2597, %v3067
        %v3074 = vmul.f32 %v2600, %v3067
        %v3075 = vmul.f32 %v2603, %v3067
        %v3076 = vmul.f32 %v2606, %v3067
        %v3077 = vmul.f32 %v2609, %v3067
        %v3078 = vmul.f32 %v2612, %v3067
        %v3079 = vmul.f32 %v2615, %v3067
        %v3080 = vmul.f32 %v2618, %v3067
        %v3081 = vmul.f32 %v2621, %v3067
        %v3082 = vmul.f32 %v2624, %v3067
        %v3083 = vmul.f32 %v2627, %v3067
        %v3084 = vmul.f32 %v2630, %v3067
        %v3085 = vmul.f32 %v2633, %v3067
        %v3086 = vmul.f32 %v2636, %v3067
        %v3087 = vmul.f32 %v2639, %v3067
        %v3088 = vmul.f32 %v2642, %v3067
        %v3089 = vmul.f32 %v2710, %v3068
        %v3090 = vmul.f32 %v2713, %v3068
        %v3091 = vmul.f32 %v2716, %v3068
        %v3092 = vmul.f32 %v2719, %v3068
        %v3093 = vmul.f32 %v2722, %v3068
        %v3094 = vmul.f32 %v2725, %v3068
        %v3095 = vmul.f32 %v2728, %v3068
        %v3096 = vmul.f32 %v2731, %v3068
        %v3097 = vmul.f32 %v2734, %v3068
        %v3098 = vmul.f32 %v2737, %v3068
        %v3099 = vmul.f32 %v2740, %v3068
        %v3100 = vmul.f32 %v2743, %v3068
        %v3101 = vmul.f32 %v2746, %v3068
        %v3102 = vmul.f32 %v2749, %v3068
        %v3103 = vmul.f32 %v2752, %v3068
        %v3104 = vmul.f32 %v2755, %v3068
        %v3105 = vmul.f32 %v2823, %v3069
        %v3106 = vmul.f32 %v2826, %v3069
        %v3107 = vmul.f32 %v2829, %v3069
        %v3108 = vmul.f32 %v2832, %v3069
        %v3109 = vmul.f32 %v2835, %v3069
        %v3110 = vmul.f32 %v2838, %v3069
        %v3111 = vmul.f32 %v2841, %v3069
        %v3112 = vmul.f32 %v2844, %v3069
        %v3113 = vmul.f32 %v2847, %v3069
        %v3114 = vmul.f32 %v2850, %v3069
        %v3115 = vmul.f32 %v2853, %v3069
        %v3116 = vmul.f32 %v2856, %v3069
        %v3117 = vmul.f32 %v2859, %v3069
        %v3118 = vmul.f32 %v2862, %v3069
        %v3119 = vmul.f32 %v2865, %v3069
        %v3120 = vmul.f32 %v2868, %v3069
        %v3121 = vsel %vm2870, %v3073, 0.0
        %3122 = vadd.xlane.f32.xlu0 %v3121
        %v3123 = vpop.xlane.xlu0 %3122
        %v3124 = vsel %vm2870, %v3074, 0.0
        %3125 = vadd.xlane.f32.xlu0 %v3124
        %v3126 = vpop.xlane.xlu0 %3125
        %v3127 = vsel %vm2870, %v3075, 0.0
        %3128 = vadd.xlane.f32.xlu0 %v3127
        %v3129 = vpop.xlane.xlu0 %3128
        %v3130 = vsel %vm2870, %v3076, 0.0
        %3131 = vadd.xlane.f32.xlu0 %v3130
        %v3132 = vpop.xlane.xlu0 %3131
        %v3133 = vsel %vm2870, %v3077, 0.0
        %3134 = vadd.xlane.f32.xlu0 %v3133
        %v3135 = vpop.xlane.xlu0 %3134
        %v3136 = vsel %vm2870, %v3078, 0.0
        %3137 = vadd.xlane.f32.xlu0 %v3136
        %v3138 = vpop.xlane.xlu0 %3137
        %v3139 = vsel %vm2870, %v3079, 0.0
        %3140 = vadd.xlane.f32.xlu0 %v3139
        %v3141 = vpop.xlane.xlu0 %3140
        %v3142 = vsel %vm2870, %v3080, 0.0
        %3143 = vadd.xlane.f32.xlu0 %v3142
        %v3144 = vpop.xlane.xlu0 %3143
        %v3145 = vsel %vm2870, %v3081, 0.0
        %3146 = vadd.xlane.f32.xlu0 %v3145
        %v3147 = vpop.xlane.xlu0 %3146
        %v3148 = vsel %vm2870, %v3082, 0.0
        %3149 = vadd.xlane.f32.xlu0 %v3148
        %v3150 = vpop.xlane.xlu0 %3149
        %v3151 = vsel %vm2870, %v3083, 0.0
        %3152 = vadd.xlane.f32.xlu0 %v3151
        %v3153 = vpop.xlane.xlu0 %3152
        %v3154 = vsel %vm2870, %v3084, 0.0
        %3155 = vadd.xlane.f32.xlu0 %v3154
        %v3156 = vpop.xlane.xlu0 %3155
        %v3157 = vsel %vm2870, %v3085, 0.0
        %3158 = vadd.xlane.f32.xlu0 %v3157
        %v3159 = vpop.xlane.xlu0 %3158
        %v3160 = vsel %vm2870, %v3086, 0.0
        %3161 = vadd.xlane.f32.xlu0 %v3160
        %v3162 = vpop.xlane.xlu0 %3161
        %v3163 = vsel %vm2870, %v3087, 0.0
        %3164 = vadd.xlane.f32.xlu0 %v3163
        %v3165 = vpop.xlane.xlu0 %3164
        %v3166 = vsel %vm2900, %v3088, 0.0
        %3167 = vadd.xlane.f32.xlu0 %v3166
        %v3168 = vpop.xlane.xlu0 %3167
        %v3169 = vsel %vm2870, %v3089, 0.0
        %3170 = vadd.xlane.f32.xlu0 %v3169
        %v3171 = vpop.xlane.xlu0 %3170
        %v3172 = vsel %vm2870, %v3090, 0.0
        %3173 = vadd.xlane.f32.xlu0 %v3172
        %v3174 = vpop.xlane.xlu0 %3173
        %v3175 = vsel %vm2870, %v3091, 0.0
        %3176 = vadd.xlane.f32.xlu0 %v3175
        %v3177 = vpop.xlane.xlu0 %3176
        %v3178 = vsel %vm2870, %v3092, 0.0
        %3179 = vadd.xlane.f32.xlu0 %v3178
        %v3180 = vpop.xlane.xlu0 %3179
        %v3181 = vsel %vm2870, %v3093, 0.0
        %3182 = vadd.xlane.f32.xlu0 %v3181
        %v3183 = vpop.xlane.xlu0 %3182
        %v3184 = vsel %vm2870, %v3094, 0.0
        %3185 = vadd.xlane.f32.xlu0 %v3184
        %v3186 = vpop.xlane.xlu0 %3185
        %v3187 = vsel %vm2870, %v3095, 0.0
        %3188 = vadd.xlane.f32.xlu0 %v3187
        %v3189 = vpop.xlane.xlu0 %3188
        %v3190 = vsel %vm2870, %v3096, 0.0
        %3191 = vadd.xlane.f32.xlu0 %v3190
        %v3192 = vpop.xlane.xlu0 %3191
        %v3193 = vsel %vm2870, %v3097, 0.0
        %3194 = vadd.xlane.f32.xlu0 %v3193
        %v3195 = vpop.xlane.xlu0 %3194
        %v3196 = vsel %vm2870, %v3098, 0.0
        %3197 = vadd.xlane.f32.xlu0 %v3196
        %v3198 = vpop.xlane.xlu0 %3197
        %v3199 = vsel %vm2870, %v3099, 0.0
        %3200 = vadd.xlane.f32.xlu0 %v3199
        %v3201 = vpop.xlane.xlu0 %3200
        %v3202 = vsel %vm2870, %v3100, 0.0
        %3203 = vadd.xlane.f32.xlu0 %v3202
        %v3204 = vpop.xlane.xlu0 %3203
        %v3205 = vsel %vm2870, %v3101, 0.0
        %3206 = vadd.xlane.f32.xlu0 %v3205
        %v3207 = vpop.xlane.xlu0 %3206
        %v3208 = vsel %vm2870, %v3102, 0.0
        %3209 = vadd.xlane.f32.xlu0 %v3208
        %v3210 = vpop.xlane.xlu0 %3209
        %v3211 = vsel %vm2870, %v3103, 0.0
        %3212 = vadd.xlane.f32.xlu0 %v3211
        %v3213 = vpop.xlane.xlu0 %3212
        %v3214 = vsel %vm2900, %v3104, 0.0
        %3215 = vadd.xlane.f32.xlu0 %v3214
        %v3216 = vpop.xlane.xlu0 %3215
        %v3217 = vsel %vm2870, %v3105, 0.0
        %3218 = vadd.xlane.f32.xlu0 %v3217
        %v3219 = vpop.xlane.xlu0 %3218
        %v3220 = vsel %vm2870, %v3106, 0.0
        %3221 = vadd.xlane.f32.xlu0 %v3220
        %v3222 = vpop.xlane.xlu0 %3221
        %v3223 = vsel %vm2870, %v3107, 0.0
        %3224 = vadd.xlane.f32.xlu0 %v3223
        %v3225 = vpop.xlane.xlu0 %3224
        %v3226 = vsel %vm2870, %v3108, 0.0
        %3227 = vadd.xlane.f32.xlu0 %v3226
        %v3228 = vpop.xlane.xlu0 %3227
        %v3229 = vsel %vm2870, %v3109, 0.0
        %3230 = vadd.xlane.f32.xlu0 %v3229
        %v3231 = vpop.xlane.xlu0 %3230
        %v3232 = vsel %vm2870, %v3110, 0.0
        %3233 = vadd.xlane.f32.xlu0 %v3232
        %v3234 = vpop.xlane.xlu0 %3233
        %v3235 = vsel %vm2870, %v3111, 0.0
        %3236 = vadd.xlane.f32.xlu0 %v3235
        %v3237 = vpop.xlane.xlu0 %3236
        %v3238 = vsel %vm2870, %v3112, 0.0
        %3239 = vadd.xlane.f32.xlu0 %v3238
        %v3240 = vpop.xlane.xlu0 %3239
        %v3241 = vsel %vm2870, %v3113, 0.0
        %3242 = vadd.xlane.f32.xlu0 %v3241
        %v3243 = vpop.xlane.xlu0 %3242
        %v3244 = vsel %vm2870, %v3114, 0.0
        %3245 = vadd.xlane.f32.xlu0 %v3244
        %v3246 = vpop.xlane.xlu0 %3245
        %v3247 = vsel %vm2870, %v3115, 0.0
        %3248 = vadd.xlane.f32.xlu0 %v3247
        %v3249 = vpop.xlane.xlu0 %3248
        %v3250 = vsel %vm2870, %v3116, 0.0
        %3251 = vadd.xlane.f32.xlu0 %v3250
        %v3252 = vpop.xlane.xlu0 %3251
        %v3253 = vsel %vm2870, %v3117, 0.0
        %3254 = vadd.xlane.f32.xlu0 %v3253
        %v3255 = vpop.xlane.xlu0 %3254
        %v3256 = vsel %vm2870, %v3118, 0.0
        %3257 = vadd.xlane.f32.xlu0 %v3256
        %v3258 = vpop.xlane.xlu0 %3257
        %v3259 = vsel %vm2870, %v3119, 0.0
        %3260 = vadd.xlane.f32.xlu0 %v3259
        %v3261 = vpop.xlane.xlu0 %3260
        %v3262 = vsel %vm2900, %v3120, 0.0
        %3263 = vadd.xlane.f32.xlu0 %v3262
        %v3264 = vpop.xlane.xlu0 %3263
        %v3265 = vmul.f32 %v3123, 0.3305785
        %v3266 = vmul.f32 %v3126, 0.3305785
        %v3267 = vmul.f32 %v3129, 0.3305785
        %v3268 = vmul.f32 %v3132, 0.3305785
        %v3269 = vmul.f32 %v3135, 0.3305785
        %v3270 = vmul.f32 %v3138, 0.3305785
        %v3271 = vmul.f32 %v3141, 0.3305785
        %v3272 = vmul.f32 %v3144, 0.3305785
        %v3273 = vmul.f32 %v3147, 0.3305785
        %v3274 = vmul.f32 %v3150, 0.3305785
        %v3275 = vmul.f32 %v3153, 0.3305785
        %v3276 = vmul.f32 %v3156, 0.3305785
        %v3277 = vmul.f32 %v3159, 0.3305785
        %v3278 = vmul.f32 %v3162, 0.3305785
        %v3279 = vmul.f32 %v3165, 0.3305785
        %v3280 = vmul.f32 %v3168, 0.3305785
        %v3281 = vmul.f32 %v3171, 0.3305785
        %v3282 = vmul.f32 %v3174, 0.3305785
        %v3283 = vmul.f32 %v3177, 0.3305785
        %v3284 = vmul.f32 %v3180, 0.3305785
        %v3285 = vmul.f32 %v3183, 0.3305785
        %v3286 = vmul.f32 %v3186, 0.3305785
        %v3287 = vmul.f32 %v3189, 0.3305785
        %v3288 = vmul.f32 %v3192, 0.3305785
        %v3289 = vmul.f32 %v3195, 0.3305785
        %v3290 = vmul.f32 %v3198, 0.3305785
        %v3291 = vmul.f32 %v3201, 0.3305785
        %v3292 = vmul.f32 %v3204, 0.3305785
        %v3293 = vmul.f32 %v3207, 0.3305785
        %v3294 = vmul.f32 %v3210, 0.3305785
        %v3295 = vmul.f32 %v3213, 0.3305785
        %v3296 = vmul.f32 %v3216, 0.3305785
        %v3297 = vmul.f32 %v3219, 0.3305785
        %v3298 = vmul.f32 %v3222, 0.3305785
        %v3299 = vmul.f32 %v3225, 0.3305785
        %v3300 = vmul.f32 %v3228, 0.3305785
        %v3301 = vmul.f32 %v3231, 0.3305785
        %v3302 = vmul.f32 %v3234, 0.3305785
        %v3303 = vmul.f32 %v3237, 0.3305785
        %v3304 = vmul.f32 %v3240, 0.3305785
        %v3305 = vmul.f32 %v3243, 0.3305785
        %v3306 = vmul.f32 %v3246, 0.3305785
        %v3307 = vmul.f32 %v3249, 0.3305785
        %v3308 = vmul.f32 %v3252, 0.3305785
        %v3309 = vmul.f32 %v3255, 0.3305785
        %v3310 = vmul.f32 %v3258, 0.3305785
        %v3311 = vmul.f32 %v3261, 0.3305785
        %v3312 = vmul.f32 %v3264, 0.3305785
        %v3361 = vlaneseq
        %v3362 = vand.u32 %v3361, 127
        %v3363 = vperm.slane %v3265, %v3362
        %v3364 = vadd.s32 %v3362, 4294967288
        %v3365 = vperm.slane %v3266, %v3364
        %vm3366 = vcmask 130112
        %v3367 = vsel %vm3366, %v3365, %v3363
        %v3368 = vadd.s32 %v3362, 4294967280
        %v3369 = vperm.slane %v3267, %v3368
        %vm3370 = vcmask 195712
        %v3371 = vsel %vm3370, %v3369, %v3367
        %v3372 = vadd.s32 %v3362, 4294967272
        %v3373 = vperm.slane %v3268, %v3372
        %vm3374 = vcmask 261312
        %v3375 = vsel %vm3374, %v3373, %v3371
        %v3376 = vadd.s32 %v3362, 4294967264
        %v3377 = vperm.slane %v3269, %v3376
        %vm3378 = vcmask 326912
        %v3379 = vsel %vm3378, %v3377, %v3375
        %v3380 = vadd.s32 %v3362, 4294967256
        %v3381 = vperm.slane %v3270, %v3380
        %vm3382 = vcmask 392512
        %v3383 = vsel %vm3382, %v3381, %v3379
        %v3384 = vadd.s32 %v3362, 4294967248
        %v3385 = vperm.slane %v3271, %v3384
        %vm3386 = vcmask 458112
        %v3387 = vsel %vm3386, %v3385, %v3383
        %v3388 = vadd.s32 %v3362, 4294967240
        %v3389 = vperm.slane %v3272, %v3388
        %vm3390 = vcmask 523712
        %v3391 = vsel %vm3390, %v3389, %v3387
        %v3392 = vadd.s32 %v3362, 4294967232
        %v3393 = vperm.slane %v3273, %v3392
        %vm3394 = vcmask 589312
        %v3395 = vsel %vm3394, %v3393, %v3391
        %v3396 = vadd.s32 %v3362, 4294967224
        %v3397 = vperm.slane %v3274, %v3396
        %vm3398 = vcmask 654912
        %v3399 = vsel %vm3398, %v3397, %v3395
        %v3400 = vadd.s32 %v3362, 4294967216
        %v3401 = vperm.slane %v3275, %v3400
        %vm3402 = vcmask 720512
        %v3403 = vsel %vm3402, %v3401, %v3399
        %v3404 = vadd.s32 %v3362, 4294967208
        %v3405 = vperm.slane %v3276, %v3404
        %vm3406 = vcmask 786112
        %v3407 = vsel %vm3406, %v3405, %v3403
        %v3408 = vadd.s32 %v3362, 4294967200
        %v3409 = vperm.slane %v3277, %v3408
        %vm3410 = vcmask 851712
        %v3411 = vsel %vm3410, %v3409, %v3407
        %v3412 = vadd.s32 %v3362, 4294967192
        %v3413 = vperm.slane %v3278, %v3412
        %vm3414 = vcmask 917312
        %v3415 = vsel %vm3414, %v3413, %v3411
        %v3416 = vadd.s32 %v3362, 4294967184
        %v3417 = vperm.slane %v3279, %v3416
        %vm3418 = vcmask 982912
        %v3419 = vsel %vm3418, %v3417, %v3415
        %v3420 = vadd.s32 %v3362, 4294967176
        %v3421 = vperm.slane %v3280, %v3420
        %vm3422 = vcmask 1048512
        %v3423 = vsel %vm3422, %v3421, %v3419
        %v3424 = vperm.slane %v3281, %v3362
        %v3425 = vperm.slane %v3282, %v3364
        %v3426 = vsel %vm3366, %v3425, %v3424
        %v3427 = vperm.slane %v3283, %v3368
        %v3428 = vsel %vm3370, %v3427, %v3426
        %v3429 = vperm.slane %v3284, %v3372
        %v3430 = vsel %vm3374, %v3429, %v3428
        %v3431 = vperm.slane %v3285, %v3376
        %v3432 = vsel %vm3378, %v3431, %v3430
        %v3433 = vperm.slane %v3286, %v3380
        %v3434 = vsel %vm3382, %v3433, %v3432
        %v3435 = vperm.slane %v3287, %v3384
        %v3436 = vsel %vm3386, %v3435, %v3434
        %v3437 = vperm.slane %v3288, %v3388
        %v3438 = vsel %vm3390, %v3437, %v3436
        %v3439 = vperm.slane %v3289, %v3392
        %v3440 = vsel %vm3394, %v3439, %v3438
        %v3441 = vperm.slane %v3290, %v3396
        %v3442 = vsel %vm3398, %v3441, %v3440
        %v3443 = vperm.slane %v3291, %v3400
        %v3444 = vsel %vm3402, %v3443, %v3442
        %v3445 = vperm.slane %v3292, %v3404
        %v3446 = vsel %vm3406, %v3445, %v3444
        %v3447 = vperm.slane %v3293, %v3408
        %v3448 = vsel %vm3410, %v3447, %v3446
        %v3449 = vperm.slane %v3294, %v3412
        %v3450 = vsel %vm3414, %v3449, %v3448
        %v3451 = vperm.slane %v3295, %v3416
        %v3452 = vsel %vm3418, %v3451, %v3450
        %v3453 = vperm.slane %v3296, %v3420
        %v3454 = vsel %vm3422, %v3453, %v3452
        %v3455 = vperm.slane %v3297, %v3362
        %v3456 = vperm.slane %v3298, %v3364
        %v3457 = vsel %vm3366, %v3456, %v3455
        %v3458 = vperm.slane %v3299, %v3368
        %v3459 = vsel %vm3370, %v3458, %v3457
        %v3460 = vperm.slane %v3300, %v3372
        %v3461 = vsel %vm3374, %v3460, %v3459
        %v3462 = vperm.slane %v3301, %v3376
        %v3463 = vsel %vm3378, %v3462, %v3461
        %v3464 = vperm.slane %v3302, %v3380
        %v3465 = vsel %vm3382, %v3464, %v3463
        %v3466 = vperm.slane %v3303, %v3384
        %v3467 = vsel %vm3386, %v3466, %v3465
        %v3468 = vperm.slane %v3304, %v3388
        %v3469 = vsel %vm3390, %v3468, %v3467
        %v3470 = vperm.slane %v3305, %v3392
        %v3471 = vsel %vm3394, %v3470, %v3469
        %v3472 = vperm.slane %v3306, %v3396
        %v3473 = vsel %vm3398, %v3472, %v3471
        %v3474 = vperm.slane %v3307, %v3400
        %v3475 = vsel %vm3402, %v3474, %v3473
        %v3476 = vperm.slane %v3308, %v3404
        %v3477 = vsel %vm3406, %v3476, %v3475
        %v3478 = vperm.slane %v3309, %v3408
        %v3479 = vsel %vm3410, %v3478, %v3477
        %v3480 = vperm.slane %v3310, %v3412
        %v3481 = vsel %vm3414, %v3480, %v3479
        %v3482 = vperm.slane %v3311, %v3416
        %v3483 = vsel %vm3418, %v3482, %v3481
        %v3484 = vperm.slane %v3312, %v3420
        %v3485 = vsel %vm3422, %v3484, %v3483
        %v3486 = vsel %vm2999, %v3454, %v3423
        %v3487 = vsel %vm3001, %v3485, %v3486
        %vm3489 = vcmask 985088
        %v3490 = vsel %vm3489, %v3487, -inf
        %3491 = vmax.xlane.f32.xlu0 %v3490
        %v3492 = vpop.xlane.xlu0 %3491
        %v3494 = vperm.slane %v3492, 0
        %v3495 = vperm.slane %v3492, 1
        %v3496 = vperm.slane %v3492, 2
        %v3500 = vsub.f32 %v3265, %v3494
        %v3501 = vsub.f32 %v3266, %v3494
        %v3502 = vsub.f32 %v3267, %v3494
        %v3503 = vsub.f32 %v3268, %v3494
        %v3504 = vsub.f32 %v3269, %v3494
        %v3505 = vsub.f32 %v3270, %v3494
        %v3506 = vsub.f32 %v3271, %v3494
        %v3507 = vsub.f32 %v3272, %v3494
        %v3508 = vsub.f32 %v3273, %v3494
        %v3509 = vsub.f32 %v3274, %v3494
        %v3510 = vsub.f32 %v3275, %v3494
        %v3511 = vsub.f32 %v3276, %v3494
        %v3512 = vsub.f32 %v3277, %v3494
        %v3513 = vsub.f32 %v3278, %v3494
        %v3514 = vsub.f32 %v3279, %v3494
        %v3515 = vsub.f32 %v3280, %v3494
        %v3516 = vsub.f32 %v3281, %v3495
        %v3517 = vsub.f32 %v3282, %v3495
        %v3518 = vsub.f32 %v3283, %v3495
        %v3519 = vsub.f32 %v3284, %v3495
        %v3520 = vsub.f32 %v3285, %v3495
        %v3521 = vsub.f32 %v3286, %v3495
        %v3522 = vsub.f32 %v3287, %v3495
        %v3523 = vsub.f32 %v3288, %v3495
        %v3524 = vsub.f32 %v3289, %v3495
        %v3525 = vsub.f32 %v3290, %v3495
        %v3526 = vsub.f32 %v3291, %v3495
        %v3527 = vsub.f32 %v3292, %v3495
        %v3528 = vsub.f32 %v3293, %v3495
        %v3529 = vsub.f32 %v3294, %v3495
        %v3530 = vsub.f32 %v3295, %v3495
        %v3531 = vsub.f32 %v3296, %v3495
        %v3532 = vsub.f32 %v3297, %v3496
        %v3533 = vsub.f32 %v3298, %v3496
        %v3534 = vsub.f32 %v3299, %v3496
        %v3535 = vsub.f32 %v3300, %v3496
        %v3536 = vsub.f32 %v3301, %v3496
        %v3537 = vsub.f32 %v3302, %v3496
        %v3538 = vsub.f32 %v3303, %v3496
        %v3539 = vsub.f32 %v3304, %v3496
        %v3540 = vsub.f32 %v3305, %v3496
        %v3541 = vsub.f32 %v3306, %v3496
        %v3542 = vsub.f32 %v3307, %v3496
        %v3543 = vsub.f32 %v3308, %v3496
        %v3544 = vsub.f32 %v3309, %v3496
        %v3545 = vsub.f32 %v3310, %v3496
        %v3546 = vsub.f32 %v3311, %v3496
        %v3547 = vsub.f32 %v3312, %v3496
        %v3548 = vmul.f32 %v3500, 1.442695
        %v3549 = vpow.pop %v3548
        %v3550 = vmul.f32 %v3501, 1.442695
        %v3551 = vpow.pop %v3550
        %v3552 = vmul.f32 %v3502, 1.442695
        %v3553 = vpow.pop %v3552
        %v3554 = vmul.f32 %v3503, 1.442695
        %v3555 = vpow.pop %v3554
        %v3556 = vmul.f32 %v3504, 1.442695
        %v3557 = vpow.pop %v3556
        %v3558 = vmul.f32 %v3505, 1.442695
        %v3559 = vpow.pop %v3558
        %v3560 = vmul.f32 %v3506, 1.442695
        %v3561 = vpow.pop %v3560
        %v3562 = vmul.f32 %v3507, 1.442695
        %v3563 = vpow.pop %v3562
        %v3564 = vmul.f32 %v3508, 1.442695
        %v3565 = vpow.pop %v3564
        %v3566 = vmul.f32 %v3509, 1.442695
        %v3567 = vpow.pop %v3566
        %v3568 = vmul.f32 %v3510, 1.442695
        %v3569 = vpow.pop %v3568
        %v3570 = vmul.f32 %v3511, 1.442695
        %v3571 = vpow.pop %v3570
        %v3572 = vmul.f32 %v3512, 1.442695
        %v3573 = vpow.pop %v3572
        %v3574 = vmul.f32 %v3513, 1.442695
        %v3575 = vpow.pop %v3574
        %v3576 = vmul.f32 %v3514, 1.442695
        %v3577 = vpow.pop %v3576
        %v3578 = vmul.f32 %v3515, 1.442695
        %v3579 = vpow.pop %v3578
        %v3580 = vmul.f32 %v3516, 1.442695
        %v3581 = vpow.pop %v3580
        %v3582 = vmul.f32 %v3517, 1.442695
        %v3583 = vpow.pop %v3582
        %v3584 = vmul.f32 %v3518, 1.442695
        %v3585 = vpow.pop %v3584
        %v3586 = vmul.f32 %v3519, 1.442695
        %v3587 = vpow.pop %v3586
        %v3588 = vmul.f32 %v3520, 1.442695
        %v3589 = vpow.pop %v3588
        %v3590 = vmul.f32 %v3521, 1.442695
        %v3591 = vpow.pop %v3590
        %v3592 = vmul.f32 %v3522, 1.442695
        %v3593 = vpow.pop %v3592
        %v3594 = vmul.f32 %v3523, 1.442695
        %v3595 = vpow.pop %v3594
        %v3596 = vmul.f32 %v3524, 1.442695
        %v3597 = vpow.pop %v3596
        %v3598 = vmul.f32 %v3525, 1.442695
        %v3599 = vpow.pop %v3598
        %v3600 = vmul.f32 %v3526, 1.442695
        %v3601 = vpow.pop %v3600
        %v3602 = vmul.f32 %v3527, 1.442695
        %v3603 = vpow.pop %v3602
        %v3604 = vmul.f32 %v3528, 1.442695
        %v3605 = vpow.pop %v3604
        %v3606 = vmul.f32 %v3529, 1.442695
        %v3607 = vpow.pop %v3606
        %v3608 = vmul.f32 %v3530, 1.442695
        %v3609 = vpow.pop %v3608
        %v3610 = vmul.f32 %v3531, 1.442695
        %v3611 = vpow.pop %v3610
        %v3612 = vmul.f32 %v3532, 1.442695
        %v3613 = vpow.pop %v3612
        %v3614 = vmul.f32 %v3533, 1.442695
        %v3615 = vpow.pop %v3614
        %v3616 = vmul.f32 %v3534, 1.442695
        %v3617 = vpow.pop %v3616
        %v3618 = vmul.f32 %v3535, 1.442695
        %v3619 = vpow.pop %v3618
        %v3620 = vmul.f32 %v3536, 1.442695
        %v3621 = vpow.pop %v3620
        %v3622 = vmul.f32 %v3537, 1.442695
        %v3623 = vpow.pop %v3622
        %v3624 = vmul.f32 %v3538, 1.442695
        %v3625 = vpow.pop %v3624
        %v3626 = vmul.f32 %v3539, 1.442695
        %v3627 = vpow.pop %v3626
        %v3628 = vmul.f32 %v3540, 1.442695
        %v3629 = vpow.pop %v3628
        %v3630 = vmul.f32 %v3541, 1.442695
        %v3631 = vpow.pop %v3630
        %v3632 = vmul.f32 %v3542, 1.442695
        %v3633 = vpow.pop %v3632
        %v3634 = vmul.f32 %v3543, 1.442695
        %v3635 = vpow.pop %v3634
        %v3636 = vmul.f32 %v3544, 1.442695
        %v3637 = vpow.pop %v3636
        %v3638 = vmul.f32 %v3545, 1.442695
        %v3639 = vpow.pop %v3638
        %v3640 = vmul.f32 %v3546, 1.442695
        %v3641 = vpow.pop %v3640
        %v3642 = vmul.f32 %v3547, 1.442695
        %v3643 = vpow.pop %v3642
        %3692 = vset.pattern.permute.xlu0 0
        %3693 = vperm.xlu0 %3692, %v3549
        %v3694 = vpop.permute.xlu0 %3693
        %3695 = vset.pattern.permute.xlu0 0
        %3696 = vperm.xlu0 %3695, %v3551
        %v3697 = vpop.permute.xlu0 %3696
        %3698 = vset.pattern.permute.xlu0 0
        %3699 = vperm.xlu0 %3698, %v3553
        %v3700 = vpop.permute.xlu0 %3699
        %3701 = vset.pattern.permute.xlu0 0
        %3702 = vperm.xlu0 %3701, %v3555
        %v3703 = vpop.permute.xlu0 %3702
        %3704 = vset.pattern.permute.xlu0 0
        %3705 = vperm.xlu0 %3704, %v3557
        %v3706 = vpop.permute.xlu0 %3705
        %3707 = vset.pattern.permute.xlu0 0
        %3708 = vperm.xlu0 %3707, %v3559
        %v3709 = vpop.permute.xlu0 %3708
        %3710 = vset.pattern.permute.xlu0 0
        %3711 = vperm.xlu0 %3710, %v3561
        %v3712 = vpop.permute.xlu0 %3711
        %3713 = vset.pattern.permute.xlu0 0
        %3714 = vperm.xlu0 %3713, %v3563
        %v3715 = vpop.permute.xlu0 %3714
        %3716 = vset.pattern.permute.xlu0 0
        %3717 = vperm.xlu0 %3716, %v3565
        %v3718 = vpop.permute.xlu0 %3717
        %3719 = vset.pattern.permute.xlu0 0
        %3720 = vperm.xlu0 %3719, %v3567
        %v3721 = vpop.permute.xlu0 %3720
        %3722 = vset.pattern.permute.xlu0 0
        %3723 = vperm.xlu0 %3722, %v3569
        %v3724 = vpop.permute.xlu0 %3723
        %3725 = vset.pattern.permute.xlu0 0
        %3726 = vperm.xlu0 %3725, %v3571
        %v3727 = vpop.permute.xlu0 %3726
        %3728 = vset.pattern.permute.xlu0 0
        %3729 = vperm.xlu0 %3728, %v3573
        %v3730 = vpop.permute.xlu0 %3729
        %3731 = vset.pattern.permute.xlu0 0
        %3732 = vperm.xlu0 %3731, %v3575
        %v3733 = vpop.permute.xlu0 %3732
        %3734 = vset.pattern.permute.xlu0 0
        %3735 = vperm.xlu0 %3734, %v3577
        %v3736 = vpop.permute.xlu0 %3735
        %3737 = vset.pattern.permute.xlu0 0
        %3738 = vperm.xlu0 %3737, %v3579
        %v3739 = vpop.permute.xlu0 %3738
        %3740 = vset.pattern.permute.xlu0 0
        %3741 = vperm.xlu0 %3740, %v3581
        %v3742 = vpop.permute.xlu0 %3741
        %3743 = vset.pattern.permute.xlu0 0
        %3744 = vperm.xlu0 %3743, %v3583
        %v3745 = vpop.permute.xlu0 %3744
        %3746 = vset.pattern.permute.xlu0 0
        %3747 = vperm.xlu0 %3746, %v3585
        %v3748 = vpop.permute.xlu0 %3747
        %3749 = vset.pattern.permute.xlu0 0
        %3750 = vperm.xlu0 %3749, %v3587
        %v3751 = vpop.permute.xlu0 %3750
        %3752 = vset.pattern.permute.xlu0 0
        %3753 = vperm.xlu0 %3752, %v3589
        %v3754 = vpop.permute.xlu0 %3753
        %3755 = vset.pattern.permute.xlu0 0
        %3756 = vperm.xlu0 %3755, %v3591
        %v3757 = vpop.permute.xlu0 %3756
        %3758 = vset.pattern.permute.xlu0 0
        %3759 = vperm.xlu0 %3758, %v3593
        %v3760 = vpop.permute.xlu0 %3759
        %3761 = vset.pattern.permute.xlu0 0
        %3762 = vperm.xlu0 %3761, %v3595
        %v3763 = vpop.permute.xlu0 %3762
        %3764 = vset.pattern.permute.xlu0 0
        %3765 = vperm.xlu0 %3764, %v3597
        %v3766 = vpop.permute.xlu0 %3765
        %3767 = vset.pattern.permute.xlu0 0
        %3768 = vperm.xlu0 %3767, %v3599
        %v3769 = vpop.permute.xlu0 %3768
        %3770 = vset.pattern.permute.xlu0 0
        %3771 = vperm.xlu0 %3770, %v3601
        %v3772 = vpop.permute.xlu0 %3771
        %3773 = vset.pattern.permute.xlu0 0
        %3774 = vperm.xlu0 %3773, %v3603
        %v3775 = vpop.permute.xlu0 %3774
        %3776 = vset.pattern.permute.xlu0 0
        %3777 = vperm.xlu0 %3776, %v3605
        %v3778 = vpop.permute.xlu0 %3777
        %3779 = vset.pattern.permute.xlu0 0
        %3780 = vperm.xlu0 %3779, %v3607
        %v3781 = vpop.permute.xlu0 %3780
        %3782 = vset.pattern.permute.xlu0 0
        %3783 = vperm.xlu0 %3782, %v3609
        %v3784 = vpop.permute.xlu0 %3783
        %3785 = vset.pattern.permute.xlu0 0
        %3786 = vperm.xlu0 %3785, %v3611
        %v3787 = vpop.permute.xlu0 %3786
        %3788 = vset.pattern.permute.xlu0 0
        %3789 = vperm.xlu0 %3788, %v3613
        %v3790 = vpop.permute.xlu0 %3789
        %3791 = vset.pattern.permute.xlu0 0
        %3792 = vperm.xlu0 %3791, %v3615
        %v3793 = vpop.permute.xlu0 %3792
        %3794 = vset.pattern.permute.xlu0 0
        %3795 = vperm.xlu0 %3794, %v3617
        %v3796 = vpop.permute.xlu0 %3795
        %3797 = vset.pattern.permute.xlu0 0
        %3798 = vperm.xlu0 %3797, %v3619
        %v3799 = vpop.permute.xlu0 %3798
        %3800 = vset.pattern.permute.xlu0 0
        %3801 = vperm.xlu0 %3800, %v3621
        %v3802 = vpop.permute.xlu0 %3801
        %3803 = vset.pattern.permute.xlu0 0
        %3804 = vperm.xlu0 %3803, %v3623
        %v3805 = vpop.permute.xlu0 %3804
        %3806 = vset.pattern.permute.xlu0 0
        %3807 = vperm.xlu0 %3806, %v3625
        %v3808 = vpop.permute.xlu0 %3807
        %3809 = vset.pattern.permute.xlu0 0
        %3810 = vperm.xlu0 %3809, %v3627
        %v3811 = vpop.permute.xlu0 %3810
        %3812 = vset.pattern.permute.xlu0 0
        %3813 = vperm.xlu0 %3812, %v3629
        %v3814 = vpop.permute.xlu0 %3813
        %3815 = vset.pattern.permute.xlu0 0
        %3816 = vperm.xlu0 %3815, %v3631
        %v3817 = vpop.permute.xlu0 %3816
        %3818 = vset.pattern.permute.xlu0 0
        %3819 = vperm.xlu0 %3818, %v3633
        %v3820 = vpop.permute.xlu0 %3819
        %3821 = vset.pattern.permute.xlu0 0
        %3822 = vperm.xlu0 %3821, %v3635
        %v3823 = vpop.permute.xlu0 %3822
        %3824 = vset.pattern.permute.xlu0 0
        %3825 = vperm.xlu0 %3824, %v3637
        %v3826 = vpop.permute.xlu0 %3825
        %3827 = vset.pattern.permute.xlu0 0
        %3828 = vperm.xlu0 %3827, %v3639
        %v3829 = vpop.permute.xlu0 %3828
        %3830 = vset.pattern.permute.xlu0 0
        %3831 = vperm.xlu0 %3830, %v3641
        %v3832 = vpop.permute.xlu0 %3831
        %3833 = vset.pattern.permute.xlu0 0
        %3834 = vperm.xlu0 %3833, %v3643
        %v3835 = vpop.permute.xlu0 %3834
        %v3836 = vperm.slane %v3694, %v3362
        %v3837 = vperm.slane %v3697, %v3364
        %v3838 = vsel %vm3366, %v3837, %v3836
        %v3839 = vperm.slane %v3700, %v3368
        %v3840 = vsel %vm3370, %v3839, %v3838
        %v3841 = vperm.slane %v3703, %v3372
        %v3842 = vsel %vm3374, %v3841, %v3840
        %v3843 = vperm.slane %v3706, %v3376
        %v3844 = vsel %vm3378, %v3843, %v3842
        %v3845 = vperm.slane %v3709, %v3380
        %v3846 = vsel %vm3382, %v3845, %v3844
        %v3847 = vperm.slane %v3712, %v3384
        %v3848 = vsel %vm3386, %v3847, %v3846
        %v3849 = vperm.slane %v3715, %v3388
        %v3850 = vsel %vm3390, %v3849, %v3848
        %v3851 = vperm.slane %v3718, %v3392
        %v3852 = vsel %vm3394, %v3851, %v3850
        %v3853 = vperm.slane %v3721, %v3396
        %v3854 = vsel %vm3398, %v3853, %v3852
        %v3855 = vperm.slane %v3724, %v3400
        %v3856 = vsel %vm3402, %v3855, %v3854
        %v3857 = vperm.slane %v3727, %v3404
        %v3858 = vsel %vm3406, %v3857, %v3856
        %v3859 = vperm.slane %v3730, %v3408
        %v3860 = vsel %vm3410, %v3859, %v3858
        %v3861 = vperm.slane %v3733, %v3412
        %v3862 = vsel %vm3414, %v3861, %v3860
        %v3863 = vperm.slane %v3736, %v3416
        %v3864 = vsel %vm3418, %v3863, %v3862
        %v3865 = vperm.slane %v3739, %v3420
        %v3866 = vsel %vm3422, %v3865, %v3864
        %v3867 = vperm.slane %v3742, %v3362
        %v3868 = vperm.slane %v3745, %v3364
        %v3869 = vsel %vm3366, %v3868, %v3867
        %v3870 = vperm.slane %v3748, %v3368
        %v3871 = vsel %vm3370, %v3870, %v3869
        %v3872 = vperm.slane %v3751, %v3372
        %v3873 = vsel %vm3374, %v3872, %v3871
        %v3874 = vperm.slane %v3754, %v3376
        %v3875 = vsel %vm3378, %v3874, %v3873
        %v3876 = vperm.slane %v3757, %v3380
        %v3877 = vsel %vm3382, %v3876, %v3875
        %v3878 = vperm.slane %v3760, %v3384
        %v3879 = vsel %vm3386, %v3878, %v3877
        %v3880 = vperm.slane %v3763, %v3388
        %v3881 = vsel %vm3390, %v3880, %v3879
        %v3882 = vperm.slane %v3766, %v3392
        %v3883 = vsel %vm3394, %v3882, %v3881
        %v3884 = vperm.slane %v3769, %v3396
        %v3885 = vsel %vm3398, %v3884, %v3883
        %v3886 = vperm.slane %v3772, %v3400
        %v3887 = vsel %vm3402, %v3886, %v3885
        %v3888 = vperm.slane %v3775, %v3404
        %v3889 = vsel %vm3406, %v3888, %v3887
        %v3890 = vperm.slane %v3778, %v3408
        %v3891 = vsel %vm3410, %v3890, %v3889
        %v3892 = vperm.slane %v3781, %v3412
        %v3893 = vsel %vm3414, %v3892, %v3891
        %v3894 = vperm.slane %v3784, %v3416
        %v3895 = vsel %vm3418, %v3894, %v3893
        %v3896 = vperm.slane %v3787, %v3420
        %v3897 = vsel %vm3422, %v3896, %v3895
        %v3898 = vperm.slane %v3790, %v3362
        %v3899 = vperm.slane %v3793, %v3364
        %v3900 = vsel %vm3366, %v3899, %v3898
        %v3901 = vperm.slane %v3796, %v3368
        %v3902 = vsel %vm3370, %v3901, %v3900
        %v3903 = vperm.slane %v3799, %v3372
        %v3904 = vsel %vm3374, %v3903, %v3902
        %v3905 = vperm.slane %v3802, %v3376
        %v3906 = vsel %vm3378, %v3905, %v3904
        %v3907 = vperm.slane %v3805, %v3380
        %v3908 = vsel %vm3382, %v3907, %v3906
        %v3909 = vperm.slane %v3808, %v3384
        %v3910 = vsel %vm3386, %v3909, %v3908
        %v3911 = vperm.slane %v3811, %v3388
        %v3912 = vsel %vm3390, %v3911, %v3910
        %v3913 = vperm.slane %v3814, %v3392
        %v3914 = vsel %vm3394, %v3913, %v3912
        %v3915 = vperm.slane %v3817, %v3396
        %v3916 = vsel %vm3398, %v3915, %v3914
        %v3917 = vperm.slane %v3820, %v3400
        %v3918 = vsel %vm3402, %v3917, %v3916
        %v3919 = vperm.slane %v3823, %v3404
        %v3920 = vsel %vm3406, %v3919, %v3918
        %v3921 = vperm.slane %v3826, %v3408
        %v3922 = vsel %vm3410, %v3921, %v3920
        %v3923 = vperm.slane %v3829, %v3412
        %v3924 = vsel %vm3414, %v3923, %v3922
        %v3925 = vperm.slane %v3832, %v3416
        %v3926 = vsel %vm3418, %v3925, %v3924
        %v3927 = vperm.slane %v3835, %v3420
        %v3928 = vsel %vm3422, %v3927, %v3926
        %v3929 = vsel %vm2999, %v3897, %v3866
        %v3930 = vsel %vm3001, %v3928, %v3929
        %v3932 = vsel %vm3489, %v3930, 0.0
        %3933 = vadd.xlane.f32.xlu0 %v3932
        %v3934 = vpop.xlane.xlu0 %3933
        %v3936 = vperm.slane %v3934, 0
        %v3937 = vperm.slane %v3934, 1
        %v3938 = vperm.slane %v3934, 2
        %v3942 = vrcp.pop %v3936
        %v3943 = vmul.f32 %v3936, %v3942
        %v3944 = vsub.f32 1.0, %v3943
        %v3945 = vmul.f32 %v3942, %v3944
        %v3946 = vadd.f32 %v3942, %v3945
        %vm3947 = vweird.f32 %v3936
        %vm3948 = vweird.f32 %v3942
        %vm3949 = vmor %vm3947, %vm3948
        %v3950 = vsel %vm3949, %v3942, %v3946
        %v3951 = vand.u32 2147483647, %v3936
        %vm3952 = vcmp.eq.f32.partialorder %v3951, 8.507059e+37
        %v3953 = vand.u32 %v3936, 2147483648
        %v3954 = vor.u32 1.1754944e-38, %v3953
        %v3955 = vsel %vm3952, %v3954, %v3950
        %v3956 = vmul.f32 %v3549, %v3955
        %v3957 = vmul.f32 %v3551, %v3955
        %v3958 = vmul.f32 %v3553, %v3955
        %v3959 = vmul.f32 %v3555, %v3955
        %v3960 = vmul.f32 %v3557, %v3955
        %v3961 = vmul.f32 %v3559, %v3955
        %v3962 = vmul.f32 %v3561, %v3955
        %v3963 = vmul.f32 %v3563, %v3955
        %v3964 = vmul.f32 %v3565, %v3955
        %v3965 = vmul.f32 %v3567, %v3955
        %v3966 = vmul.f32 %v3569, %v3955
        %v3967 = vmul.f32 %v3571, %v3955
        %v3968 = vmul.f32 %v3573, %v3955
        %v3969 = vmul.f32 %v3575, %v3955
        %v3970 = vmul.f32 %v3577, %v3955
        %v3971 = vmul.f32 %v3579, %v3955
        %v3972 = vrcp.pop %v3937
        %v3973 = vmul.f32 %v3937, %v3972
        %v3974 = vsub.f32 1.0, %v3973
        %v3975 = vmul.f32 %v3972, %v3974
        %v3976 = vadd.f32 %v3972, %v3975
        %vm3977 = vweird.f32 %v3937
        %vm3978 = vweird.f32 %v3972
        %vm3979 = vmor %vm3977, %vm3978
        %v3980 = vsel %vm3979, %v3972, %v3976
        %v3981 = vand.u32 2147483647, %v3937
        %vm3982 = vcmp.eq.f32.partialorder %v3981, 8.507059e+37
        %v3983 = vand.u32 %v3937, 2147483648
        %v3984 = vor.u32 1.1754944e-38, %v3983
        %v3985 = vsel %vm3982, %v3984, %v3980
        %v3986 = vmul.f32 %v3581, %v3985
        %v3987 = vmul.f32 %v3583, %v3985
        %v3988 = vmul.f32 %v3585, %v3985
        %v3989 = vmul.f32 %v3587, %v3985
        %v3990 = vmul.f32 %v3589, %v3985
        %v3991 = vmul.f32 %v3591, %v3985
        %v3992 = vmul.f32 %v3593, %v3985
        %v3993 = vmul.f32 %v3595, %v3985
        %v3994 = vmul.f32 %v3597, %v3985
        %v3995 = vmul.f32 %v3599, %v3985
        %v3996 = vmul.f32 %v3601, %v3985
        %v3997 = vmul.f32 %v3603, %v3985
        %v3998 = vmul.f32 %v3605, %v3985
        %v3999 = vmul.f32 %v3607, %v3985
        %v4000 = vmul.f32 %v3609, %v3985
        %v4001 = vmul.f32 %v3611, %v3985
        %v4002 = vrcp.pop %v3938
        %v4003 = vmul.f32 %v3938, %v4002
        %v4004 = vsub.f32 1.0, %v4003
        %v4005 = vmul.f32 %v4002, %v4004
        %v4006 = vadd.f32 %v4002, %v4005
        %vm4007 = vweird.f32 %v3938
        %vm4008 = vweird.f32 %v4002
        %vm4009 = vmor %vm4007, %vm4008
        %v4010 = vsel %vm4009, %v4002, %v4006
        %v4011 = vand.u32 2147483647, %v3938
        %vm4012 = vcmp.eq.f32.partialorder %v4011, 8.507059e+37
        %v4013 = vand.u32 %v3938, 2147483648
        %v4014 = vor.u32 1.1754944e-38, %v4013
        %v4015 = vsel %vm4012, %v4014, %v4010
        %v4016 = vmul.f32 %v3613, %v4015
        %v4017 = vmul.f32 %v3615, %v4015
        %v4018 = vmul.f32 %v3617, %v4015
        %v4019 = vmul.f32 %v3619, %v4015
        %v4020 = vmul.f32 %v3621, %v4015
        %v4021 = vmul.f32 %v3623, %v4015
        %v4022 = vmul.f32 %v3625, %v4015
        %v4023 = vmul.f32 %v3627, %v4015
        %v4024 = vmul.f32 %v3629, %v4015
        %v4025 = vmul.f32 %v3631, %v4015
        %v4026 = vmul.f32 %v3633, %v4015
        %v4027 = vmul.f32 %v3635, %v4015
        %v4028 = vmul.f32 %v3637, %v4015
        %v4029 = vmul.f32 %v3639, %v4015
        %v4030 = vmul.f32 %v3641, %v4015
        %v4031 = vmul.f32 %v3643, %v4015
        %v4032 = vadd.f32 %v3956, 1.0
        %v4033 = vadd.f32 %v3957, 1.0
        %v4034 = vadd.f32 %v3958, 1.0
        %v4035 = vadd.f32 %v3959, 1.0
        %v4036 = vadd.f32 %v3960, 1.0
        %v4037 = vadd.f32 %v3961, 1.0
        %v4038 = vadd.f32 %v3962, 1.0
        %v4039 = vadd.f32 %v3963, 1.0
        %v4040 = vadd.f32 %v3964, 1.0
        %v4041 = vadd.f32 %v3965, 1.0
        %v4042 = vadd.f32 %v3966, 1.0
        %v4043 = vadd.f32 %v3967, 1.0
        %v4044 = vadd.f32 %v3968, 1.0
        %v4045 = vadd.f32 %v3969, 1.0
        %v4046 = vadd.f32 %v3970, 1.0
        %v4047 = vadd.f32 %v3971, 1.0
        %v4048 = vadd.f32 %v3986, 1.0
        %v4049 = vadd.f32 %v3987, 1.0
        %v4050 = vadd.f32 %v3988, 1.0
        %v4051 = vadd.f32 %v3989, 1.0
        %v4052 = vadd.f32 %v3990, 1.0
        %v4053 = vadd.f32 %v3991, 1.0
        %v4054 = vadd.f32 %v3992, 1.0
        %v4055 = vadd.f32 %v3993, 1.0
        %v4056 = vadd.f32 %v3994, 1.0
        %v4057 = vadd.f32 %v3995, 1.0
        %v4058 = vadd.f32 %v3996, 1.0
        %v4059 = vadd.f32 %v3997, 1.0
        %v4060 = vadd.f32 %v3998, 1.0
        %v4061 = vadd.f32 %v3999, 1.0
        %v4062 = vadd.f32 %v4000, 1.0
        %v4063 = vadd.f32 %v4001, 1.0
        %v4064 = vadd.f32 %v4016, 1.0
        %v4065 = vadd.f32 %v4017, 1.0
        %v4066 = vadd.f32 %v4018, 1.0
        %v4067 = vadd.f32 %v4019, 1.0
        %v4068 = vadd.f32 %v4020, 1.0
        %v4069 = vadd.f32 %v4021, 1.0
        %v4070 = vadd.f32 %v4022, 1.0
        %v4071 = vadd.f32 %v4023, 1.0
        %v4072 = vadd.f32 %v4024, 1.0
        %v4073 = vadd.f32 %v4025, 1.0
        %v4074 = vadd.f32 %v4026, 1.0
        %v4075 = vadd.f32 %v4027, 1.0
        %v4076 = vadd.f32 %v4028, 1.0
        %v4077 = vadd.f32 %v4029, 1.0
        %v4078 = vadd.f32 %v4030, 1.0
        %v4079 = vadd.f32 %v4031, 1.0
        %4080 = vadd.xlane.f32.xlu0 %v2871
        %v4081 = vpop.xlane.xlu0 %4080
        %4082 = vadd.xlane.f32.xlu0 %v2872
        %v4083 = vpop.xlane.xlu0 %4082
        %4084 = vadd.xlane.f32.xlu0 %v2874
        %v4085 = vpop.xlane.xlu0 %4084
        %4086 = vadd.xlane.f32.xlu0 %v2876
        %v4087 = vpop.xlane.xlu0 %4086
        %4088 = vadd.xlane.f32.xlu0 %v2878
        %v4089 = vpop.xlane.xlu0 %4088
        %4090 = vadd.xlane.f32.xlu0 %v2880
        %v4091 = vpop.xlane.xlu0 %4090
        %4092 = vadd.xlane.f32.xlu0 %v2882
        %v4093 = vpop.xlane.xlu0 %4092
        %4094 = vadd.xlane.f32.xlu0 %v2884
        %v4095 = vpop.xlane.xlu0 %4094
        %4096 = vadd.xlane.f32.xlu0 %v2886
        %v4097 = vpop.xlane.xlu0 %4096
        %4098 = vadd.xlane.f32.xlu0 %v2888
        %v4099 = vpop.xlane.xlu0 %4098
        %4100 = vadd.xlane.f32.xlu0 %v2890
        %v4101 = vpop.xlane.xlu0 %4100
        %4102 = vadd.xlane.f32.xlu0 %v2892
        %v4103 = vpop.xlane.xlu0 %4102
        %4104 = vadd.xlane.f32.xlu0 %v2894
        %v4105 = vpop.xlane.xlu0 %4104
        %4106 = vadd.xlane.f32.xlu0 %v2896
        %v4107 = vpop.xlane.xlu0 %4106
        %4108 = vadd.xlane.f32.xlu0 %v2898
        %v4109 = vpop.xlane.xlu0 %4108
        %4110 = vadd.xlane.f32.xlu0 %v2901
        %v4111 = vpop.xlane.xlu0 %4110
        %4112 = vadd.xlane.f32.xlu0 %v2909
        %v4113 = vpop.xlane.xlu0 %4112
        %4114 = vadd.xlane.f32.xlu0 %v2910
        %v4115 = vpop.xlane.xlu0 %4114
        %4116 = vadd.xlane.f32.xlu0 %v2912
        %v4117 = vpop.xlane.xlu0 %4116
        %4118 = vadd.xlane.f32.xlu0 %v2914
        %v4119 = vpop.xlane.xlu0 %4118
        %4120 = vadd.xlane.f32.xlu0 %v2916
        %v4121 = vpop.xlane.xlu0 %4120
        %4122 = vadd.xlane.f32.xlu0 %v2918
        %v4123 = vpop.xlane.xlu0 %4122
        %4124 = vadd.xlane.f32.xlu0 %v2920
        %v4125 = vpop.xlane.xlu0 %4124
        %4126 = vadd.xlane.f32.xlu0 %v2922
        %v4127 = vpop.xlane.xlu0 %4126
        %4128 = vadd.xlane.f32.xlu0 %v2924
        %v4129 = vpop.xlane.xlu0 %4128
        %4130 = vadd.xlane.f32.xlu0 %v2926
        %v4131 = vpop.xlane.xlu0 %4130
        %4132 = vadd.xlane.f32.xlu0 %v2928
        %v4133 = vpop.xlane.xlu0 %4132
        %4134 = vadd.xlane.f32.xlu0 %v2930
        %v4135 = vpop.xlane.xlu0 %4134
        %4136 = vadd.xlane.f32.xlu0 %v2932
        %v4137 = vpop.xlane.xlu0 %4136
        %4138 = vadd.xlane.f32.xlu0 %v2934
        %v4139 = vpop.xlane.xlu0 %4138
        %4140 = vadd.xlane.f32.xlu0 %v2936
        %v4141 = vpop.xlane.xlu0 %4140
        %4142 = vadd.xlane.f32.xlu0 %v2938
        %v4143 = vpop.xlane.xlu0 %4142
        %4144 = vadd.xlane.f32.xlu0 %v2946
        %v4145 = vpop.xlane.xlu0 %4144
        %4146 = vadd.xlane.f32.xlu0 %v2947
        %v4147 = vpop.xlane.xlu0 %4146
        %4148 = vadd.xlane.f32.xlu0 %v2949
        %v4149 = vpop.xlane.xlu0 %4148
        %4150 = vadd.xlane.f32.xlu0 %v2951
        %v4151 = vpop.xlane.xlu0 %4150
        %4152 = vadd.xlane.f32.xlu0 %v2953
        %v4153 = vpop.xlane.xlu0 %4152
        %4154 = vadd.xlane.f32.xlu0 %v2955
        %v4155 = vpop.xlane.xlu0 %4154
        %4156 = vadd.xlane.f32.xlu0 %v2957
        %v4157 = vpop.xlane.xlu0 %4156
        %4158 = vadd.xlane.f32.xlu0 %v2959
        %v4159 = vpop.xlane.xlu0 %4158
        %4160 = vadd.xlane.f32.xlu0 %v2961
        %v4161 = vpop.xlane.xlu0 %4160
        %4162 = vadd.xlane.f32.xlu0 %v2963
        %v4163 = vpop.xlane.xlu0 %4162
        %4164 = vadd.xlane.f32.xlu0 %v2965
        %v4165 = vpop.xlane.xlu0 %4164
        %4166 = vadd.xlane.f32.xlu0 %v2967
        %v4167 = vpop.xlane.xlu0 %4166
        %4168 = vadd.xlane.f32.xlu0 %v2969
        %v4169 = vpop.xlane.xlu0 %4168
        %4170 = vadd.xlane.f32.xlu0 %v2971
        %v4171 = vpop.xlane.xlu0 %4170
        %4172 = vadd.xlane.f32.xlu0 %v2973
        %v4173 = vpop.xlane.xlu0 %4172
        %4174 = vadd.xlane.f32.xlu0 %v2975
        %v4175 = vpop.xlane.xlu0 %4174
        %v4176 = vmul.f32 %v4081, %v2989
        %v4177 = vmul.f32 %v4083, %v2989
        %v4178 = vmul.f32 %v4085, %v2989
        %v4179 = vmul.f32 %v4087, %v2989
        %v4180 = vmul.f32 %v4089, %v2989
        %v4181 = vmul.f32 %v4091, %v2989
        %v4182 = vmul.f32 %v4093, %v2989
        %v4183 = vmul.f32 %v4095, %v2989
        %v4184 = vmul.f32 %v4097, %v2989
        %v4185 = vmul.f32 %v4099, %v2989
        %v4186 = vmul.f32 %v4101, %v2989
        %v4187 = vmul.f32 %v4103, %v2989
        %v4188 = vmul.f32 %v4105, %v2989
        %v4189 = vmul.f32 %v4107, %v2989
        %v4190 = vmul.f32 %v4109, %v2989
        %v4191 = vmul.f32 %v4111, %v2989
        %v4192 = vmul.f32 %v4113, %v2989
        %v4193 = vmul.f32 %v4115, %v2989
        %v4194 = vmul.f32 %v4117, %v2989
        %v4195 = vmul.f32 %v4119, %v2989
        %v4196 = vmul.f32 %v4121, %v2989
        %v4197 = vmul.f32 %v4123, %v2989
        %v4198 = vmul.f32 %v4125, %v2989
        %v4199 = vmul.f32 %v4127, %v2989
        %v4200 = vmul.f32 %v4129, %v2989
        %v4201 = vmul.f32 %v4131, %v2989
        %v4202 = vmul.f32 %v4133, %v2989
        %v4203 = vmul.f32 %v4135, %v2989
        %v4204 = vmul.f32 %v4137, %v2989
        %v4205 = vmul.f32 %v4139, %v2989
        %v4206 = vmul.f32 %v4141, %v2989
        %v4207 = vmul.f32 %v4143, %v2989
        %v4208 = vmul.f32 %v4145, %v2989
        %v4209 = vmul.f32 %v4147, %v2989
        %v4210 = vmul.f32 %v4149, %v2989
        %v4211 = vmul.f32 %v4151, %v2989
        %v4212 = vmul.f32 %v4153, %v2989
        %v4213 = vmul.f32 %v4155, %v2989
        %v4214 = vmul.f32 %v4157, %v2989
        %v4215 = vmul.f32 %v4159, %v2989
        %v4216 = vmul.f32 %v4161, %v2989
        %v4217 = vmul.f32 %v4163, %v2989
        %v4218 = vmul.f32 %v4165, %v2989
        %v4219 = vmul.f32 %v4167, %v2989
        %v4220 = vmul.f32 %v4169, %v2989
        %v4221 = vmul.f32 %v4171, %v2989
        %v4222 = vmul.f32 %v4173, %v2989
        %v4223 = vmul.f32 %v4175, %v2989
        %v4272 = vperm.slane %v4176, %v3362
        %v4273 = vperm.slane %v4177, %v3364
        %v4274 = vsel %vm3366, %v4273, %v4272
        %v4275 = vperm.slane %v4178, %v3368
        %v4276 = vsel %vm3370, %v4275, %v4274
        %v4277 = vperm.slane %v4179, %v3372
        %v4278 = vsel %vm3374, %v4277, %v4276
        %v4279 = vperm.slane %v4180, %v3376
        %v4280 = vsel %vm3378, %v4279, %v4278
        %v4281 = vperm.slane %v4181, %v3380
        %v4282 = vsel %vm3382, %v4281, %v4280
        %v4283 = vperm.slane %v4182, %v3384
        %v4284 = vsel %vm3386, %v4283, %v4282
        %v4285 = vperm.slane %v4183, %v3388
        %v4286 = vsel %vm3390, %v4285, %v4284
        %v4287 = vperm.slane %v4184, %v3392
        %v4288 = vsel %vm3394, %v4287, %v4286
        %v4289 = vperm.slane %v4185, %v3396
        %v4290 = vsel %vm3398, %v4289, %v4288
        %v4291 = vperm.slane %v4186, %v3400
        %v4292 = vsel %vm3402, %v4291, %v4290
        %v4293 = vperm.slane %v4187, %v3404
        %v4294 = vsel %vm3406, %v4293, %v4292
        %v4295 = vperm.slane %v4188, %v3408
        %v4296 = vsel %vm3410, %v4295, %v4294
        %v4297 = vperm.slane %v4189, %v3412
        %v4298 = vsel %vm3414, %v4297, %v4296
        %v4299 = vperm.slane %v4190, %v3416
        %v4300 = vsel %vm3418, %v4299, %v4298
        %v4301 = vperm.slane %v4191, %v3420
        %v4302 = vsel %vm3422, %v4301, %v4300
        %v4303 = vperm.slane %v4192, %v3362
        %v4304 = vperm.slane %v4193, %v3364
        %v4305 = vsel %vm3366, %v4304, %v4303
        %v4306 = vperm.slane %v4194, %v3368
        %v4307 = vsel %vm3370, %v4306, %v4305
        %v4308 = vperm.slane %v4195, %v3372
        %v4309 = vsel %vm3374, %v4308, %v4307
        %v4310 = vperm.slane %v4196, %v3376
        %v4311 = vsel %vm3378, %v4310, %v4309
        %v4312 = vperm.slane %v4197, %v3380
        %v4313 = vsel %vm3382, %v4312, %v4311
        %v4314 = vperm.slane %v4198, %v3384
        %v4315 = vsel %vm3386, %v4314, %v4313
        %v4316 = vperm.slane %v4199, %v3388
        %v4317 = vsel %vm3390, %v4316, %v4315
        %v4318 = vperm.slane %v4200, %v3392
        %v4319 = vsel %vm3394, %v4318, %v4317
        %v4320 = vperm.slane %v4201, %v3396
        %v4321 = vsel %vm3398, %v4320, %v4319
        %v4322 = vperm.slane %v4202, %v3400
        %v4323 = vsel %vm3402, %v4322, %v4321
        %v4324 = vperm.slane %v4203, %v3404
        %v4325 = vsel %vm3406, %v4324, %v4323
        %v4326 = vperm.slane %v4204, %v3408
        %v4327 = vsel %vm3410, %v4326, %v4325
        %v4328 = vperm.slane %v4205, %v3412
        %v4329 = vsel %vm3414, %v4328, %v4327
        %v4330 = vperm.slane %v4206, %v3416
        %v4331 = vsel %vm3418, %v4330, %v4329
        %v4332 = vperm.slane %v4207, %v3420
        %v4333 = vsel %vm3422, %v4332, %v4331
        %v4334 = vperm.slane %v4208, %v3362
        %v4335 = vperm.slane %v4209, %v3364
        %v4336 = vsel %vm3366, %v4335, %v4334
        %v4337 = vperm.slane %v4210, %v3368
        %v4338 = vsel %vm3370, %v4337, %v4336
        %v4339 = vperm.slane %v4211, %v3372
        %v4340 = vsel %vm3374, %v4339, %v4338
        %v4341 = vperm.slane %v4212, %v3376
        %v4342 = vsel %vm3378, %v4341, %v4340
        %v4343 = vperm.slane %v4213, %v3380
        %v4344 = vsel %vm3382, %v4343, %v4342
        %v4345 = vperm.slane %v4214, %v3384
        %v4346 = vsel %vm3386, %v4345, %v4344
        %v4347 = vperm.slane %v4215, %v3388
        %v4348 = vsel %vm3390, %v4347, %v4346
        %v4349 = vperm.slane %v4216, %v3392
        %v4350 = vsel %vm3394, %v4349, %v4348
        %v4351 = vperm.slane %v4217, %v3396
        %v4352 = vsel %vm3398, %v4351, %v4350
        %v4353 = vperm.slane %v4218, %v3400
        %v4354 = vsel %vm3402, %v4353, %v4352
        %v4355 = vperm.slane %v4219, %v3404
        %v4356 = vsel %vm3406, %v4355, %v4354
        %v4357 = vperm.slane %v4220, %v3408
        %v4358 = vsel %vm3410, %v4357, %v4356
        %v4359 = vperm.slane %v4221, %v3412
        %v4360 = vsel %vm3414, %v4359, %v4358
        %v4361 = vperm.slane %v4222, %v3416
        %v4362 = vsel %vm3418, %v4361, %v4360
        %v4363 = vperm.slane %v4223, %v3420
        %v4364 = vsel %vm3422, %v4363, %v4362
        %v4365 = vsel %vm2999, %v4333, %v4302
        %v4366 = vsel %vm3001, %v4364, %v4365
        %v4367 = vsel %vm2870, %v4366, 0
        %4369 = vmatpush.xpose.msra.mxu0 0.0
        %4370 = vmatpush.xpose.msra.mxu0 0.0
        %4371 = vmatpush.xpose.msra.mxu0 0.0
        %4372 = vmatpush.xpose.msra.mxu0 0.0
        %4373 = vmatpush.xpose.msra.mxu0 0.0
        %4374 = vmatpush.xpose.msra.mxu0 0.0
        %4375 = vmatpush.xpose.msra.mxu0 0.0
        %4376 = vmatpush.xpose.msra.mxu0 0.0
        %4377 = vmatpush.xpose.msra.mxu0 0.0
        %4378 = vmatpush.xpose.msra.mxu0 0.0
        %4379 = vmatpush.xpose.msra.mxu0 0.0
        %4380 = vmatpush.xpose.msra.mxu0 0.0
        %4381 = vmatpush.xpose.msra.mxu0 0.0
        %4382 = vmatpush.xpose.msra.mxu0 0.0
        %4383 = vmatpush.xpose.msra.mxu0 %v3009
        %4384 = vmatpush.xpose.msra.mxu0 %v3006
        %4385 = vmatmul.f32.gmra.mxu0 %v4367
        %v4386 = vpop.f32.mrf.mxu0
        %v4387 = vadd.f32 %v2994, %v4386
        %4388 = vdwg.mxu0
        %v4389 = vmul.f32 %v4387, 0.999995
        %v4390 = vmax.f32 %v4389, 0.0
        %v4392 = vsel %vm3036, %v4390, 0
        %4394 = vmatpush.msra.mxu0 0.0
        %4395 = vmatpush.msra.mxu0 0.0
        %4396 = vmatpush.msra.mxu0 0.0
        %4397 = vmatpush.msra.mxu0 0.0
        %4398 = vmatpush.msra.mxu0 0.0
        %4399 = vmatpush.msra.mxu0 0.0
        %4400 = vmatpush.msra.mxu0 0.0
        %4401 = vmatpush.msra.mxu0 0.0
        %4402 = vmatpush.msra.mxu0 0.0
        %4403 = vmatpush.msra.mxu0 0.0
        %4404 = vmatpush.msra.mxu0 0.0
        %4405 = vmatpush.msra.mxu0 0.0
        %4406 = vmatpush.msra.mxu0 0.0
        %4407 = vmatpush.msra.mxu0 0.0
        %4408 = vmatpush.msra.mxu0 %v3042
        %4409 = vmatpush.msra.mxu0 %v430
        %4410 = vmatmul.f32.gmra.mxu0 %v4392
        %v4411 = vpop.f32.mrf.mxu0
        %v4412 = vadd.f32 %v3034, %v4411
        %4413 = vdwg.mxu0
        %v4414 = vperm.slane %v4412, 0
        %v4415 = vlaneseq
        %v4416 = vshrl.u32 %v4415, 7
        %4418 = vset.pattern.permute.xlu0 %v4416
        %4419 = vperm.xlu0 %4418, %v4414
        %v4420 = vpop.permute.xlu0 %4419
        %v4421 = vlaneseq
        %v4422 = vshrl.u32 %v4421, 7
        %v4423 = vadd.s32 %v4422, 8
        %4424 = vset.pattern.permute.xlu0 %v4423
        %4425 = vperm.xlu0 %4424, %v4414
        %v4426 = vpop.permute.xlu0 %4425
        %v4427 = vlaneseq
        %v4428 = vshrl.u32 %v4427, 7
        %v4429 = vadd.s32 %v4428, 16
        %4430 = vset.pattern.permute.xlu0 %v4429
        %4431 = vperm.xlu0 %4430, %v4414
        %v4432 = vpop.permute.xlu0 %4431
        %v4433 = vlaneseq
        %v4434 = vshrl.u32 %v4433, 7
        %v4435 = vadd.s32 %v4434, 24
        %4436 = vset.pattern.permute.xlu0 %v4435
        %4437 = vperm.xlu0 %4436, %v4414
        %v4438 = vpop.permute.xlu0 %4437
        %v4439 = vlaneseq
        %v4440 = vshrl.u32 %v4439, 7
        %v4441 = vadd.s32 %v4440, 32
        %4442 = vset.pattern.permute.xlu0 %v4441
        %4443 = vperm.xlu0 %4442, %v4414
        %v4444 = vpop.permute.xlu0 %4443
        %v4445 = vlaneseq
        %v4446 = vshrl.u32 %v4445, 7
        %v4447 = vadd.s32 %v4446, 40
        %4448 = vset.pattern.permute.xlu0 %v4447
        %4449 = vperm.xlu0 %4448, %v4414
        %v4450 = vpop.permute.xlu0 %4449
        %v4451 = vlaneseq
        %v4452 = vshrl.u32 %v4451, 7
        %v4453 = vadd.s32 %v4452, 48
        %4454 = vset.pattern.permute.xlu0 %v4453
        %4455 = vperm.xlu0 %4454, %v4414
        %v4456 = vpop.permute.xlu0 %4455
        %v4457 = vlaneseq
        %v4458 = vshrl.u32 %v4457, 7
        %v4459 = vadd.s32 %v4458, 56
        %4460 = vset.pattern.permute.xlu0 %v4459
        %4461 = vperm.xlu0 %4460, %v4414
        %v4462 = vpop.permute.xlu0 %4461
        %v4463 = vlaneseq
        %v4464 = vshrl.u32 %v4463, 7
        %v4465 = vadd.s32 %v4464, 64
        %4466 = vset.pattern.permute.xlu0 %v4465
        %4467 = vperm.xlu0 %4466, %v4414
        %v4468 = vpop.permute.xlu0 %4467
        %v4469 = vlaneseq
        %v4470 = vshrl.u32 %v4469, 7
        %v4471 = vadd.s32 %v4470, 72
        %4472 = vset.pattern.permute.xlu0 %v4471
        %4473 = vperm.xlu0 %4472, %v4414
        %v4474 = vpop.permute.xlu0 %4473
        %v4475 = vlaneseq
        %v4476 = vshrl.u32 %v4475, 7
        %v4477 = vadd.s32 %v4476, 80
        %4478 = vset.pattern.permute.xlu0 %v4477
        %4479 = vperm.xlu0 %4478, %v4414
        %v4480 = vpop.permute.xlu0 %4479
        %v4481 = vlaneseq
        %v4482 = vshrl.u32 %v4481, 7
        %v4483 = vadd.s32 %v4482, 88
        %4484 = vset.pattern.permute.xlu0 %v4483
        %4485 = vperm.xlu0 %4484, %v4414
        %v4486 = vpop.permute.xlu0 %4485
        %v4487 = vlaneseq
        %v4488 = vshrl.u32 %v4487, 7
        %v4489 = vadd.s32 %v4488, 96
        %4490 = vset.pattern.permute.xlu0 %v4489
        %4491 = vperm.xlu0 %4490, %v4414
        %v4492 = vpop.permute.xlu0 %4491
        %v4493 = vlaneseq
        %v4494 = vshrl.u32 %v4493, 7
        %v4495 = vadd.s32 %v4494, 104
        %4496 = vset.pattern.permute.xlu0 %v4495
        %4497 = vperm.xlu0 %4496, %v4414
        %v4498 = vpop.permute.xlu0 %4497
        %v4499 = vlaneseq
        %v4500 = vshrl.u32 %v4499, 7
        %v4501 = vadd.s32 %v4500, 112
        %4502 = vset.pattern.permute.xlu0 %v4501
        %4503 = vperm.xlu0 %4502, %v4414
        %v4504 = vpop.permute.xlu0 %4503
        %v4505 = vlaneseq
        %v4506 = vshrl.u32 %v4505, 7
        %v4507 = vadd.s32 %v4506, 120
        %4508 = vset.pattern.permute.xlu0 %v4507
        %4509 = vperm.xlu0 %4508, %v4414
        %v4510 = vpop.permute.xlu0 %4509
        %v4511 = vperm.slane %v4412, 1
        %v4512 = vlaneseq
        %v4513 = vshrl.u32 %v4512, 7
        %4515 = vset.pattern.permute.xlu0 %v4513
        %4516 = vperm.xlu0 %4515, %v4511
        %v4517 = vpop.permute.xlu0 %4516
        %v4518 = vlaneseq
        %v4519 = vshrl.u32 %v4518, 7
        %v4520 = vadd.s32 %v4519, 8
        %4521 = vset.pattern.permute.xlu0 %v4520
        %4522 = vperm.xlu0 %4521, %v4511
        %v4523 = vpop.permute.xlu0 %4522
        %v4524 = vlaneseq
        %v4525 = vshrl.u32 %v4524, 7
        %v4526 = vadd.s32 %v4525, 16
        %4527 = vset.pattern.permute.xlu0 %v4526
        %4528 = vperm.xlu0 %4527, %v4511
        %v4529 = vpop.permute.xlu0 %4528
        %v4530 = vlaneseq
        %v4531 = vshrl.u32 %v4530, 7
        %v4532 = vadd.s32 %v4531, 24
        %4533 = vset.pattern.permute.xlu0 %v4532
        %4534 = vperm.xlu0 %4533, %v4511
        %v4535 = vpop.permute.xlu0 %4534
        %v4536 = vlaneseq
        %v4537 = vshrl.u32 %v4536, 7
        %v4538 = vadd.s32 %v4537, 32
        %4539 = vset.pattern.permute.xlu0 %v4538
        %4540 = vperm.xlu0 %4539, %v4511
        %v4541 = vpop.permute.xlu0 %4540
        %v4542 = vlaneseq
        %v4543 = vshrl.u32 %v4542, 7
        %v4544 = vadd.s32 %v4543, 40
        %4545 = vset.pattern.permute.xlu0 %v4544
        %4546 = vperm.xlu0 %4545, %v4511
        %v4547 = vpop.permute.xlu0 %4546
        %v4548 = vlaneseq
        %v4549 = vshrl.u32 %v4548, 7
        %v4550 = vadd.s32 %v4549, 48
        %4551 = vset.pattern.permute.xlu0 %v4550
        %4552 = vperm.xlu0 %4551, %v4511
        %v4553 = vpop.permute.xlu0 %4552
        %v4554 = vlaneseq
        %v4555 = vshrl.u32 %v4554, 7
        %v4556 = vadd.s32 %v4555, 56
        %4557 = vset.pattern.permute.xlu0 %v4556
        %4558 = vperm.xlu0 %4557, %v4511
        %v4559 = vpop.permute.xlu0 %4558
        %v4560 = vlaneseq
        %v4561 = vshrl.u32 %v4560, 7
        %v4562 = vadd.s32 %v4561, 64
        %4563 = vset.pattern.permute.xlu0 %v4562
        %4564 = vperm.xlu0 %4563, %v4511
        %v4565 = vpop.permute.xlu0 %4564
        %v4566 = vlaneseq
        %v4567 = vshrl.u32 %v4566, 7
        %v4568 = vadd.s32 %v4567, 72
        %4569 = vset.pattern.permute.xlu0 %v4568
        %4570 = vperm.xlu0 %4569, %v4511
        %v4571 = vpop.permute.xlu0 %4570
        %v4572 = vlaneseq
        %v4573 = vshrl.u32 %v4572, 7
        %v4574 = vadd.s32 %v4573, 80
        %4575 = vset.pattern.permute.xlu0 %v4574
        %4576 = vperm.xlu0 %4575, %v4511
        %v4577 = vpop.permute.xlu0 %4576
        %v4578 = vlaneseq
        %v4579 = vshrl.u32 %v4578, 7
        %v4580 = vadd.s32 %v4579, 88
        %4581 = vset.pattern.permute.xlu0 %v4580
        %4582 = vperm.xlu0 %4581, %v4511
        %v4583 = vpop.permute.xlu0 %4582
        %v4584 = vlaneseq
        %v4585 = vshrl.u32 %v4584, 7
        %v4586 = vadd.s32 %v4585, 96
        %4587 = vset.pattern.permute.xlu0 %v4586
        %4588 = vperm.xlu0 %4587, %v4511
        %v4589 = vpop.permute.xlu0 %4588
        %v4590 = vlaneseq
        %v4591 = vshrl.u32 %v4590, 7
        %v4592 = vadd.s32 %v4591, 104
        %4593 = vset.pattern.permute.xlu0 %v4592
        %4594 = vperm.xlu0 %4593, %v4511
        %v4595 = vpop.permute.xlu0 %4594
        %v4596 = vlaneseq
        %v4597 = vshrl.u32 %v4596, 7
        %v4598 = vadd.s32 %v4597, 112
        %4599 = vset.pattern.permute.xlu0 %v4598
        %4600 = vperm.xlu0 %4599, %v4511
        %v4601 = vpop.permute.xlu0 %4600
        %v4602 = vlaneseq
        %v4603 = vshrl.u32 %v4602, 7
        %v4604 = vadd.s32 %v4603, 120
        %4605 = vset.pattern.permute.xlu0 %v4604
        %4606 = vperm.xlu0 %4605, %v4511
        %v4607 = vpop.permute.xlu0 %4606
        %v4608 = vperm.slane %v4412, 2
        %v4609 = vlaneseq
        %v4610 = vshrl.u32 %v4609, 7
        %4612 = vset.pattern.permute.xlu0 %v4610
        %4613 = vperm.xlu0 %4612, %v4608
        %v4614 = vpop.permute.xlu0 %4613
        %v4615 = vlaneseq
        %v4616 = vshrl.u32 %v4615, 7
        %v4617 = vadd.s32 %v4616, 8
        %4618 = vset.pattern.permute.xlu0 %v4617
        %4619 = vperm.xlu0 %4618, %v4608
        %v4620 = vpop.permute.xlu0 %4619
        %v4621 = vlaneseq
        %v4622 = vshrl.u32 %v4621, 7
        %v4623 = vadd.s32 %v4622, 16
        %4624 = vset.pattern.permute.xlu0 %v4623
        %4625 = vperm.xlu0 %4624, %v4608
        %v4626 = vpop.permute.xlu0 %4625
        %v4627 = vlaneseq
        %v4628 = vshrl.u32 %v4627, 7
        %v4629 = vadd.s32 %v4628, 24
        %4630 = vset.pattern.permute.xlu0 %v4629
        %4631 = vperm.xlu0 %4630, %v4608
        %v4632 = vpop.permute.xlu0 %4631
        %v4633 = vlaneseq
        %v4634 = vshrl.u32 %v4633, 7
        %v4635 = vadd.s32 %v4634, 32
        %4636 = vset.pattern.permute.xlu0 %v4635
        %4637 = vperm.xlu0 %4636, %v4608
        %v4638 = vpop.permute.xlu0 %4637
        %v4639 = vlaneseq
        %v4640 = vshrl.u32 %v4639, 7
        %v4641 = vadd.s32 %v4640, 40
        %4642 = vset.pattern.permute.xlu0 %v4641
        %4643 = vperm.xlu0 %4642, %v4608
        %v4644 = vpop.permute.xlu0 %4643
        %v4645 = vlaneseq
        %v4646 = vshrl.u32 %v4645, 7
        %v4647 = vadd.s32 %v4646, 48
        %4648 = vset.pattern.permute.xlu0 %v4647
        %4649 = vperm.xlu0 %4648, %v4608
        %v4650 = vpop.permute.xlu0 %4649
        %v4651 = vlaneseq
        %v4652 = vshrl.u32 %v4651, 7
        %v4653 = vadd.s32 %v4652, 56
        %4654 = vset.pattern.permute.xlu0 %v4653
        %4655 = vperm.xlu0 %4654, %v4608
        %v4656 = vpop.permute.xlu0 %4655
        %v4657 = vlaneseq
        %v4658 = vshrl.u32 %v4657, 7
        %v4659 = vadd.s32 %v4658, 64
        %4660 = vset.pattern.permute.xlu0 %v4659
        %4661 = vperm.xlu0 %4660, %v4608
        %v4662 = vpop.permute.xlu0 %4661
        %v4663 = vlaneseq
        %v4664 = vshrl.u32 %v4663, 7
        %v4665 = vadd.s32 %v4664, 72
        %4666 = vset.pattern.permute.xlu0 %v4665
        %4667 = vperm.xlu0 %4666, %v4608
        %v4668 = vpop.permute.xlu0 %4667
        %v4669 = vlaneseq
        %v4670 = vshrl.u32 %v4669, 7
        %v4671 = vadd.s32 %v4670, 80
        %4672 = vset.pattern.permute.xlu0 %v4671
        %4673 = vperm.xlu0 %4672, %v4608
        %v4674 = vpop.permute.xlu0 %4673
        %v4675 = vlaneseq
        %v4676 = vshrl.u32 %v4675, 7
        %v4677 = vadd.s32 %v4676, 88
        %4678 = vset.pattern.permute.xlu0 %v4677
        %4679 = vperm.xlu0 %4678, %v4608
        %v4680 = vpop.permute.xlu0 %4679
        %v4681 = vlaneseq
        %v4682 = vshrl.u32 %v4681, 7
        %v4683 = vadd.s32 %v4682, 96
        %4684 = vset.pattern.permute.xlu0 %v4683
        %4685 = vperm.xlu0 %4684, %v4608
        %v4686 = vpop.permute.xlu0 %4685
        %v4687 = vlaneseq
        %v4688 = vshrl.u32 %v4687, 7
        %v4689 = vadd.s32 %v4688, 104
        %4690 = vset.pattern.permute.xlu0 %v4689
        %4691 = vperm.xlu0 %4690, %v4608
        %v4692 = vpop.permute.xlu0 %4691
        %v4693 = vlaneseq
        %v4694 = vshrl.u32 %v4693, 7
        %v4695 = vadd.s32 %v4694, 112
        %4696 = vset.pattern.permute.xlu0 %v4695
        %4697 = vperm.xlu0 %4696, %v4608
        %v4698 = vpop.permute.xlu0 %4697
        %v4699 = vlaneseq
        %v4700 = vshrl.u32 %v4699, 7
        %v4701 = vadd.s32 %v4700, 120
        %4702 = vset.pattern.permute.xlu0 %v4701
        %4703 = vperm.xlu0 %4702, %v4608
        %v4704 = vpop.permute.xlu0 %4703
        %v4705 = vmul.f32 %v2597, %v4420
        %v4706 = vmul.f32 %v2600, %v4426
        %v4707 = vmul.f32 %v2603, %v4432
        %v4708 = vmul.f32 %v2606, %v4438
        %v4709 = vmul.f32 %v2609, %v4444
        %v4710 = vmul.f32 %v2612, %v4450
        %v4711 = vmul.f32 %v2615, %v4456
        %v4712 = vmul.f32 %v2618, %v4462
        %v4713 = vmul.f32 %v2621, %v4468
        %v4714 = vmul.f32 %v2624, %v4474
        %v4715 = vmul.f32 %v2627, %v4480
        %v4716 = vmul.f32 %v2630, %v4486
        %v4717 = vmul.f32 %v2633, %v4492
        %v4718 = vmul.f32 %v2636, %v4498
        %v4719 = vmul.f32 %v2639, %v4504
        %v4720 = vmul.f32 %v2642, %v4510
        %v4721 = vmul.f32 %v2710, %v4517
        %v4722 = vmul.f32 %v2713, %v4523
        %v4723 = vmul.f32 %v2716, %v4529
        %v4724 = vmul.f32 %v2719, %v4535
        %v4725 = vmul.f32 %v2722, %v4541
        %v4726 = vmul.f32 %v2725, %v4547
        %v4727 = vmul.f32 %v2728, %v4553
        %v4728 = vmul.f32 %v2731, %v4559
        %v4729 = vmul.f32 %v2734, %v4565
        %v4730 = vmul.f32 %v2737, %v4571
        %v4731 = vmul.f32 %v2740, %v4577
        %v4732 = vmul.f32 %v2743, %v4583
        %v4733 = vmul.f32 %v2746, %v4589
        %v4734 = vmul.f32 %v2749, %v4595
        %v4735 = vmul.f32 %v2752, %v4601
        %v4736 = vmul.f32 %v2755, %v4607
        %v4737 = vmul.f32 %v2823, %v4614
        %v4738 = vmul.f32 %v2826, %v4620
        %v4739 = vmul.f32 %v2829, %v4626
        %v4740 = vmul.f32 %v2832, %v4632
        %v4741 = vmul.f32 %v2835, %v4638
        %v4742 = vmul.f32 %v2838, %v4644
        %v4743 = vmul.f32 %v2841, %v4650
        %v4744 = vmul.f32 %v2844, %v4656
        %v4745 = vmul.f32 %v2847, %v4662
        %v4746 = vmul.f32 %v2850, %v4668
        %v4747 = vmul.f32 %v2853, %v4674
        %v4748 = vmul.f32 %v2856, %v4680
        %v4749 = vmul.f32 %v2859, %v4686
        %v4750 = vmul.f32 %v2862, %v4692
        %v4751 = vmul.f32 %v2865, %v4698
        %v4752 = vmul.f32 %v2868, %v4704
        %v4753 = vsel %vm2870, %v4705, 0.0
        %v4754 = vsel %vm2870, %v4706, 0.0
        %v4755 = vadd.f32 %v4753, %v4754
        %v4756 = vsel %vm2870, %v4707, 0.0
        %v4757 = vadd.f32 %v4755, %v4756
        %v4758 = vsel %vm2870, %v4708, 0.0
        %v4759 = vadd.f32 %v4757, %v4758
        %v4760 = vsel %vm2870, %v4709, 0.0
        %v4761 = vadd.f32 %v4759, %v4760
        %v4762 = vsel %vm2870, %v4710, 0.0
        %v4763 = vadd.f32 %v4761, %v4762
        %v4764 = vsel %vm2870, %v4711, 0.0
        %v4765 = vadd.f32 %v4763, %v4764
        %v4766 = vsel %vm2870, %v4712, 0.0
        %v4767 = vadd.f32 %v4765, %v4766
        %v4768 = vsel %vm2870, %v4713, 0.0
        %v4769 = vadd.f32 %v4767, %v4768
        %v4770 = vsel %vm2870, %v4714, 0.0
        %v4771 = vadd.f32 %v4769, %v4770
        %v4772 = vsel %vm2870, %v4715, 0.0
        %v4773 = vadd.f32 %v4771, %v4772
        %v4774 = vsel %vm2870, %v4716, 0.0
        %v4775 = vadd.f32 %v4773, %v4774
        %v4776 = vsel %vm2870, %v4717, 0.0
        %v4777 = vadd.f32 %v4775, %v4776
        %v4778 = vsel %vm2870, %v4718, 0.0
        %v4779 = vadd.f32 %v4777, %v4778
        %v4780 = vsel %vm2870, %v4719, 0.0
        %v4781 = vadd.f32 %v4779, %v4780
        %v4782 = vsel %vm2900, %v4720, 0.0
        %v4783 = vadd.f32 %v4781, %v4782
        %v4784 = vrot.slane %v4783, 4
        %v4785 = vadd.f32 %v4783, %v4784
        %v4786 = vrot.slane %v4785, 2
        %v4787 = vadd.f32 %v4785, %v4786
        %v4788 = vrot.slane %v4787, 1
        %v4789 = vadd.f32 %v4787, %v4788
        %v4790 = vsel %vm2870, %v4721, 0.0
        %v4791 = vsel %vm2870, %v4722, 0.0
        %v4792 = vadd.f32 %v4790, %v4791
        %v4793 = vsel %vm2870, %v4723, 0.0
        %v4794 = vadd.f32 %v4792, %v4793
        %v4795 = vsel %vm2870, %v4724, 0.0
        %v4796 = vadd.f32 %v4794, %v4795
        %v4797 = vsel %vm2870, %v4725, 0.0
        %v4798 = vadd.f32 %v4796, %v4797
        %v4799 = vsel %vm2870, %v4726, 0.0
        %v4800 = vadd.f32 %v4798, %v4799
        %v4801 = vsel %vm2870, %v4727, 0.0
        %v4802 = vadd.f32 %v4800, %v4801
        %v4803 = vsel %vm2870, %v4728, 0.0
        %v4804 = vadd.f32 %v4802, %v4803
        %v4805 = vsel %vm2870, %v4729, 0.0
        %v4806 = vadd.f32 %v4804, %v4805
        %v4807 = vsel %vm2870, %v4730, 0.0
        %v4808 = vadd.f32 %v4806, %v4807
        %v4809 = vsel %vm2870, %v4731, 0.0
        %v4810 = vadd.f32 %v4808, %v4809
        %v4811 = vsel %vm2870, %v4732, 0.0
        %v4812 = vadd.f32 %v4810, %v4811
        %v4813 = vsel %vm2870, %v4733, 0.0
        %v4814 = vadd.f32 %v4812, %v4813
        %v4815 = vsel %vm2870, %v4734, 0.0
        %v4816 = vadd.f32 %v4814, %v4815
        %v4817 = vsel %vm2870, %v4735, 0.0
        %v4818 = vadd.f32 %v4816, %v4817
        %v4819 = vsel %vm2900, %v4736, 0.0
        %v4820 = vadd.f32 %v4818, %v4819
        %v4821 = vrot.slane %v4820, 4
        %v4822 = vadd.f32 %v4820, %v4821
        %v4823 = vrot.slane %v4822, 2
        %v4824 = vadd.f32 %v4822, %v4823
        %v4825 = vrot.slane %v4824, 1
        %v4826 = vadd.f32 %v4824, %v4825
        %v4827 = vsel %vm2870, %v4737, 0.0
        %v4828 = vsel %vm2870, %v4738, 0.0
        %v4829 = vadd.f32 %v4827, %v4828
        %v4830 = vsel %vm2870, %v4739, 0.0
        %v4831 = vadd.f32 %v4829, %v4830
        %v4832 = vsel %vm2870, %v4740, 0.0
        %v4833 = vadd.f32 %v4831, %v4832
        %v4834 = vsel %vm2870, %v4741, 0.0
        %v4835 = vadd.f32 %v4833, %v4834
        %v4836 = vsel %vm2870, %v4742, 0.0
        %v4837 = vadd.f32 %v4835, %v4836
        %v4838 = vsel %vm2870, %v4743, 0.0
        %v4839 = vadd.f32 %v4837, %v4838
        %v4840 = vsel %vm2870, %v4744, 0.0
        %v4841 = vadd.f32 %v4839, %v4840
        %v4842 = vsel %vm2870, %v4745, 0.0
        %v4843 = vadd.f32 %v4841, %v4842
        %v4844 = vsel %vm2870, %v4746, 0.0
        %v4845 = vadd.f32 %v4843, %v4844
        %v4846 = vsel %vm2870, %v4747, 0.0
        %v4847 = vadd.f32 %v4845, %v4846
        %v4848 = vsel %vm2870, %v4748, 0.0
        %v4849 = vadd.f32 %v4847, %v4848
        %v4850 = vsel %vm2870, %v4749, 0.0
        %v4851 = vadd.f32 %v4849, %v4850
        %v4852 = vsel %vm2870, %v4750, 0.0
        %v4853 = vadd.f32 %v4851, %v4852
        %v4854 = vsel %vm2870, %v4751, 0.0
        %v4855 = vadd.f32 %v4853, %v4854
        %v4856 = vsel %vm2900, %v4752, 0.0
        %v4857 = vadd.f32 %v4855, %v4856
        %v4858 = vrot.slane %v4857, 4
        %v4859 = vadd.f32 %v4857, %v4858
        %v4860 = vrot.slane %v4859, 2
        %v4861 = vadd.f32 %v4859, %v4860
        %v4862 = vrot.slane %v4861, 1
        %v4863 = vadd.f32 %v4861, %v4862
        %v4864 = vmul.f32 %v4789, 0.3305785
        %v4865 = vmul.f32 %v4826, 0.3305785
        %v4866 = vmul.f32 %v4863, 0.3305785
        %v4870 = vsel %vm2999, %v4865, %v4864
        %v4871 = vsel %vm3001, %v4866, %v4870
        %v4873 = vsel %vm3489, %v4871, -inf
        %4874 = vmax.xlane.f32.xlu0 %v4873
        %v4875 = vpop.xlane.xlu0 %4874
        %v4877 = vrot.slane %v4875, 1
        %v4878 = vrot.slane %v4875, 2
        %v4882 = vsub.f32 %v4864, %v4875
        %v4883 = vsub.f32 %v4865, %v4877
        %v4884 = vsub.f32 %v4866, %v4878
        %v4885 = vmul.f32 %v4882, 1.442695
        %v4886 = vpow.pop %v4885
        %v4887 = vmul.f32 %v4883, 1.442695
        %v4888 = vpow.pop %v4887
        %v4889 = vmul.f32 %v4884, 1.442695
        %v4890 = vpow.pop %v4889
        %v4894 = vrot.slane %v4888, 7
        %v4895 = vsel %vm2999, %v4894, %v4886
        %v4896 = vrot.slane %v4890, 6
        %v4897 = vsel %vm3001, %v4896, %v4895
        %v4899 = vsel %vm3489, %v4897, 0.0
        %4900 = vadd.xlane.f32.xlu0 %v4899
        %v4901 = vpop.xlane.xlu0 %4900
        %v4903 = vrot.slane %v4901, 1
        %v4904 = vrot.slane %v4901, 2
        %v4908 = vrcp.pop %v4901
        %v4909 = vmul.f32 %v4901, %v4908
        %v4910 = vsub.f32 1.0, %v4909
        %v4911 = vmul.f32 %v4908, %v4910
        %v4912 = vadd.f32 %v4908, %v4911
        %vm4913 = vweird.f32 %v4901
        %vm4914 = vweird.f32 %v4908
        %vm4915 = vmor %vm4913, %vm4914
        %v4916 = vsel %vm4915, %v4908, %v4912
        %v4917 = vand.u32 2147483647, %v4901
        %vm4918 = vcmp.eq.f32.partialorder %v4917, 8.507059e+37
        %v4919 = vand.u32 %v4901, 2147483648
        %v4920 = vor.u32 1.1754944e-38, %v4919
        %v4921 = vsel %vm4918, %v4920, %v4916
        %v4922 = vmul.f32 %v4886, %v4921
        %v4923 = vrcp.pop %v4903
        %v4924 = vmul.f32 %v4903, %v4923
        %v4925 = vsub.f32 1.0, %v4924
        %v4926 = vmul.f32 %v4923, %v4925
        %v4927 = vadd.f32 %v4923, %v4926
        %vm4928 = vweird.f32 %v4903
        %vm4929 = vweird.f32 %v4923
        %vm4930 = vmor %vm4928, %vm4929
        %v4931 = vsel %vm4930, %v4923, %v4927
        %v4932 = vand.u32 2147483647, %v4903
        %vm4933 = vcmp.eq.f32.partialorder %v4932, 8.507059e+37
        %v4934 = vand.u32 %v4903, 2147483648
        %v4935 = vor.u32 1.1754944e-38, %v4934
        %v4936 = vsel %vm4933, %v4935, %v4931
        %v4937 = vmul.f32 %v4888, %v4936
        %v4938 = vrcp.pop %v4904
        %v4939 = vmul.f32 %v4904, %v4938
        %v4940 = vsub.f32 1.0, %v4939
        %v4941 = vmul.f32 %v4938, %v4940
        %v4942 = vadd.f32 %v4938, %v4941
        %vm4943 = vweird.f32 %v4904
        %vm4944 = vweird.f32 %v4938
        %vm4945 = vmor %vm4943, %vm4944
        %v4946 = vsel %vm4945, %v4938, %v4942
        %v4947 = vand.u32 2147483647, %v4904
        %vm4948 = vcmp.eq.f32.partialorder %v4947, 8.507059e+37
        %v4949 = vand.u32 %v4904, 2147483648
        %v4950 = vor.u32 1.1754944e-38, %v4949
        %v4951 = vsel %vm4948, %v4950, %v4946
        %v4952 = vmul.f32 %v4890, %v4951
        %v4953 = vadd.f32 %v4922, 1.0
        %v4954 = vadd.f32 %v4937, 1.0
        %v4955 = vadd.f32 %v4952, 1.0
        %5004 = vset.pattern.permute.xlu0 0
        %5005 = vperm.xlu0 %5004, %v4032
        %v5006 = vpop.permute.xlu0 %5005
        %5007 = vset.pattern.permute.xlu0 0
        %5008 = vperm.xlu0 %5007, %v4033
        %v5009 = vpop.permute.xlu0 %5008
        %5010 = vset.pattern.permute.xlu0 0
        %5011 = vperm.xlu0 %5010, %v4034
        %v5012 = vpop.permute.xlu0 %5011
        %5013 = vset.pattern.permute.xlu0 0
        %5014 = vperm.xlu0 %5013, %v4035
        %v5015 = vpop.permute.xlu0 %5014
        %5016 = vset.pattern.permute.xlu0 0
        %5017 = vperm.xlu0 %5016, %v4036
        %v5018 = vpop.permute.xlu0 %5017
        %5019 = vset.pattern.permute.xlu0 0
        %5020 = vperm.xlu0 %5019, %v4037
        %v5021 = vpop.permute.xlu0 %5020
        %5022 = vset.pattern.permute.xlu0 0
        %5023 = vperm.xlu0 %5022, %v4038
        %v5024 = vpop.permute.xlu0 %5023
        %5025 = vset.pattern.permute.xlu0 0
        %5026 = vperm.xlu0 %5025, %v4039
        %v5027 = vpop.permute.xlu0 %5026
        %5028 = vset.pattern.permute.xlu0 0
        %5029 = vperm.xlu0 %5028, %v4040
        %v5030 = vpop.permute.xlu0 %5029
        %5031 = vset.pattern.permute.xlu0 0
        %5032 = vperm.xlu0 %5031, %v4041
        %v5033 = vpop.permute.xlu0 %5032
        %5034 = vset.pattern.permute.xlu0 0
        %5035 = vperm.xlu0 %5034, %v4042
        %v5036 = vpop.permute.xlu0 %5035
        %5037 = vset.pattern.permute.xlu0 0
        %5038 = vperm.xlu0 %5037, %v4043
        %v5039 = vpop.permute.xlu0 %5038
        %5040 = vset.pattern.permute.xlu0 0
        %5041 = vperm.xlu0 %5040, %v4044
        %v5042 = vpop.permute.xlu0 %5041
        %5043 = vset.pattern.permute.xlu0 0
        %5044 = vperm.xlu0 %5043, %v4045
        %v5045 = vpop.permute.xlu0 %5044
        %5046 = vset.pattern.permute.xlu0 0
        %5047 = vperm.xlu0 %5046, %v4046
        %v5048 = vpop.permute.xlu0 %5047
        %5049 = vset.pattern.permute.xlu0 0
        %5050 = vperm.xlu0 %5049, %v4047
        %v5051 = vpop.permute.xlu0 %5050
        %5052 = vset.pattern.permute.xlu0 0
        %5053 = vperm.xlu0 %5052, %v4048
        %v5054 = vpop.permute.xlu0 %5053
        %5055 = vset.pattern.permute.xlu0 0
        %5056 = vperm.xlu0 %5055, %v4049
        %v5057 = vpop.permute.xlu0 %5056
        %5058 = vset.pattern.permute.xlu0 0
        %5059 = vperm.xlu0 %5058, %v4050
        %v5060 = vpop.permute.xlu0 %5059
        %5061 = vset.pattern.permute.xlu0 0
        %5062 = vperm.xlu0 %5061, %v4051
        %v5063 = vpop.permute.xlu0 %5062
        %5064 = vset.pattern.permute.xlu0 0
        %5065 = vperm.xlu0 %5064, %v4052
        %v5066 = vpop.permute.xlu0 %5065
        %5067 = vset.pattern.permute.xlu0 0
        %5068 = vperm.xlu0 %5067, %v4053
        %v5069 = vpop.permute.xlu0 %5068
        %5070 = vset.pattern.permute.xlu0 0
        %5071 = vperm.xlu0 %5070, %v4054
        %v5072 = vpop.permute.xlu0 %5071
        %5073 = vset.pattern.permute.xlu0 0
        %5074 = vperm.xlu0 %5073, %v4055
        %v5075 = vpop.permute.xlu0 %5074
        %5076 = vset.pattern.permute.xlu0 0
        %5077 = vperm.xlu0 %5076, %v4056
        %v5078 = vpop.permute.xlu0 %5077
        %5079 = vset.pattern.permute.xlu0 0
        %5080 = vperm.xlu0 %5079, %v4057
        %v5081 = vpop.permute.xlu0 %5080
        %5082 = vset.pattern.permute.xlu0 0
        %5083 = vperm.xlu0 %5082, %v4058
        %v5084 = vpop.permute.xlu0 %5083
        %5085 = vset.pattern.permute.xlu0 0
        %5086 = vperm.xlu0 %5085, %v4059
        %v5087 = vpop.permute.xlu0 %5086
        %5088 = vset.pattern.permute.xlu0 0
        %5089 = vperm.xlu0 %5088, %v4060
        %v5090 = vpop.permute.xlu0 %5089
        %5091 = vset.pattern.permute.xlu0 0
        %5092 = vperm.xlu0 %5091, %v4061
        %v5093 = vpop.permute.xlu0 %5092
        %5094 = vset.pattern.permute.xlu0 0
        %5095 = vperm.xlu0 %5094, %v4062
        %v5096 = vpop.permute.xlu0 %5095
        %5097 = vset.pattern.permute.xlu0 0
        %5098 = vperm.xlu0 %5097, %v4063
        %v5099 = vpop.permute.xlu0 %5098
        %5100 = vset.pattern.permute.xlu0 0
        %5101 = vperm.xlu0 %5100, %v4064
        %v5102 = vpop.permute.xlu0 %5101
        %5103 = vset.pattern.permute.xlu0 0
        %5104 = vperm.xlu0 %5103, %v4065
        %v5105 = vpop.permute.xlu0 %5104
        %5106 = vset.pattern.permute.xlu0 0
        %5107 = vperm.xlu0 %5106, %v4066
        %v5108 = vpop.permute.xlu0 %5107
        %5109 = vset.pattern.permute.xlu0 0
        %5110 = vperm.xlu0 %5109, %v4067
        %v5111 = vpop.permute.xlu0 %5110
        %5112 = vset.pattern.permute.xlu0 0
        %5113 = vperm.xlu0 %5112, %v4068
        %v5114 = vpop.permute.xlu0 %5113
        %5115 = vset.pattern.permute.xlu0 0
        %5116 = vperm.xlu0 %5115, %v4069
        %v5117 = vpop.permute.xlu0 %5116
        %5118 = vset.pattern.permute.xlu0 0
        %5119 = vperm.xlu0 %5118, %v4070
        %v5120 = vpop.permute.xlu0 %5119
        %5121 = vset.pattern.permute.xlu0 0
        %5122 = vperm.xlu0 %5121, %v4071
        %v5123 = vpop.permute.xlu0 %5122
        %5124 = vset.pattern.permute.xlu0 0
        %5125 = vperm.xlu0 %5124, %v4072
        %v5126 = vpop.permute.xlu0 %5125
        %5127 = vset.pattern.permute.xlu0 0
        %5128 = vperm.xlu0 %5127, %v4073
        %v5129 = vpop.permute.xlu0 %5128
        %5130 = vset.pattern.permute.xlu0 0
        %5131 = vperm.xlu0 %5130, %v4074
        %v5132 = vpop.permute.xlu0 %5131
        %5133 = vset.pattern.permute.xlu0 0
        %5134 = vperm.xlu0 %5133, %v4075
        %v5135 = vpop.permute.xlu0 %5134
        %5136 = vset.pattern.permute.xlu0 0
        %5137 = vperm.xlu0 %5136, %v4076
        %v5138 = vpop.permute.xlu0 %5137
        %5139 = vset.pattern.permute.xlu0 0
        %5140 = vperm.xlu0 %5139, %v4077
        %v5141 = vpop.permute.xlu0 %5140
        %5142 = vset.pattern.permute.xlu0 0
        %5143 = vperm.xlu0 %5142, %v4078
        %v5144 = vpop.permute.xlu0 %5143
        %5145 = vset.pattern.permute.xlu0 0
        %5146 = vperm.xlu0 %5145, %v4079
        %v5147 = vpop.permute.xlu0 %5146
        %v5148 = vperm.slane %v5006, %v3362
        %v5149 = vperm.slane %v5009, %v3364
        %v5150 = vsel %vm3366, %v5149, %v5148
        %v5151 = vperm.slane %v5012, %v3368
        %v5152 = vsel %vm3370, %v5151, %v5150
        %v5153 = vperm.slane %v5015, %v3372
        %v5154 = vsel %vm3374, %v5153, %v5152
        %v5155 = vperm.slane %v5018, %v3376
        %v5156 = vsel %vm3378, %v5155, %v5154
        %v5157 = vperm.slane %v5021, %v3380
        %v5158 = vsel %vm3382, %v5157, %v5156
        %v5159 = vperm.slane %v5024, %v3384
        %v5160 = vsel %vm3386, %v5159, %v5158
        %v5161 = vperm.slane %v5027, %v3388
        %v5162 = vsel %vm3390, %v5161, %v5160
        %v5163 = vperm.slane %v5030, %v3392
        %v5164 = vsel %vm3394, %v5163, %v5162
        %v5165 = vperm.slane %v5033, %v3396
        %v5166 = vsel %vm3398, %v5165, %v5164
        %v5167 = vperm.slane %v5036, %v3400
        %v5168 = vsel %vm3402, %v5167, %v5166
        %v5169 = vperm.slane %v5039, %v3404
        %v5170 = vsel %vm3406, %v5169, %v5168
        %v5171 = vperm.slane %v5042, %v3408
        %v5172 = vsel %vm3410, %v5171, %v5170
        %v5173 = vperm.slane %v5045, %v3412
        %v5174 = vsel %vm3414, %v5173, %v5172
        %v5175 = vperm.slane %v5048, %v3416
        %v5176 = vsel %vm3418, %v5175, %v5174
        %v5177 = vperm.slane %v5051, %v3420
        %v5178 = vsel %vm3422, %v5177, %v5176
        %v5179 = vperm.slane %v5054, %v3362
        %v5180 = vperm.slane %v5057, %v3364
        %v5181 = vsel %vm3366, %v5180, %v5179
        %v5182 = vperm.slane %v5060, %v3368
        %v5183 = vsel %vm3370, %v5182, %v5181
        %v5184 = vperm.slane %v5063, %v3372
        %v5185 = vsel %vm3374, %v5184, %v5183
        %v5186 = vperm.slane %v5066, %v3376
        %v5187 = vsel %vm3378, %v5186, %v5185
        %v5188 = vperm.slane %v5069, %v3380
        %v5189 = vsel %vm3382, %v5188, %v5187
        %v5190 = vperm.slane %v5072, %v3384
        %v5191 = vsel %vm3386, %v5190, %v5189
        %v5192 = vperm.slane %v5075, %v3388
        %v5193 = vsel %vm3390, %v5192, %v5191
        %v5194 = vperm.slane %v5078, %v3392
        %v5195 = vsel %vm3394, %v5194, %v5193
        %v5196 = vperm.slane %v5081, %v3396
        %v5197 = vsel %vm3398, %v5196, %v5195
        %v5198 = vperm.slane %v5084, %v3400
        %v5199 = vsel %vm3402, %v5198, %v5197
        %v5200 = vperm.slane %v5087, %v3404
        %v5201 = vsel %vm3406, %v5200, %v5199
        %v5202 = vperm.slane %v5090, %v3408
        %v5203 = vsel %vm3410, %v5202, %v5201
        %v5204 = vperm.slane %v5093, %v3412
        %v5205 = vsel %vm3414, %v5204, %v5203
        %v5206 = vperm.slane %v5096, %v3416
        %v5207 = vsel %vm3418, %v5206, %v5205
        %v5208 = vperm.slane %v5099, %v3420
        %v5209 = vsel %vm3422, %v5208, %v5207
        %v5210 = vperm.slane %v5102, %v3362
        %v5211 = vperm.slane %v5105, %v3364
        %v5212 = vsel %vm3366, %v5211, %v5210
        %v5213 = vperm.slane %v5108, %v3368
        %v5214 = vsel %vm3370, %v5213, %v5212
        %v5215 = vperm.slane %v5111, %v3372
        %v5216 = vsel %vm3374, %v5215, %v5214
        %v5217 = vperm.slane %v5114, %v3376
        %v5218 = vsel %vm3378, %v5217, %v5216
        %v5219 = vperm.slane %v5117, %v3380
        %v5220 = vsel %vm3382, %v5219, %v5218
        %v5221 = vperm.slane %v5120, %v3384
        %v5222 = vsel %vm3386, %v5221, %v5220
        %v5223 = vperm.slane %v5123, %v3388
        %v5224 = vsel %vm3390, %v5223, %v5222
        %v5225 = vperm.slane %v5126, %v3392
        %v5226 = vsel %vm3394, %v5225, %v5224
        %v5227 = vperm.slane %v5129, %v3396
        %v5228 = vsel %vm3398, %v5227, %v5226
        %v5229 = vperm.slane %v5132, %v3400
        %v5230 = vsel %vm3402, %v5229, %v5228
        %v5231 = vperm.slane %v5135, %v3404
        %v5232 = vsel %vm3406, %v5231, %v5230
        %v5233 = vperm.slane %v5138, %v3408
        %v5234 = vsel %vm3410, %v5233, %v5232
        %v5235 = vperm.slane %v5141, %v3412
        %v5236 = vsel %vm3414, %v5235, %v5234
        %v5237 = vperm.slane %v5144, %v3416
        %v5238 = vsel %vm3418, %v5237, %v5236
        %v5239 = vperm.slane %v5147, %v3420
        %v5240 = vsel %vm3422, %v5239, %v5238
        %v5241 = vsel %vm3001, %v5178, %v5178
        %vm5242 = vcmask 1043459
        %v5243 = vsel %vm5242, %v5178, %v5241
        %v5244 = vsel %vm3001, %v5209, %v5209
        %v5245 = vsel %vm5242, %v5209, %v5244
        %v5246 = vsel %vm3001, %v5240, %v5240
        %v5247 = vsel %vm5242, %v5240, %v5246
        %v5251 = vmul.f32 %v359, %v5243
        %v5252 = vmul.f32 %v359, %v5245
        %v5253 = vmul.f32 %v359, %v5247
        %v5254 = vperm.slane %v4953, 0
        %v5255 = vperm.slane %v4954, 0
        %v5256 = vperm.slane %v4955, 0
        %v5257 = vmul.f32 %v376, %v5254
        %v5258 = vmul.f32 %v377, %v5255
        %v5259 = vmul.f32 %v378, %v5256
        %vm5260 = vcmask 986112
        %5261 = vst.msk [vmem:[%s342] sm:$0xf] %vm5260, %v5251
        %5262 = vst.msk [vmem:[%s342 + $0x4] sm:$0xf] %vm5260, %v5252
        %5263 = vst.msk [vmem:[%s342 + $0x8] sm:$0xf] %vm5260, %v5253
        %5264 = vst.msk [vmem:[%s349] sm:$0xf] %vm5260, %v5257
        %5265 = vst.msk [vmem:[%s349 + $0x4] sm:$0xf] %vm5260, %v5258
        %5266 = vst.msk [vmem:[%s349 + $0x8] sm:$0xf] %vm5260, %v5259
        %s5267 = sand.u32 %s213, 1
        %s5268 = scalar_lea.sflag [#allocation3], %s5267
        %s5269 = sand.u32 %s213, 1
        %s5270 = smul.addr %s5269, 12
        %s5271 = scalar_lea.vmem [#allocation2], %s5270
        %s5272 = sand.u32 %s239, 1
        %s5273 = scalar_lea.sflag [#allocation5], %s5272
        %s5274 = sand.u32 %s239, 1
        %s5275 = smul.addr %s5274, 12
        %s5276 = scalar_lea.vmem [#allocation4], %s5275
        // Predicated region
        $region53: #{tpu_custom_call.1} parent=51 // pred_check
          %p5277 = pneg %p223
        $region54: #{tpu_custom_call.1} parent=51 // pred_check_branch
          %5279 = sbr.rel (%p5277) target = $region56
        $region55: #{tpu_custom_call.1} parent=51 // pred_region
          %5281 = vsyncadd %s5268, 0
          %s5282 = smul.addr %s27, 4
          %s5283 = scalar_lea.hbm %s8, %s5282
          %s5284 = sshll.u32 %s5271, 4
          %s5285 = int_to_ptr.vmem [resolvable:$true] %s5284
          %s5286 = sshll.u32 %s5283, 4
          %s5287 = int_to_ptr.hbm [resolvable:$true] %s5286
          %5292 = dma.vmem_to_hbm [thread:$0]  %s5285, 192, %s5287, %s5268, 64, 128, 4
        $region56: #{tpu_custom_call.1} parent=51 // pred_fallthru
          _
        // Predicated region
        $region57: #{tpu_custom_call.1} parent=51 // pred_check
          %p5293 = pneg %p249
        $region58: #{tpu_custom_call.1} parent=51 // pred_check_branch
          %5295 = sbr.rel (%p5293) target = $region60
        $region59: #{tpu_custom_call.1} parent=51 // pred_region
          %5297 = vsyncadd %s5273, 0
          %s5298 = smul.addr %s27, 4
          %s5299 = scalar_lea.hbm %s9, %s5298
          %s5300 = sshll.u32 %s5276, 4
          %s5301 = int_to_ptr.vmem [resolvable:$true] %s5300
          %s5302 = sshll.u32 %s5299, 4
          %s5303 = int_to_ptr.hbm [resolvable:$true] %s5302
          %5308 = dma.vmem_to_hbm [thread:$0]  %s5301, 192, %s5303, %s5273, 64, 128, 4
        $region60: #{tpu_custom_call.1} parent=51 // pred_fallthru
          _
      $region52: #{tpu_custom_call.1} parent=5 // pred_fallthru
        _
      %p5309 = scmp.le.s32.totalorder 2, %s22
      // Predicated region
      $region61: #{tpu_custom_call.1} parent=5 // pred_check
        %p5310 = pneg %p5309
      $region62: #{tpu_custom_call.1} parent=5 // pred_check_branch
        %5312 = sbr.rel (%p5310) target = $region64
      $region63: #{tpu_custom_call.1} parent=5 // pred_region
        %s5313 = ssub.s32 %s22, 2
        // Predicated region
        $region65: #{tpu_custom_call.1} parent=63 // pred_check
          %p5314 = pneg %p229
        $region66: #{tpu_custom_call.1} parent=63 // pred_check_branch
          %5316 = sbr.rel (%p5314) target = $region68
        $region67: #{tpu_custom_call.1} parent=63 // pred_region
          %s5317 = sand.u32 %s214, 1
          %s5318 = scalar_lea.sflag [#allocation3], %s5317
          %s5319 = sand.u32 %s214, 1
          %s5320 = smul.addr %s5319, 12
          %s5321 = scalar_lea.vmem [#allocation2], %s5320
          %5323 = dma.done %s5318, 192
        $region68: #{tpu_custom_call.1} parent=63 // pred_fallthru
          _
        // Predicated region
        $region69: #{tpu_custom_call.1} parent=63 // pred_check
          %p5324 = pneg %p255
        $region70: #{tpu_custom_call.1} parent=63 // pred_check_branch
          %5326 = sbr.rel (%p5324) target = $region72
        $region71: #{tpu_custom_call.1} parent=63 // pred_region
          %s5327 = sand.u32 %s240, 1
          %s5328 = scalar_lea.sflag [#allocation5], %s5327
          %s5329 = sand.u32 %s240, 1
          %s5330 = smul.addr %s5329, 12
          %s5331 = scalar_lea.vmem [#allocation4], %s5330
          %5333 = dma.done %s5328, 192
        $region72: #{tpu_custom_call.1} parent=63 // pred_fallthru
          _
      $region64: #{tpu_custom_call.1} parent=5 // pred_fallthru
        _
    $region6: #{tpu_custom_call.1} parent=1 // loop_footer
      %s26 = sadd.s32 1, %s22
    $region7: #{tpu_custom_call.1} parent=1 // loop_footer_branch
      %21 = sbr.rel target = $region3
    $region8: #{tpu_custom_call.1} parent=1 // loop_exit
      _
    %5334 = vsyncpa [#allocation3], 1
    %s5335 = scalar_lea.sflag [#allocation3], 1
    %5336 = vsyncpa %s5335, 1
    %5337 = vsyncpa [#allocation5], 1
    %s5338 = scalar_lea.sflag [#allocation5], 1
    %5339 = vsyncpa %s5338, 1

</llo_original>
